<compile_context>
chip_gen: v7x
topology: tpu7x:2x2x1
jax: 0.10.0
libtpu: 0.0.40
codegen_flags: <defaults>
</compile_context>

<pallas_src>
import functools

import jax
import jax.numpy as jnp
import numpy as np
from jax.experimental import pallas as pl
from jax.experimental.pallas import tpu as pltpu


# ----------------------------- in-kernel math helpers -----------------------------
def _ln(x, g, b, eps):
    mean = jnp.mean(x, axis=-1, keepdims=True)
    xc = x - mean
    var = jnp.mean(xc * xc, axis=-1, keepdims=True)
    return xc * jax.lax.rsqrt(var + eps) * g + b


def _mm(a, b, dtype):
    # MXU matmul; operands optionally cast (bf16 on v6e/v7x), f32 accumulation.
    return jnp.dot(a.astype(dtype), b.astype(dtype), preferred_element_type=jnp.float32)


# ----------------------------- fused whole-model kernel -----------------------------
def _fused_encoder_kernel(
    # inputs
    x_emb_ref, emb_g_ref, emb_b_ref, bias_ref,
    wqkv_ref, bqkv_ref, wo_ref, bo_ref,
    w1_ref, b1_ref, w2_ref, b2_ref,
    ln1_g_ref, ln1_b_ref, ln2_g_ref, ln2_b_ref,
    sp_w_ref, sp_b_ref,
    # outputs
    dense_ref, sparse_ref,
    # scratch (persist across the layer grid axis)
    x_vmem, ctx_vmem,
    *, B, S, NH, eps, mm_dtype):
    H = x_vmem.shape[-1]
    Dh = H // NH
    layer = pl.program_id(0)
    n_layers = pl.num_programs(0)

    # Grid-step 0: embedding LayerNorm fused into the encoder kernel.
    @pl.when(layer == 0)
    def _():
        x_vmem[...] = _ln(x_emb_ref[...], emb_g_ref[...], emb_b_ref[...], eps)

    x = x_vmem[...]                                      # [B*S, H], VMEM-resident

    # ---- fused QKV projection: single MXU pass with N = 3H ----
    qkv = _mm(x, wqkv_ref[...], mm_dtype) + bqkv_ref[...]
    scale = 1.0 / float(Dh) ** 0.5
    q = qkv[:, :H] * scale                               # fold 1/sqrt(Dh) into q ([B*S,H] < [S,S] work)
    k = qkv[:, H:2 * H]
    v = qkv[:, 2 * H:]

    bias = bias_ref[...]                                 # [B, 1, S] additive mask, precomputed once

    # ---- self-attention: all heads in-kernel (static unrolled head loop) ----
    for h in range(NH):
        sl = slice(h * Dh, (h + 1) * Dh)
        qh = q[:, sl].reshape(B, S, Dh)
        kh = k[:, sl].reshape(B, S, Dh)
        vh = v[:, sl].reshape(B, S, Dh)
        s = jnp.einsum("bqd,bkd->bqk", qh, kh, preferred_element_type=jnp.float32)
        s = s + bias
        s = s - jnp.max(s, axis=-1, keepdims=True)
        p = jnp.exp(s)
        p = p * pl.reciprocal(jnp.sum(p, axis=-1, keepdims=True), approx=True)
        ch = jnp.einsum("bqk,bkd->bqd", p, vh, preferred_element_type=jnp.float32)
        ctx_vmem[:, sl] = ch.reshape(B * S, Dh)
    ctx = ctx_vmem[...]                                  # [B*S, H] merged heads

    attn_out = _mm(ctx, wo_ref[...], mm_dtype) + bo_ref[...]
    x = _ln(x + attn_out, ln1_g_ref[...], ln1_b_ref[...], eps)

    # ---- FFN ----
    h1 = _mm(x, w1_ref[...], mm_dtype) + b1_ref[...]
    # TODO(synk): HF XLM-R uses exact erf-GELU; tanh-approx GELU used here (EUP-friendly).
    h1 = jax.nn.gelu(h1, approximate=True)
    h2 = _mm(h1, w2_ref[...], mm_dtype) + b2_ref[...]
    x = _ln(x + h2, ln2_g_ref[...], ln2_b_ref[...], eps)

    x_vmem[...] = x

    # ---- heads, fused into the final grid step (x never leaves VMEM) ----
    @pl.when(layer == n_layers - 1)
    def _():
        x3 = x.reshape(B, S, H)
        cls = x3[:, 0, :]                                # BGE-M3 default pooling: CLS token
        norm = jnp.sqrt(jnp.sum(cls * cls, axis=-1, keepdims=True))
        dense_ref[...] = cls / jnp.maximum(norm, 1e-12)  # == F.normalize(..., dim=-1)
        # sparse head: relu(x @ w + b) with N=1 -> VPU row reduction (no N=1 MXU matmul)
        sp = jnp.sum(x3 * sp_w_ref[...], axis=-1) + sp_b_ref[...]
        sparse_ref[...] = jnp.maximum(sp, 0.0)


# ----------------------------- Parameter init -----------------------------
def init_params(key, vocab, max_pos, H, FFN, n_layers):
    keys = jax.random.split(key, 4 + n_layers)

    def dense(k, shape):
        return (0.02 * jax.random.normal(k, shape)).astype(jnp.float32)

    params = {
        "word_emb": dense(keys[0], (vocab, H)),
        "pos_emb": dense(keys[1], (max_pos, H)),
        "emb_ln_g": jnp.ones((1, H), jnp.float32),
        "emb_ln_b": jnp.zeros((1, H), jnp.float32),
        "sparse_w": dense(keys[2], (H, 1)),        # nn.Linear(H, 1) of _sparse_embedding
        "sparse_b": jnp.zeros((1, 1), jnp.float32),
        "layers": [],
    }
    for i in range(n_layers):
        ks = jax.random.split(keys[4 + i], 6)
        params["layers"].append({
            "wq": dense(ks[0], (H, H)), "bq": jnp.zeros((1, H), jnp.float32),
            "wk": dense(ks[1], (H, H)), "bk": jnp.zeros((1, H), jnp.float32),
            "wv": dense(ks[2], (H, H)), "bv": jnp.zeros((1, H), jnp.float32),
            "wo": dense(ks[3], (H, H)), "bo": jnp.zeros((1, H), jnp.float32),
            "w1": dense(ks[4], (H, FFN)), "b1": jnp.zeros((1, FFN), jnp.float32),
            "w2": dense(ks[5], (FFN, H)), "b2": jnp.zeros((1, H), jnp.float32),
            "ln1_g": jnp.ones((1, H), jnp.float32), "ln1_b": jnp.zeros((1, H), jnp.float32),
            "ln2_g": jnp.ones((1, H), jnp.float32), "ln2_b": jnp.zeros((1, H), jnp.float32),
        })
    return params


# ----------------------------- Forward pass (single pallas_call) -----------------------------
def bge_m3_forward(params, input_ids, attention_mask, NH, mm_dtype=jnp.float32):
    B, S = input_ids.shape
    H = params["word_emb"].shape[1]
    layers = params["layers"]
    L = len(layers)

    # Embedding lookup (gather) stays in plain JAX glue.
    # TODO(synk): XLM-R position-id offset (padding_idx+1+cumsum) and token-type
    # embeddings are simplified to a plain arange position embedding.
    x = params["word_emb"][input_ids] + params["pos_emb"][jnp.arange(S)][None, :, :]
    x2d = x.reshape(B * S, H).astype(jnp.float32)

    # Additive attention bias computed ONCE per forward (not per (b,h) step).
    bias = ((1.0 - attention_mask.astype(jnp.float32)) * jnp.float32(-1e9)).reshape(B, 1, S)

    # Stack per-layer weights so one grid axis indexes them; fuse Q|K|V.
    stack = lambda name: jnp.stack([p[name] for p in layers], axis=0)
    wqkv = jnp.stack([jnp.concatenate([p["wq"], p["wk"], p["wv"]], axis=1) for p in layers])
    bqkv = jnp.stack([jnp.concatenate([p["bq"], p["bk"], p["bv"]], axis=1) for p in layers])
    wo, bo = stack("wo"), stack("bo")
    w1, b1 = stack("w1"), stack("b1")
    w2, b2 = stack("w2"), stack("b2")
    ln1_g, ln1_b = stack("ln1_g"), stack("ln1_b")
    ln2_g, ln2_b = stack("ln2_g"), stack("ln2_b")
    sp_w = params["sparse_w"].reshape(1, H)          # row vector for VPU reduction
    sp_b = params["sparse_b"].reshape(1, 1)

    const2 = lambda i: (0, 0)
    const3 = lambda i: (0, 0, 0)
    full2 = lambda a: pl.BlockSpec(a.shape, const2)
    per_layer = lambda a: pl.BlockSpec((None,) + tuple(a.shape[1:]), lambda i: (i, 0, 0))

    dense, sparse = pl.pallas_call(
        functools.partial(_fused_encoder_kernel, B=B, S=S, NH=NH, eps=1e-5,
                          mm_dtype=mm_dtype),
        out_shape=(jax.ShapeDtypeStruct((B, H), jnp.float32),
                   jax.ShapeDtypeStruct((B, S), jnp.float32)),
        grid=(L,),
        in_specs=[
            full2(x2d), full2(params["emb_ln_g"]), full2(params["emb_ln_b"]),
            pl.BlockSpec(bias.shape, const3),
            per_layer(wqkv), per_layer(bqkv),
            per_layer(wo), per_layer(bo),
            per_layer(w1), per_layer(b1),
            per_layer(w2), per_layer(b2),
            per_layer(ln1_g), per_layer(ln1_b),
            per_layer(ln2_g), per_layer(ln2_b),
            full2(sp_w), full2(sp_b),
        ],
        out_specs=(pl.BlockSpec((B, H), const2),
                   pl.BlockSpec((B, S), const2)),
        scratch_shapes=[pltpu.VMEM((B * S, H), jnp.float32),   # activation carry
                        pltpu.VMEM((B * S, H), jnp.float32)],  # merged-head context
        compiler_params=pltpu.CompilerParams(
            # The single grid axis is the (sequential) layer loop.
            dimension_semantics=("arbitrary",)),
    )(x2d, params["emb_ln_g"], params["emb_ln_b"], bias,
      wqkv, bqkv, wo, bo, w1, b1, w2, b2,
      ln1_g, ln1_b, ln2_g, ln2_b, sp_w, sp_b)

    return {"dense_vecs": dense, "sparse_vecs": sparse[..., None]}


# ----------------------------- Pure-JAX reference -----------------------------
def reference_forward(params, input_ids, attention_mask, NH):
    B, S = input_ids.shape
    H = params["word_emb"].shape[1]
    Dh = H // NH

    def ln(x, g, b, eps=1e-5):
        m = jnp.mean(x, -1, keepdims=True)
        v = jnp.mean((x - m) ** 2, -1, keepdims=True)
        return (x - m) / jnp.sqrt(v + eps) * g + b

    x = params["word_emb"][input_ids] + params["pos_emb"][jnp.arange(S)][None]
    x = ln(x, params["emb_ln_g"], params["emb_ln_b"])
    bias = (1.0 - attention_mask.astype(jnp.float32))[:, None, None, :] * -1e9
    for p in params["layers"]:
        q = (x @ p["wq"] + p["bq"]).reshape(B, S, NH, Dh).transpose(0, 2, 1, 3)
        k = (x @ p["wk"] + p["bk"]).reshape(B, S, NH, Dh).transpose(0, 2, 1, 3)
        v = (x @ p["wv"] + p["bv"]).reshape(B, S, NH, Dh).transpose(0, 2, 1, 3)
        s = jnp.einsum("bhqd,bhkd->bhqk", q, k) / (Dh ** 0.5) + bias
        a = jax.nn.softmax(s, axis=-1)
        ctx = jnp.einsum("bhqk,bhkd->bhqd", a, v).transpose(0, 2, 1, 3).reshape(B, S, H)
        x = ln(x + ctx @ p["wo"] + p["bo"], p["ln1_g"], p["ln1_b"])
        h = jax.nn.gelu(x @ p["w1"] + p["b1"], approximate=True)
        x = ln(x + h @ p["w2"] + p["b2"], p["ln2_g"], p["ln2_b"])
    cls = x[:, 0, :]
    dense = cls / jnp.maximum(jnp.linalg.norm(cls, axis=-1, keepdims=True), 1e-12)
    sparse = jnp.maximum(x @ params["sparse_w"] + params["sparse_b"], 0.0)
    return {"dense_vecs": dense, "sparse_vecs": sparse}


if __name__ == "__main__":
    B, S, H, NH, FFN, VOCAB, LAYERS = 2, 8, 32, 4, 64, 64, 2
    key = jax.random.PRNGKey(0)
    pkey, ikey = jax.random.split(key)

    params = init_params(pkey, VOCAB, 128, H, FFN, LAYERS)
    input_ids = jax.random.randint(ikey, (B, S), 0, VOCAB, dtype=jnp.int32)
    attention_mask = jnp.array([[1] * S, [1] * 6 + [0] * 2], dtype=jnp.int32)

    out = bge_m3_forward(params, input_ids, attention_mask, NH)
    jax.block_until_ready(out)

    ref = reference_forward(params, input_ids, attention_mask, NH)
    np.testing.assert_allclose(np.asarray(out["dense_vecs"]),
                               np.asarray(ref["dense_vecs"]), rtol=2e-2, atol=2e-2)
    np.testing.assert_allclose(np.asarray(out["sparse_vecs"]),
                               np.asarray(ref["sparse_vecs"]), rtol=2e-2, atol=2e-2)
    assert out["dense_vecs"].shape == (B, H)
    assert out["sparse_vecs"].shape == (B, S, 1)
    print("KERNEL_OK")
</pallas_src>

<mosaic_0001>
module attributes {stable_mosaic.version = 11 : i64} {
  func.func @_fused_encoder_kernel(%arg0: i32, %arg1: memref<16x32xf32, #tpu.memory_space<vmem>>, %arg2: memref<1x32xf32, #tpu.memory_space<vmem>>, %arg3: memref<1x32xf32, #tpu.memory_space<vmem>>, %arg4: memref<2x1x8xf32, #tpu.memory_space<vmem>>, %arg5: memref<1x32x96xf32, #tpu.memory_space<vmem>>, %arg6: memref<1x1x96xf32, #tpu.memory_space<vmem>>, %arg7: memref<1x32x32xf32, #tpu.memory_space<vmem>>, %arg8: memref<1x1x32xf32, #tpu.memory_space<vmem>>, %arg9: memref<1x32x64xf32, #tpu.memory_space<vmem>>, %arg10: memref<1x1x64xf32, #tpu.memory_space<vmem>>, %arg11: memref<1x64x32xf32, #tpu.memory_space<vmem>>, %arg12: memref<1x1x32xf32, #tpu.memory_space<vmem>>, %arg13: memref<1x1x32xf32, #tpu.memory_space<vmem>>, %arg14: memref<1x1x32xf32, #tpu.memory_space<vmem>>, %arg15: memref<1x1x32xf32, #tpu.memory_space<vmem>>, %arg16: memref<1x1x32xf32, #tpu.memory_space<vmem>>, %arg17: memref<1x32xf32, #tpu.memory_space<vmem>>, %arg18: memref<1x1xf32, #tpu.memory_space<vmem>>, %arg19: memref<2x32xf32, #tpu.memory_space<vmem>>, %arg20: memref<2x8xf32, #tpu.memory_space<vmem>>, %arg21: memref<16x32xf32, #tpu.memory_space<vmem>>, %arg22: memref<16x32xf32, #tpu.memory_space<vmem>>) attributes {dimension_semantics = [#tpu.dimension_semantics<arbitrary>], iteration_bounds = array<i64: 2>, scalar_prefetch = 0 : i64, scratch_operands = 2 : i64, tpu.core_type = #tpu.core_type<tc>, window_params = [{pipeline_mode = #tpu.pipeline_mode<synchronous>, transform_indices = @transform_0, window_bounds = array<i64: 16, 32>}, {pipeline_mode = #tpu.pipeline_mode<synchronous>, transform_indices = @transform_1, window_bounds = array<i64: 1, 32>}, {pipeline_mode = #tpu.pipeline_mode<synchronous>, transform_indices = @transform_2, window_bounds = array<i64: 1, 32>}, {pipeline_mode = #tpu.pipeline_mode<synchronous>, transform_indices = @transform_3, window_bounds = array<i64: 2, 1, 8>}, {transform_indices = @transform_4, window_bounds = array<i64: 1, 32, 96>}, {transform_indices = @transform_5, window_bounds = array<i64: 1, 1, 96>}, {transform_indices = @transform_6, window_bounds = array<i64: 1, 32, 32>}, {transform_indices = @transform_7, window_bounds = array<i64: 1, 1, 32>}, {transform_indices = @transform_8, window_bounds = array<i64: 1, 32, 64>}, {transform_indices = @transform_9, window_bounds = array<i64: 1, 1, 64>}, {transform_indices = @transform_10, window_bounds = array<i64: 1, 64, 32>}, {transform_indices = @transform_11, window_bounds = array<i64: 1, 1, 32>}, {transform_indices = @transform_12, window_bounds = array<i64: 1, 1, 32>}, {transform_indices = @transform_13, window_bounds = array<i64: 1, 1, 32>}, {transform_indices = @transform_14, window_bounds = array<i64: 1, 1, 32>}, {transform_indices = @transform_15, window_bounds = array<i64: 1, 1, 32>}, {pipeline_mode = #tpu.pipeline_mode<synchronous>, transform_indices = @transform_16, window_bounds = array<i64: 1, 32>}, {pipeline_mode = #tpu.pipeline_mode<synchronous>, transform_indices = @transform_17, window_bounds = array<i64: 1, 1>}, {pipeline_mode = #tpu.pipeline_mode<synchronous>, transform_indices = @transform_18, window_bounds = array<i64: 2, 32>}, {pipeline_mode = #tpu.pipeline_mode<synchronous>, transform_indices = @transform_19, window_bounds = array<i64: 2, 8>}]} {
    %c0_i32 = arith.constant 0 : i32
    %0 = arith.cmpi eq, %arg0, %c0_i32 : i32
    %1 = arith.extui %0 : i1 to i32
    %c0_i32_0 = arith.constant 0 : i32
    %2 = arith.cmpi ne, %1, %c0_i32_0 : i32
    scf.if %2 {
      %c0_85 = arith.constant 0 : index
      %c0_86 = arith.constant 0 : index
      %194 = vector.load %arg1[%c0_85, %c0_86] : memref<16x32xf32, #tpu.memory_space<vmem>>, vector<16x32xf32>
      %c0_87 = arith.constant 0 : index
      %c0_88 = arith.constant 0 : index
      %195 = vector.load %arg2[%c0_87, %c0_88] : memref<1x32xf32, #tpu.memory_space<vmem>>, vector<1x32xf32>
      %c0_89 = arith.constant 0 : index
      %c0_90 = arith.constant 0 : index
      %196 = vector.load %arg3[%c0_89, %c0_90] : memref<1x32xf32, #tpu.memory_space<vmem>>, vector<1x32xf32>
      %cst_91 = arith.constant dense<0.000000e+00> : vector<16xf32>
      %197 = vector.multi_reduction <add>, %194, %cst_91 [1] : vector<16x32xf32> to vector<16xf32>
      %198 = vector.shape_cast %197 : vector<16xf32> to vector<16x1xf32>
      %cst_92 = arith.constant 3.200000e+01 : f32
      %199 = vector.broadcast %cst_92 : f32 to vector<16x1xf32>
      %200 = arith.divf %198, %199 : vector<16x1xf32>
      %201 = vector.broadcast %200 : vector<16x1xf32> to vector<16x32xf32>
      %202 = arith.subf %194, %201 : vector<16x32xf32>
      %203 = arith.mulf %202, %202 : vector<16x32xf32>
      %cst_93 = arith.constant dense<0.000000e+00> : vector<16xf32>
      %204 = vector.multi_reduction <add>, %203, %cst_93 [1] : vector<16x32xf32> to vector<16xf32>
      %205 = vector.shape_cast %204 : vector<16xf32> to vector<16x1xf32>
      %cst_94 = arith.constant 3.200000e+01 : f32
      %206 = vector.broadcast %cst_94 : f32 to vector<16x1xf32>
      %207 = arith.divf %205, %206 : vector<16x1xf32>
      %cst_95 = arith.constant 9.99999974E-6 : f32
      %208 = vector.broadcast %cst_95 : f32 to vector<16x1xf32>
      %209 = arith.addf %207, %208 : vector<16x1xf32>
      %210 = math.rsqrt %209 : vector<16x1xf32>
      %211 = vector.broadcast %210 : vector<16x1xf32> to vector<16x32xf32>
      %212 = arith.mulf %202, %211 : vector<16x32xf32>
      %213 = vector.broadcast %195 : vector<1x32xf32> to vector<16x32xf32>
      %214 = arith.mulf %212, %213 : vector<16x32xf32>
      %215 = vector.broadcast %196 : vector<1x32xf32> to vector<16x32xf32>
      %216 = arith.addf %214, %215 : vector<16x32xf32>
      %c0_96 = arith.constant 0 : index
      %c0_97 = arith.constant 0 : index
      %217 = vector.load %arg21[%c0_96, %c0_97] : memref<16x32xf32, #tpu.memory_space<vmem>>, vector<16x32xf32>
      tpu.vector_store %arg21[%c0_96, %c0_97], %216 {strides = array<i32>} : memref<16x32xf32, #tpu.memory_space<vmem>>, vector<16x32xf32>,
    } else {
    }
    %c0 = arith.constant 0 : index
    %c0_1 = arith.constant 0 : index
    %3 = vector.load %arg21[%c0, %c0_1] : memref<16x32xf32, #tpu.memory_space<vmem>>, vector<16x32xf32>
    %c0_2 = arith.constant 0 : index
    %c0_3 = arith.constant 0 : index
    %c0_4 = arith.constant 0 : index
    %4 = vector.load %arg5[%c0_2, %c0_3, %c0_4] : memref<1x32x96xf32, #tpu.memory_space<vmem>>, vector<1x32x96xf32>
    %5 = vector.shape_cast %4 : vector<1x32x96xf32> to vector<32x96xf32>
    %cst = arith.constant dense<0.000000e+00> : vector<16x96xf32>
    %6 = tpu.matmul %3, %5, %cst {dimension_numbers = #tpu.dot_dimension_numbers<[1], [0], [0], [1], [0, 0, 1, 1], [], []>} : vector<16x32xf32>, vector<32x96xf32>, vector<16x96xf32> -> vector<16x96xf32>
    %c0_5 = arith.constant 0 : index
    %c0_6 = arith.constant 0 : index
    %c0_7 = arith.constant 0 : index
    %7 = vector.load %arg6[%c0_5, %c0_6, %c0_7] : memref<1x1x96xf32, #tpu.memory_space<vmem>>, vector<1x1x96xf32>
    %8 = vector.shape_cast %7 : vector<1x1x96xf32> to vector<1x96xf32>
    %9 = vector.broadcast %8 : vector<1x96xf32> to vector<16x96xf32>
    %10 = arith.addf %6, %9 : vector<16x96xf32>
    %11 = vector.extract_strided_slice %10 {offsets = [0, 0], sizes = [16, 32], strides = [1, 1]} : vector<16x96xf32> to vector<16x32xf32>
    %cst_8 = arith.constant 0.353553385 : f32
    %12 = vector.broadcast %cst_8 : f32 to vector<16x32xf32>
    %13 = arith.mulf %11, %12 : vector<16x32xf32>
    %14 = vector.extract_strided_slice %10 {offsets = [0, 32], sizes = [16, 32], strides = [1, 1]} : vector<16x96xf32> to vector<16x32xf32>
    %15 = vector.extract_strided_slice %10 {offsets = [0, 64], sizes = [16, 32], strides = [1, 1]} : vector<16x96xf32> to vector<16x32xf32>
    %c0_9 = arith.constant 0 : index
    %c0_10 = arith.constant 0 : index
    %c0_11 = arith.constant 0 : index
    %16 = vector.load %arg4[%c0_9, %c0_10, %c0_11] : memref<2x1x8xf32, #tpu.memory_space<vmem>>, vector<2x1x8xf32>
    %17 = vector.extract_strided_slice %13 {offsets = [0, 0], sizes = [16, 8], strides = [1, 1]} : vector<16x32xf32> to vector<16x8xf32>
    %18 = vector.shape_cast %17 : vector<16x8xf32> to vector<2x8x8xf32>
    %19 = vector.extract_strided_slice %14 {offsets = [0, 0], sizes = [16, 8], strides = [1, 1]} : vector<16x32xf32> to vector<16x8xf32>
    %20 = vector.shape_cast %19 : vector<16x8xf32> to vector<2x8x8xf32>
    %21 = vector.extract_strided_slice %15 {offsets = [0, 0], sizes = [16, 8], strides = [1, 1]} : vector<16x32xf32> to vector<16x8xf32>
    %22 = vector.shape_cast %21 : vector<16x8xf32> to vector<2x8x8xf32>
    "tpu.trace_start"() <{level = 10 : i32, message = "bqd,bkd->bqk"}> : () -> ()
    %cst_12 = arith.constant dense<0.000000e+00> : vector<2x8x8xf32>
    %23 = tpu.matmul %18, %20, %cst_12 {dimension_numbers = #tpu.dot_dimension_numbers<[2], [2], [1], [1], [0, 0, 0, 1, 1, 1], [0], [0]>} : vector<2x8x8xf32>, vector<2x8x8xf32>, vector<2x8x8xf32> -> vector<2x8x8xf32>
    "tpu.trace_stop"() : () -> ()
    %24 = vector.broadcast %16 : vector<2x1x8xf32> to vector<2x8x8xf32>
    %25 = arith.addf %23, %24 : vector<2x8x8xf32>
    %cst_13 = arith.constant dense<0xFF800000> : vector<2x8xf32>
    %26 = vector.multi_reduction <maximumf>, %25, %cst_13 [2] : vector<2x8x8xf32> to vector<2x8xf32>
    %27 = vector.shape_cast %26 : vector<2x8xf32> to vector<2x8x1xf32>
    %28 = vector.broadcast %27 : vector<2x8x1xf32> to vector<2x8x8xf32>
    %29 = arith.subf %25, %28 : vector<2x8x8xf32>
    %30 = math.exp %29 : vector<2x8x8xf32>
    %cst_14 = arith.constant dense<0.000000e+00> : vector<2x8xf32>
    %31 = vector.multi_reduction <add>, %30, %cst_14 [2] : vector<2x8x8xf32> to vector<2x8xf32>
    %32 = vector.shape_cast %31 : vector<2x8xf32> to vector<2x8x1xf32>
    %33 = tpu.reciprocal %32 {approx = true} : vector<2x8x1xf32> -> vector<2x8x1xf32>
    %34 = vector.broadcast %33 : vector<2x8x1xf32> to vector<2x8x8xf32>
    %35 = arith.mulf %30, %34 : vector<2x8x8xf32>
    "tpu.trace_start"() <{level = 10 : i32, message = "bqk,bkd->bqd"}> : () -> ()
    %cst_15 = arith.constant dense<0.000000e+00> : vector<2x8x8xf32>
    %36 = tpu.matmul %35, %22, %cst_15 {dimension_numbers = #tpu.dot_dimension_numbers<[2], [1], [1], [2], [0, 0, 0, 1, 1, 2], [0], [0]>} : vector<2x8x8xf32>, vector<2x8x8xf32>, vector<2x8x8xf32> -> vector<2x8x8xf32>
    "tpu.trace_stop"() : () -> ()
    %37 = vector.shape_cast %36 : vector<2x8x8xf32> to vector<16x8xf32>
    %c0_16 = arith.constant 0 : index
    %c0_17 = arith.constant 0 : index
    %38 = vector.load %arg22[%c0_16, %c0_17] : memref<16x32xf32, #tpu.memory_space<vmem>>, vector<16x8xf32>
    tpu.vector_store %arg22[%c0_16, %c0_17], %37 {strides = array<i32>} : memref<16x32xf32, #tpu.memory_space<vmem>>, vector<16x8xf32>,
    %39 = vector.extract_strided_slice %13 {offsets = [0, 8], sizes = [16, 8], strides = [1, 1]} : vector<16x32xf32> to vector<16x8xf32>
    %40 = vector.shape_cast %39 : vector<16x8xf32> to vector<2x8x8xf32>
    %41 = vector.extract_strided_slice %14 {offsets = [0, 8], sizes = [16, 8], strides = [1, 1]} : vector<16x32xf32> to vector<16x8xf32>
    %42 = vector.shape_cast %41 : vector<16x8xf32> to vector<2x8x8xf32>
    %43 = vector.extract_strided_slice %15 {offsets = [0, 8], sizes = [16, 8], strides = [1, 1]} : vector<16x32xf32> to vector<16x8xf32>
    %44 = vector.shape_cast %43 : vector<16x8xf32> to vector<2x8x8xf32>
    "tpu.trace_start"() <{level = 10 : i32, message = "bqd,bkd->bqk"}> : () -> ()
    %cst_18 = arith.constant dense<0.000000e+00> : vector<2x8x8xf32>
    %45 = tpu.matmul %40, %42, %cst_18 {dimension_numbers = #tpu.dot_dimension_numbers<[2], [2], [1], [1], [0, 0, 0, 1, 1, 1], [0], [0]>} : vector<2x8x8xf32>, vector<2x8x8xf32>, vector<2x8x8xf32> -> vector<2x8x8xf32>
    "tpu.trace_stop"() : () -> ()
    %46 = vector.broadcast %16 : vector<2x1x8xf32> to vector<2x8x8xf32>
    %47 = arith.addf %45, %46 : vector<2x8x8xf32>
    %cst_19 = arith.constant dense<0xFF800000> : vector<2x8xf32>
    %48 = vector.multi_reduction <maximumf>, %47, %cst_19 [2] : vector<2x8x8xf32> to vector<2x8xf32>
    %49 = vector.shape_cast %48 : vector<2x8xf32> to vector<2x8x1xf32>
    %50 = vector.broadcast %49 : vector<2x8x1xf32> to vector<2x8x8xf32>
    %51 = arith.subf %47, %50 : vector<2x8x8xf32>
    %52 = math.exp %51 : vector<2x8x8xf32>
    %cst_20 = arith.constant dense<0.000000e+00> : vector<2x8xf32>
    %53 = vector.multi_reduction <add>, %52, %cst_20 [2] : vector<2x8x8xf32> to vector<2x8xf32>
    %54 = vector.shape_cast %53 : vector<2x8xf32> to vector<2x8x1xf32>
    %55 = tpu.reciprocal %54 {approx = true} : vector<2x8x1xf32> -> vector<2x8x1xf32>
    %56 = vector.broadcast %55 : vector<2x8x1xf32> to vector<2x8x8xf32>
    %57 = arith.mulf %52, %56 : vector<2x8x8xf32>
    "tpu.trace_start"() <{level = 10 : i32, message = "bqk,bkd->bqd"}> : () -> ()
    %cst_21 = arith.constant dense<0.000000e+00> : vector<2x8x8xf32>
    %58 = tpu.matmul %57, %44, %cst_21 {dimension_numbers = #tpu.dot_dimension_numbers<[2], [1], [1], [2], [0, 0, 0, 1, 1, 2], [0], [0]>} : vector<2x8x8xf32>, vector<2x8x8xf32>, vector<2x8x8xf32> -> vector<2x8x8xf32>
    "tpu.trace_stop"() : () -> ()
    %59 = vector.shape_cast %58 : vector<2x8x8xf32> to vector<16x8xf32>
    %c0_22 = arith.constant 0 : index
    %c8 = arith.constant 8 : index
    %60 = vector.load %arg22[%c0_22, %c8] : memref<16x32xf32, #tpu.memory_space<vmem>>, vector<16x8xf32>
    tpu.vector_store %arg22[%c0_22, %c8], %59 {strides = array<i32>} : memref<16x32xf32, #tpu.memory_space<vmem>>, vector<16x8xf32>,
    %61 = vector.extract_strided_slice %13 {offsets = [0, 16], sizes = [16, 8], strides = [1, 1]} : vector<16x32xf32> to vector<16x8xf32>
    %62 = vector.shape_cast %61 : vector<16x8xf32> to vector<2x8x8xf32>
    %63 = vector.extract_strided_slice %14 {offsets = [0, 16], sizes = [16, 8], strides = [1, 1]} : vector<16x32xf32> to vector<16x8xf32>
    %64 = vector.shape_cast %63 : vector<16x8xf32> to vector<2x8x8xf32>
    %65 = vector.extract_strided_slice %15 {offsets = [0, 16], sizes = [16, 8], strides = [1, 1]} : vector<16x32xf32> to vector<16x8xf32>
    %66 = vector.shape_cast %65 : vector<16x8xf32> to vector<2x8x8xf32>
    "tpu.trace_start"() <{level = 10 : i32, message = "bqd,bkd->bqk"}> : () -> ()
    %cst_23 = arith.constant dense<0.000000e+00> : vector<2x8x8xf32>
    %67 = tpu.matmul %62, %64, %cst_23 {dimension_numbers = #tpu.dot_dimension_numbers<[2], [2], [1], [1], [0, 0, 0, 1, 1, 1], [0], [0]>} : vector<2x8x8xf32>, vector<2x8x8xf32>, vector<2x8x8xf32> -> vector<2x8x8xf32>
    "tpu.trace_stop"() : () -> ()
    %68 = vector.broadcast %16 : vector<2x1x8xf32> to vector<2x8x8xf32>
    %69 = arith.addf %67, %68 : vector<2x8x8xf32>
    %cst_24 = arith.constant dense<0xFF800000> : vector<2x8xf32>
    %70 = vector.multi_reduction <maximumf>, %69, %cst_24 [2] : vector<2x8x8xf32> to vector<2x8xf32>
    %71 = vector.shape_cast %70 : vector<2x8xf32> to vector<2x8x1xf32>
    %72 = vector.broadcast %71 : vector<2x8x1xf32> to vector<2x8x8xf32>
    %73 = arith.subf %69, %72 : vector<2x8x8xf32>
    %74 = math.exp %73 : vector<2x8x8xf32>
    %cst_25 = arith.constant dense<0.000000e+00> : vector<2x8xf32>
    %75 = vector.multi_reduction <add>, %74, %cst_25 [2] : vector<2x8x8xf32> to vector<2x8xf32>
    %76 = vector.shape_cast %75 : vector<2x8xf32> to vector<2x8x1xf32>
    %77 = tpu.reciprocal %76 {approx = true} : vector<2x8x1xf32> -> vector<2x8x1xf32>
    %78 = vector.broadcast %77 : vector<2x8x1xf32> to vector<2x8x8xf32>
    %79 = arith.mulf %74, %78 : vector<2x8x8xf32>
    "tpu.trace_start"() <{level = 10 : i32, message = "bqk,bkd->bqd"}> : () -> ()
    %cst_26 = arith.constant dense<0.000000e+00> : vector<2x8x8xf32>
    %80 = tpu.matmul %79, %66, %cst_26 {dimension_numbers = #tpu.dot_dimension_numbers<[2], [1], [1], [2], [0, 0, 0, 1, 1, 2], [0], [0]>} : vector<2x8x8xf32>, vector<2x8x8xf32>, vector<2x8x8xf32> -> vector<2x8x8xf32>
    "tpu.trace_stop"() : () -> ()
    %81 = vector.shape_cast %80 : vector<2x8x8xf32> to vector<16x8xf32>
    %c0_27 = arith.constant 0 : index
    %c16 = arith.constant 16 : index
    %82 = vector.load %arg22[%c0_27, %c16] : memref<16x32xf32, #tpu.memory_space<vmem>>, vector<16x8xf32>
    tpu.vector_store %arg22[%c0_27, %c16], %81 {strides = array<i32>} : memref<16x32xf32, #tpu.memory_space<vmem>>, vector<16x8xf32>,
    %83 = vector.extract_strided_slice %13 {offsets = [0, 24], sizes = [16, 8], strides = [1, 1]} : vector<16x32xf32> to vector<16x8xf32>
    %84 = vector.shape_cast %83 : vector<16x8xf32> to vector<2x8x8xf32>
    %85 = vector.extract_strided_slice %14 {offsets = [0, 24], sizes = [16, 8], strides = [1, 1]} : vector<16x32xf32> to vector<16x8xf32>
    %86 = vector.shape_cast %85 : vector<16x8xf32> to vector<2x8x8xf32>
    %87 = vector.extract_strided_slice %15 {offsets = [0, 24], sizes = [16, 8], strides = [1, 1]} : vector<16x32xf32> to vector<16x8xf32>
    %88 = vector.shape_cast %87 : vector<16x8xf32> to vector<2x8x8xf32>
    "tpu.trace_start"() <{level = 10 : i32, message = "bqd,bkd->bqk"}> : () -> ()
    %cst_28 = arith.constant dense<0.000000e+00> : vector<2x8x8xf32>
    %89 = tpu.matmul %84, %86, %cst_28 {dimension_numbers = #tpu.dot_dimension_numbers<[2], [2], [1], [1], [0, 0, 0, 1, 1, 1], [0], [0]>} : vector<2x8x8xf32>, vector<2x8x8xf32>, vector<2x8x8xf32> -> vector<2x8x8xf32>
    "tpu.trace_stop"() : () -> ()
    %90 = vector.broadcast %16 : vector<2x1x8xf32> to vector<2x8x8xf32>
    %91 = arith.addf %89, %90 : vector<2x8x8xf32>
    %cst_29 = arith.constant dense<0xFF800000> : vector<2x8xf32>
    %92 = vector.multi_reduction <maximumf>, %91, %cst_29 [2] : vector<2x8x8xf32> to vector<2x8xf32>
    %93 = vector.shape_cast %92 : vector<2x8xf32> to vector<2x8x1xf32>
    %94 = vector.broadcast %93 : vector<2x8x1xf32> to vector<2x8x8xf32>
    %95 = arith.subf %91, %94 : vector<2x8x8xf32>
    %96 = math.exp %95 : vector<2x8x8xf32>
    %cst_30 = arith.constant dense<0.000000e+00> : vector<2x8xf32>
    %97 = vector.multi_reduction <add>, %96, %cst_30 [2] : vector<2x8x8xf32> to vector<2x8xf32>
    %98 = vector.shape_cast %97 : vector<2x8xf32> to vector<2x8x1xf32>
    %99 = tpu.reciprocal %98 {approx = true} : vector<2x8x1xf32> -> vector<2x8x1xf32>
    %100 = vector.broadcast %99 : vector<2x8x1xf32> to vector<2x8x8xf32>
    %101 = arith.mulf %96, %100 : vector<2x8x8xf32>
    "tpu.trace_start"() <{level = 10 : i32, message = "bqk,bkd->bqd"}> : () -> ()
    %cst_31 = arith.constant dense<0.000000e+00> : vector<2x8x8xf32>
    %102 = tpu.matmul %101, %88, %cst_31 {dimension_numbers = #tpu.dot_dimension_numbers<[2], [1], [1], [2], [0, 0, 0, 1, 1, 2], [0], [0]>} : vector<2x8x8xf32>, vector<2x8x8xf32>, vector<2x8x8xf32> -> vector<2x8x8xf32>
    "tpu.trace_stop"() : () -> ()
    %103 = vector.shape_cast %102 : vector<2x8x8xf32> to vector<16x8xf32>
    %c0_32 = arith.constant 0 : index
    %c24 = arith.constant 24 : index
    %104 = vector.load %arg22[%c0_32, %c24] : memref<16x32xf32, #tpu.memory_space<vmem>>, vector<16x8xf32>
    tpu.vector_store %arg22[%c0_32, %c24], %103 {strides = array<i32>} : memref<16x32xf32, #tpu.memory_space<vmem>>, vector<16x8xf32>,
    %c0_33 = arith.constant 0 : index
    %c0_34 = arith.constant 0 : index
    %105 = vector.load %arg22[%c0_33, %c0_34] : memref<16x32xf32, #tpu.memory_space<vmem>>, vector<16x32xf32>
    %c0_35 = arith.constant 0 : index
    %c0_36 = arith.constant 0 : index
    %c0_37 = arith.constant 0 : index
    %106 = vector.load %arg7[%c0_35, %c0_36, %c0_37] : memref<1x32x32xf32, #tpu.memory_space<vmem>>, vector<1x32x32xf32>
    %107 = vector.shape_cast %106 : vector<1x32x32xf32> to vector<32x32xf32>
    %cst_38 = arith.constant dense<0.000000e+00> : vector<16x32xf32>
    %108 = tpu.matmul %105, %107, %cst_38 {dimension_numbers = #tpu.dot_dimension_numbers<[1], [0], [0], [1], [0, 0, 1, 1], [], []>} : vector<16x32xf32>, vector<32x32xf32>, vector<16x32xf32> -> vector<16x32xf32>
    %c0_39 = arith.constant 0 : index
    %c0_40 = arith.constant 0 : index
    %c0_41 = arith.constant 0 : index
    %109 = vector.load %arg8[%c0_39, %c0_40, %c0_41] : memref<1x1x32xf32, #tpu.memory_space<vmem>>, vector<1x1x32xf32>
    %110 = vector.shape_cast %109 : vector<1x1x32xf32> to vector<1x32xf32>
    %111 = vector.broadcast %110 : vector<1x32xf32> to vector<16x32xf32>
    %112 = arith.addf %108, %111 : vector<16x32xf32>
    %113 = arith.addf %3, %112 : vector<16x32xf32>
    %c0_42 = arith.constant 0 : index
    %c0_43 = arith.constant 0 : index
    %c0_44 = arith.constant 0 : index
    %114 = vector.load %arg13[%c0_42, %c0_43, %c0_44] : memref<1x1x32xf32, #tpu.memory_space<vmem>>, vector<1x1x32xf32>
    %115 = vector.shape_cast %114 : vector<1x1x32xf32> to vector<1x32xf32>
    %c0_45 = arith.constant 0 : index
    %c0_46 = arith.constant 0 : index
    %c0_47 = arith.constant 0 : index
    %116 = vector.load %arg14[%c0_45, %c0_46, %c0_47] : memref<1x1x32xf32, #tpu.memory_space<vmem>>, vector<1x1x32xf32>
    %117 = vector.shape_cast %116 : vector<1x1x32xf32> to vector<1x32xf32>
    %cst_48 = arith.constant dense<0.000000e+00> : vector<16xf32>
    %118 = vector.multi_reduction <add>, %113, %cst_48 [1] : vector<16x32xf32> to vector<16xf32>
    %119 = vector.shape_cast %118 : vector<16xf32> to vector<16x1xf32>
    %cst_49 = arith.constant 3.200000e+01 : f32
    %120 = vector.broadcast %cst_49 : f32 to vector<16x1xf32>
    %121 = arith.divf %119, %120 : vector<16x1xf32>
    %122 = vector.broadcast %121 : vector<16x1xf32> to vector<16x32xf32>
    %123 = arith.subf %113, %122 : vector<16x32xf32>
    %124 = arith.mulf %123, %123 : vector<16x32xf32>
    %cst_50 = arith.constant dense<0.000000e+00> : vector<16xf32>
    %125 = vector.multi_reduction <add>, %124, %cst_50 [1] : vector<16x32xf32> to vector<16xf32>
    %126 = vector.shape_cast %125 : vector<16xf32> to vector<16x1xf32>
    %cst_51 = arith.constant 3.200000e+01 : f32
    %127 = vector.broadcast %cst_51 : f32 to vector<16x1xf32>
    %128 = arith.divf %126, %127 : vector<16x1xf32>
    %cst_52 = arith.constant 9.99999974E-6 : f32
    %129 = vector.broadcast %cst_52 : f32 to vector<16x1xf32>
    %130 = arith.addf %128, %129 : vector<16x1xf32>
    %131 = math.rsqrt %130 : vector<16x1xf32>
    %132 = vector.broadcast %131 : vector<16x1xf32> to vector<16x32xf32>
    %133 = arith.mulf %123, %132 : vector<16x32xf32>
    %134 = vector.broadcast %115 : vector<1x32xf32> to vector<16x32xf32>
    %135 = arith.mulf %133, %134 : vector<16x32xf32>
    %136 = vector.broadcast %117 : vector<1x32xf32> to vector<16x32xf32>
    %137 = arith.addf %135, %136 : vector<16x32xf32>
    %c0_53 = arith.constant 0 : index
    %c0_54 = arith.constant 0 : index
    %c0_55 = arith.constant 0 : index
    %138 = vector.load %arg9[%c0_53, %c0_54, %c0_55] : memref<1x32x64xf32, #tpu.memory_space<vmem>>, vector<1x32x64xf32>
    %139 = vector.shape_cast %138 : vector<1x32x64xf32> to vector<32x64xf32>
    %cst_56 = arith.constant dense<0.000000e+00> : vector<16x64xf32>
    %140 = tpu.matmul %137, %139, %cst_56 {dimension_numbers = #tpu.dot_dimension_numbers<[1], [0], [0], [1], [0, 0, 1, 1], [], []>} : vector<16x32xf32>, vector<32x64xf32>, vector<16x64xf32> -> vector<16x64xf32>
    %c0_57 = arith.constant 0 : index
    %c0_58 = arith.constant 0 : index
    %c0_59 = arith.constant 0 : index
    %141 = vector.load %arg10[%c0_57, %c0_58, %c0_59] : memref<1x1x64xf32, #tpu.memory_space<vmem>>, vector<1x1x64xf32>
    %142 = vector.shape_cast %141 : vector<1x1x64xf32> to vector<1x64xf32>
    %143 = vector.broadcast %142 : vector<1x64xf32> to vector<16x64xf32>
    %144 = arith.addf %140, %143 : vector<16x64xf32>
    %145 = arith.mulf %144, %144 : vector<16x64xf32>
    %146 = arith.mulf %144, %145 : vector<16x64xf32>
    %cst_60 = arith.constant 4.471500e-02 : f32
    %147 = vector.broadcast %cst_60 : f32 to vector<16x64xf32>
    %148 = arith.mulf %147, %146 : vector<16x64xf32>
    %149 = arith.addf %144, %148 : vector<16x64xf32>
    %cst_61 = arith.constant 0.797884583 : f32
    %150 = vector.broadcast %cst_61 : f32 to vector<16x64xf32>
    %151 = arith.mulf %150, %149 : vector<16x64xf32>
    %152 = math.tanh %151 : vector<16x64xf32>
    %cst_62 = arith.constant 1.000000e+00 : f32
    %153 = vector.broadcast %cst_62 : f32 to vector<16x64xf32>
    %154 = arith.addf %153, %152 : vector<16x64xf32>
    %cst_63 = arith.constant 5.000000e-01 : f32
    %155 = vector.broadcast %cst_63 : f32 to vector<16x64xf32>
    %156 = arith.mulf %155, %154 : vector<16x64xf32>
    %157 = arith.mulf %144, %156 : vector<16x64xf32>
    %c0_64 = arith.constant 0 : index
    %c0_65 = arith.constant 0 : index
    %c0_66 = arith.constant 0 : index
    %158 = vector.load %arg11[%c0_64, %c0_65, %c0_66] : memref<1x64x32xf32, #tpu.memory_space<vmem>>, vector<1x64x32xf32>
    %159 = vector.shape_cast %158 : vector<1x64x32xf32> to vector<64x32xf32>
    %cst_67 = arith.constant dense<0.000000e+00> : vector<16x32xf32>
    %160 = tpu.matmul %157, %159, %cst_67 {dimension_numbers = #tpu.dot_dimension_numbers<[1], [0], [0], [1], [0, 0, 1, 1], [], []>} : vector<16x64xf32>, vector<64x32xf32>, vector<16x32xf32> -> vector<16x32xf32>
    %c0_68 = arith.constant 0 : index
    %c0_69 = arith.constant 0 : index
    %c0_70 = arith.constant 0 : index
    %161 = vector.load %arg12[%c0_68, %c0_69, %c0_70] : memref<1x1x32xf32, #tpu.memory_space<vmem>>, vector<1x1x32xf32>
    %162 = vector.shape_cast %161 : vector<1x1x32xf32> to vector<1x32xf32>
    %163 = vector.broadcast %162 : vector<1x32xf32> to vector<16x32xf32>
    %164 = arith.addf %160, %163 : vector<16x32xf32>
    %165 = arith.addf %137, %164 : vector<16x32xf32>
    %c0_71 = arith.constant 0 : index
    %c0_72 = arith.constant 0 : index
    %c0_73 = arith.constant 0 : index
    %166 = vector.load %arg15[%c0_71, %c0_72, %c0_73] : memref<1x1x32xf32, #tpu.memory_space<vmem>>, vector<1x1x32xf32>
    %167 = vector.shape_cast %166 : vector<1x1x32xf32> to vector<1x32xf32>
    %c0_74 = arith.constant 0 : index
    %c0_75 = arith.constant 0 : index
    %c0_76 = arith.constant 0 : index
    %168 = vector.load %arg16[%c0_74, %c0_75, %c0_76] : memref<1x1x32xf32, #tpu.memory_space<vmem>>, vector<1x1x32xf32>
    %169 = vector.shape_cast %168 : vector<1x1x32xf32> to vector<1x32xf32>
    %cst_77 = arith.constant dense<0.000000e+00> : vector<16xf32>
    %170 = vector.multi_reduction <add>, %165, %cst_77 [1] : vector<16x32xf32> to vector<16xf32>
    %171 = vector.shape_cast %170 : vector<16xf32> to vector<16x1xf32>
    %cst_78 = arith.constant 3.200000e+01 : f32
    %172 = vector.broadcast %cst_78 : f32 to vector<16x1xf32>
    %173 = arith.divf %171, %172 : vector<16x1xf32>
    %174 = vector.broadcast %173 : vector<16x1xf32> to vector<16x32xf32>
    %175 = arith.subf %165, %174 : vector<16x32xf32>
    %176 = arith.mulf %175, %175 : vector<16x32xf32>
    %cst_79 = arith.constant dense<0.000000e+00> : vector<16xf32>
    %177 = vector.multi_reduction <add>, %176, %cst_79 [1] : vector<16x32xf32> to vector<16xf32>
    %178 = vector.shape_cast %177 : vector<16xf32> to vector<16x1xf32>
    %cst_80 = arith.constant 3.200000e+01 : f32
    %179 = vector.broadcast %cst_80 : f32 to vector<16x1xf32>
    %180 = arith.divf %178, %179 : vector<16x1xf32>
    %cst_81 = arith.constant 9.99999974E-6 : f32
    %181 = vector.broadcast %cst_81 : f32 to vector<16x1xf32>
    %182 = arith.addf %180, %181 : vector<16x1xf32>
    %183 = math.rsqrt %182 : vector<16x1xf32>
    %184 = vector.broadcast %183 : vector<16x1xf32> to vector<16x32xf32>
    %185 = arith.mulf %175, %184 : vector<16x32xf32>
    %186 = vector.broadcast %167 : vector<1x32xf32> to vector<16x32xf32>
    %187 = arith.mulf %185, %186 : vector<16x32xf32>
    %188 = vector.broadcast %169 : vector<1x32xf32> to vector<16x32xf32>
    %189 = arith.addf %187, %188 : vector<16x32xf32>
    %c0_82 = arith.constant 0 : index
    %c0_83 = arith.constant 0 : index
    %190 = vector.load %arg21[%c0_82, %c0_83] : memref<16x32xf32, #tpu.memory_space<vmem>>, vector<16x32xf32>
    tpu.vector_store %arg21[%c0_82, %c0_83], %189 {strides = array<i32>} : memref<16x32xf32, #tpu.memory_space<vmem>>, vector<16x32xf32>,
    %c1_i32 = arith.constant 1 : i32
    %191 = arith.cmpi eq, %arg0, %c1_i32 : i32
    %192 = arith.extui %191 : i1 to i32
    %c0_i32_84 = arith.constant 0 : i32
    %193 = arith.cmpi ne, %192, %c0_i32_84 : i32
    scf.if %193 {
      %194 = vector.shape_cast %189 : vector<16x32xf32> to vector<2x8x32xf32>
      %195 = vector.extract_strided_slice %194 {offsets = [0, 0, 0], sizes = [2, 1, 32], strides = [1, 1, 1]} : vector<2x8x32xf32> to vector<2x1x32xf32>
      %196 = vector.shape_cast %195 : vector<2x1x32xf32> to vector<2x32xf32>
      %197 = arith.mulf %196, %196 : vector<2x32xf32>
      %cst_85 = arith.constant dense<0.000000e+00> : vector<2xf32>
      %198 = vector.multi_reduction <add>, %197, %cst_85 [1] : vector<2x32xf32> to vector<2xf32>
      %199 = vector.shape_cast %198 : vector<2xf32> to vector<2x1xf32>
      %200 = math.sqrt %199 : vector<2x1xf32>
      %cst_86 = arith.constant 9.99999996E-13 : f32
      %201 = vector.broadcast %cst_86 : f32 to vector<2x1xf32>
      %202 = arith.maximumf %200, %201 : vector<2x1xf32>
      %203 = vector.broadcast %202 : vector<2x1xf32> to vector<2x32xf32>
      %204 = arith.divf %196, %203 : vector<2x32xf32>
      %c0_87 = arith.constant 0 : index
      %c0_88 = arith.constant 0 : index
      %205 = vector.load %arg19[%c0_87, %c0_88] : memref<2x32xf32, #tpu.memory_space<vmem>>, vector<2x32xf32>
      tpu.vector_store %arg19[%c0_87, %c0_88], %204 {strides = array<i32>} : memref<2x32xf32, #tpu.memory_space<vmem>>, vector<2x32xf32>,
      %c0_89 = arith.constant 0 : index
      %c0_90 = arith.constant 0 : index
      %206 = vector.load %arg17[%c0_89, %c0_90] : memref<1x32xf32, #tpu.memory_space<vmem>>, vector<1x32xf32>
      %207 = vector.shape_cast %206 : vector<1x32xf32> to vector<1x1x32xf32>
      %208 = vector.broadcast %207 : vector<1x1x32xf32> to vector<2x8x32xf32>
      %209 = arith.mulf %194, %208 : vector<2x8x32xf32>
      %cst_91 = arith.constant dense<0.000000e+00> : vector<2x8xf32>
      %210 = vector.multi_reduction <add>, %209, %cst_91 [2] : vector<2x8x32xf32> to vector<2x8xf32>
      %c0_92 = arith.constant 0 : index
      %c0_93 = arith.constant 0 : index
      %211 = vector.load %arg18[%c0_92, %c0_93] : memref<1x1xf32, #tpu.memory_space<vmem>>, vector<1x1xf32>
      %212 = vector.broadcast %211 : vector<1x1xf32> to vector<2x8xf32>
      %213 = arith.addf %210, %212 : vector<2x8xf32>
      %cst_94 = arith.constant 0.000000e+00 : f32
      %214 = vector.broadcast %cst_94 : f32 to vector<2x8xf32>
      %215 = arith.maximumf %213, %214 : vector<2x8xf32>
      %c0_95 = arith.constant 0 : index
      %c0_96 = arith.constant 0 : index
      %216 = vector.load %arg20[%c0_95, %c0_96] : memref<2x8xf32, #tpu.memory_space<vmem>>, vector<2x8xf32>
      tpu.vector_store %arg20[%c0_95, %c0_96], %215 {strides = array<i32>} : memref<2x8xf32, #tpu.memory_space<vmem>>, vector<2x8xf32>,
    } else {
    }
    return
  }
  func.func @transform_0(%arg0: i32) -> (i32, i32) {
    %c0_i32 = arith.constant 0 : i32
    %c0_i32_0 = arith.constant 0 : i32
    %c0_i32_1 = arith.constant 0 : i32
    return %c0_i32, %c0_i32_0 : i32, i32
  }
  func.func @transform_1(%arg0: i32) -> (i32, i32) {
    %c0_i32 = arith.constant 0 : i32
    %c0_i32_0 = arith.constant 0 : i32
    %c0_i32_1 = arith.constant 0 : i32
    return %c0_i32, %c0_i32_0 : i32, i32
  }
  func.func @transform_2(%arg0: i32) -> (i32, i32) {
    %c0_i32 = arith.constant 0 : i32
    %c0_i32_0 = arith.constant 0 : i32
    %c0_i32_1 = arith.constant 0 : i32
    return %c0_i32, %c0_i32_0 : i32, i32
  }
  func.func @transform_3(%arg0: i32) -> (i32, i32, i32) {
    %c0_i32 = arith.constant 0 : i32
    %c0_i32_0 = arith.constant 0 : i32
    %c0_i32_1 = arith.constant 0 : i32
    %c0_i32_2 = arith.constant 0 : i32
    return %c0_i32, %c0_i32_0, %c0_i32_1 : i32, i32, i32
  }
  func.func @transform_4(%arg0: i32) -> (i32, i32, i32) {
    %c0_i32 = arith.constant 0 : i32
    %c0_i32_0 = arith.constant 0 : i32
    %c0_i32_1 = arith.constant 0 : i32
    return %arg0, %c0_i32, %c0_i32_0 : i32, i32, i32
  }
  func.func @transform_5(%arg0: i32) -> (i32, i32, i32) {
    %c0_i32 = arith.constant 0 : i32
    %c0_i32_0 = arith.constant 0 : i32
    %c0_i32_1 = arith.constant 0 : i32
    return %arg0, %c0_i32, %c0_i32_0 : i32, i32, i32
  }
  func.func @transform_6(%arg0: i32) -> (i32, i32, i32) {
    %c0_i32 = arith.constant 0 : i32
    %c0_i32_0 = arith.constant 0 : i32
    %c0_i32_1 = arith.constant 0 : i32
    return %arg0, %c0_i32, %c0_i32_0 : i32, i32, i32
  }
  func.func @transform_7(%arg0: i32) -> (i32, i32, i32) {
    %c0_i32 = arith.constant 0 : i32
    %c0_i32_0 = arith.constant 0 : i32
    %c0_i32_1 = arith.constant 0 : i32
    return %arg0, %c0_i32, %c0_i32_0 : i32, i32, i32
  }
  func.func @transform_8(%arg0: i32) -> (i32, i32, i32) {
    %c0_i32 = arith.constant 0 : i32
    %c0_i32_0 = arith.constant 0 : i32
    %c0_i32_1 = arith.constant 0 : i32
    return %arg0, %c0_i32, %c0_i32_0 : i32, i32, i32
  }
  func.func @transform_9(%arg0: i32) -> (i32, i32, i32) {
    %c0_i32 = arith.constant 0 : i32
    %c0_i32_0 = arith.constant 0 : i32
    %c0_i32_1 = arith.constant 0 : i32
    return %arg0, %c0_i32, %c0_i32_0 : i32, i32, i32
  }
  func.func @transform_10(%arg0: i32) -> (i32, i32, i32) {
    %c0_i32 = arith.constant 0 : i32
    %c0_i32_0 = arith.constant 0 : i32
    %c0_i32_1 = arith.constant 0 : i32
    return %arg0, %c0_i32, %c0_i32_0 : i32, i32, i32
  }
  func.func @transform_11(%arg0: i32) -> (i32, i32, i32) {
    %c0_i32 = arith.constant 0 : i32
    %c0_i32_0 = arith.constant 0 : i32
    %c0_i32_1 = arith.constant 0 : i32
    return %arg0, %c0_i32, %c0_i32_0 : i32, i32, i32
  }
  func.func @transform_12(%arg0: i32) -> (i32, i32, i32) {
    %c0_i32 = arith.constant 0 : i32
    %c0_i32_0 = arith.constant 0 : i32
    %c0_i32_1 = arith.constant 0 : i32
    return %arg0, %c0_i32, %c0_i32_0 : i32, i32, i32
  }
  func.func @transform_13(%arg0: i32) -> (i32, i32, i32) {
    %c0_i32 = arith.constant 0 : i32
    %c0_i32_0 = arith.constant 0 : i32
    %c0_i32_1 = arith.constant 0 : i32
    return %arg0, %c0_i32, %c0_i32_0 : i32, i32, i32
  }
  func.func @transform_14(%arg0: i32) -> (i32, i32, i32) {
    %c0_i32 = arith.constant 0 : i32
    %c0_i32_0 = arith.constant 0 : i32
    %c0_i32_1 = arith.constant 0 : i32
    return %arg0, %c0_i32, %c0_i32_0 : i32, i32, i32
  }
  func.func @transform_15(%arg0: i32) -> (i32, i32, i32) {
    %c0_i32 = arith.constant 0 : i32
    %c0_i32_0 = arith.constant 0 : i32
    %c0_i32_1 = arith.constant 0 : i32
    return %arg0, %c0_i32, %c0_i32_0 : i32, i32, i32
  }
  func.func @transform_16(%arg0: i32) -> (i32, i32) {
    %c0_i32 = arith.constant 0 : i32
    %c0_i32_0 = arith.constant 0 : i32
    %c0_i32_1 = arith.constant 0 : i32
    return %c0_i32, %c0_i32_0 : i32, i32
  }
  func.func @transform_17(%arg0: i32) -> (i32, i32) {
    %c0_i32 = arith.constant 0 : i32
    %c0_i32_0 = arith.constant 0 : i32
    %c0_i32_1 = arith.constant 0 : i32
    return %c0_i32, %c0_i32_0 : i32, i32
  }
  func.func @transform_18(%arg0: i32) -> (i32, i32) {
    %c0_i32 = arith.constant 0 : i32
    %c0_i32_0 = arith.constant 0 : i32
    %c0_i32_1 = arith.constant 0 : i32
    return %c0_i32, %c0_i32_0 : i32, i32
  }
  func.func @transform_19(%arg0: i32) -> (i32, i32) {
    %c0_i32 = arith.constant 0 : i32
    %c0_i32_0 = arith.constant 0 : i32
    %c0_i32_1 = arith.constant 0 : i32
    return %c0_i32, %c0_i32_0 : i32, i32
  }
}

</mosaic_0001>

<llo_original>
// kernel: tpu_custom_call.1
$region0: #{tpu_custom_call.1}
  #allocation0 [shape = 'u32[]', space=smem, size = 0x4, offset = 0x4, fixed_abs, tag = 'smem constant byte address 0x4 - core index']
  #allocation1 [shape = 'u32[144,128]{1,0:T(1,128)}', space=vmem, size = 0x12000, scoped, tag = 'internal scratch']
  #allocation2 [shape = 'f32[16,32]{1,0:T(8,128)}', space=vmem, size = 0x2000, scoped, tag = 'scratch operand']
  #allocation3 [shape = 'f32[16,32]{1,0:T(8,128)}', space=vmem, size = 0x2000, scoped, tag = 'scratch operand']
  #allocation4 [shape = 'f32[1,1]{1,0:T(1,128)S(1)}', space=vmem, size = 0x200, scoped, tag = 'scoped memory for tpu_custom_call.1']
  %s0 = inlined_call_operand.hbm [shape: f32[16,32], index: 0, kind: input, shape index: {}]
  %s1 = inlined_call_operand.hbm [shape: f32[1,32], index: 1, kind: input, shape index: {}]
  %s2 = inlined_call_operand.hbm [shape: f32[1,32], index: 2, kind: input, shape index: {}]
  %s3 = inlined_call_operand.vmem [shape: f32[2,1,8], index: 3, kind: input, shape index: {}]
  %s4 = inlined_call_operand.vmem [shape: f32[2,32,96], index: 4, kind: input, shape index: {}]
  %s5 = inlined_call_operand.vmem [shape: f32[2,1,96], index: 5, kind: input, shape index: {}]
  %s6 = inlined_call_operand.vmem [shape: f32[2,32,32], index: 6, kind: input, shape index: {}]
  %s7 = inlined_call_operand.vmem [shape: f32[2,1,32], index: 7, kind: input, shape index: {}]
  %s8 = inlined_call_operand.vmem [shape: f32[2,32,64], index: 8, kind: input, shape index: {}]
  %s9 = inlined_call_operand.vmem [shape: f32[2,1,64], index: 9, kind: input, shape index: {}]
  %s10 = inlined_call_operand.vmem [shape: f32[2,64,32], index: 10, kind: input, shape index: {}]
  %s11 = inlined_call_operand.vmem [shape: f32[2,1,32], index: 11, kind: input, shape index: {}]
  %s12 = inlined_call_operand.vmem [shape: f32[2,1,32], index: 12, kind: input, shape index: {}]
  %s13 = inlined_call_operand.vmem [shape: f32[2,1,32], index: 13, kind: input, shape index: {}]
  %s14 = inlined_call_operand.vmem [shape: f32[2,1,32], index: 14, kind: input, shape index: {}]
  %s15 = inlined_call_operand.vmem [shape: f32[2,1,32], index: 15, kind: input, shape index: {}]
  %s16 = inlined_call_operand.vmem [shape: f32[1,32], index: 16, kind: input, shape index: {}]
  %s17 = inlined_call_operand.<no memory space> [shape: f32[1,1], index: 17, kind: input, shape index: {}]
  %s18 = inlined_call_operand.hbm [shape: f32[2,32], index: 18, kind: output, shape index: {0}]
  %s19 = inlined_call_operand.hbm [shape: f32[2,8], index: 19, kind: output, shape index: {1}]
  %20 = xla_tuple %s18, %s19
  %s21 = sld [smem:[#allocation0]]
  $region133: #{tpu_custom_call.1} parent=0
    _
  %s23 = ssub.s32 1, %s21
  %s24 = scalar_select 0, %s23, %s21
  %v25 = vstv %s17
  %26 = vst [vmem:[#allocation4] sm:$0x1] %v25
  $region1: #{tpu_custom_call.1} parent=0
    #allocation5 [shape = 'u8[8192]{0}', space=vmem, size = 0x2000, scoped, tag = 'input window, operand 0, single buffered']
    #allocation6 [shape = 's32[2]{0}', space=sflag, size = 0x8, scoped, tag = 'scoped memory for tpu_custom_call.1']
    #allocation7 [shape = 's32[2]{0}', space=sflag, size = 0x8, scoped, tag = 'scoped memory for tpu_custom_call.1']
    #allocation8 [shape = 'u8[512]{0}', space=vmem, size = 0x400, scoped, tag = 'input window, operand 1, single buffered']
    #allocation9 [shape = 's32[1]{0}', space=sflag, size = 0x4, scoped, tag = 'scoped memory for tpu_custom_call.1']
    #allocation10 [shape = 'u8[512]{0}', space=vmem, size = 0x400, scoped, tag = 'input window, operand 2, single buffered']
    #allocation11 [shape = 'u8[1024]{0}', space=vmem, size = 0x400, scoped, tag = 'output window, operand 0, single buffered']
    #allocation12 [shape = 'u8[1024]{0}', space=vmem, size = 0x400, scoped, tag = 'output window, operand 1, single buffered']
    #allocation13 [shape = 's32[1]{0}', space=sflag, size = 0x4, scoped, tag = 'scoped memory for tpu_custom_call.1']
    %27 = vsyncpa [#allocation6], 0
    %28 = vsyncpa [#allocation9], 0
    %29 = vsyncpa [#allocation7], 0
    %30 = vsyncpa [#allocation13], 0
    loop: start=0, step=1, limit=4
    $region2: #{tpu_custom_call.1} parent=1 // loop_pre_header
      _
    $region3: #{tpu_custom_call.1} parent=1 // loop_header
      %s32 = sphi 0, %s36
      %p33 = scmp.ge.s32.totalorder %s32, 4
      %s40 = sphi 0, %s40
      %s42 = sphi 0, %s40
      %s43 = sphi 0, %s42
      %s57 = sphi 0, %s43
      %s61 = sphi 0, %s61
      %s63 = sphi 0, %s61
      %s64 = sphi 0, %s63
      %s78 = sphi 0, %s64
      %s82 = sphi 0, %s82
      %s84 = sphi 0, %s82
      %s85 = sphi 0, %s84
      %s99 = sphi 0, %s85
      %s103 = sphi 0, %s103
      %s105 = sphi 0, %s103
      %s106 = sphi 0, %s105
      %s120 = sphi 0, %s106
      %s126 = sphi 0, %s128
      %s129 = sphi 0, %s126
      %s130 = sphi 0, %s129
      %s146 = sphi 0, %s130
      %s152 = sphi 0, %s154
      %s155 = sphi 0, %s152
      %s156 = sphi 0, %s155
      %s172 = sphi 0, %s156
      %s178 = sphi 0, %s180
      %s181 = sphi 0, %s178
      %s182 = sphi 0, %s181
      %s198 = sphi 0, %s182
      %s204 = sphi 0, %s206
      %s207 = sphi 0, %s204
      %s208 = sphi 0, %s207
      %s224 = sphi 0, %s208
      %s230 = sphi 0, %s232
      %s233 = sphi 0, %s230
      %s234 = sphi 0, %s233
      %s250 = sphi 0, %s234
      %s256 = sphi 0, %s258
      %s259 = sphi 0, %s256
      %s260 = sphi 0, %s259
      %s276 = sphi 0, %s260
      %s282 = sphi 0, %s284
      %s285 = sphi 0, %s282
      %s286 = sphi 0, %s285
      %s302 = sphi 0, %s286
      %s308 = sphi 0, %s310
      %s311 = sphi 0, %s308
      %s312 = sphi 0, %s311
      %s328 = sphi 0, %s312
      %s334 = sphi 0, %s336
      %s337 = sphi 0, %s334
      %s338 = sphi 0, %s337
      %s354 = sphi 0, %s338
      %s360 = sphi 0, %s362
      %s363 = sphi 0, %s360
      %s364 = sphi 0, %s363
      %s380 = sphi 0, %s364
      %s386 = sphi 0, %s388
      %s389 = sphi 0, %s386
      %s390 = sphi 0, %s389
      %s406 = sphi 0, %s390
      %s412 = sphi 0, %s414
      %s415 = sphi 0, %s412
      %s416 = sphi 0, %s415
      %s432 = sphi 0, %s416
      %s436 = sphi 0, %s436
      %s438 = sphi 0, %s436
      %s439 = sphi 0, %s438
      %s453 = sphi 0, %s439
      %s457 = sphi 0, %s457
      %s459 = sphi 0, %s457
      %s460 = sphi 0, %s459
      %s474 = sphi 0, %s460
      %s478 = sphi 0, %s478
      %s480 = sphi 0, %s478
      %s481 = sphi 0, %s480
      %s495 = sphi 0, %s481
      %s499 = sphi 0, %s499
      %s501 = sphi 0, %s499
      %s502 = sphi 0, %s501
      %s516 = sphi 0, %s502
    $region4: #{tpu_custom_call.1} parent=1 // loop_header_branch
      %35 = sbr.rel (%p33) target = $region8
    $region5: #{tpu_custom_call.1} parent=1 // loop_body
      %s37 = ssub.s32 %s32, 1
      %s38 = ssub.s32 %s32, 2
      %s39 = sadd.s32 %s32, 1
      %s41 = sadd.s32 %s40, 1
      %p44 = scmp.eq.s32.totalorder %s32, 1
      %p45 = scmp.ne.s32.totalorder %s40, %s42
      %p46 = scmp.eq.s32.totalorder %s32, 0
      %p47 = por %p45, %p46
      %p48 = scmp.ne.s32.totalorder %s40, %s42
      %p49 = scmp.eq.s32.totalorder %s37, 1
      %p50 = por %p48, %p49
      %p51 = scmp.ne.s32.totalorder %s42, %s43
      %p52 = scmp.eq.s32.totalorder %s37, 0
      %p53 = por %p51, %p52
      %p54 = scmp.ne.s32.totalorder %s42, %s43
      %p55 = scmp.eq.s32.totalorder %s38, 1
      %p56 = por %p54, %p55
      %p58 = scmp.ne.s32.totalorder %s43, %s57
      %p59 = scmp.eq.s32.totalorder %s38, 0
      %p60 = por %p58, %p59
      %s62 = sadd.s32 %s61, 1
      %p65 = scmp.eq.s32.totalorder %s32, 1
      %p66 = scmp.ne.s32.totalorder %s61, %s63
      %p67 = scmp.eq.s32.totalorder %s32, 0
      %p68 = por %p66, %p67
      %p69 = scmp.ne.s32.totalorder %s61, %s63
      %p70 = scmp.eq.s32.totalorder %s37, 1
      %p71 = por %p69, %p70
      %p72 = scmp.ne.s32.totalorder %s63, %s64
      %p73 = scmp.eq.s32.totalorder %s37, 0
      %p74 = por %p72, %p73
      %p75 = scmp.ne.s32.totalorder %s63, %s64
      %p76 = scmp.eq.s32.totalorder %s38, 1
      %p77 = por %p75, %p76
      %p79 = scmp.ne.s32.totalorder %s64, %s78
      %p80 = scmp.eq.s32.totalorder %s38, 0
      %p81 = por %p79, %p80
      %s83 = sadd.s32 %s82, 1
      %p86 = scmp.eq.s32.totalorder %s32, 1
      %p87 = scmp.ne.s32.totalorder %s82, %s84
      %p88 = scmp.eq.s32.totalorder %s32, 0
      %p89 = por %p87, %p88
      %p90 = scmp.ne.s32.totalorder %s82, %s84
      %p91 = scmp.eq.s32.totalorder %s37, 1
      %p92 = por %p90, %p91
      %p93 = scmp.ne.s32.totalorder %s84, %s85
      %p94 = scmp.eq.s32.totalorder %s37, 0
      %p95 = por %p93, %p94
      %p96 = scmp.ne.s32.totalorder %s84, %s85
      %p97 = scmp.eq.s32.totalorder %s38, 1
      %p98 = por %p96, %p97
      %p100 = scmp.ne.s32.totalorder %s85, %s99
      %p101 = scmp.eq.s32.totalorder %s38, 0
      %p102 = por %p100, %p101
      %s104 = sadd.s32 %s103, 1
      %p107 = scmp.eq.s32.totalorder %s32, 1
      %p108 = scmp.ne.s32.totalorder %s103, %s105
      %p109 = scmp.eq.s32.totalorder %s32, 0
      %p110 = por %p108, %p109
      %p111 = scmp.ne.s32.totalorder %s103, %s105
      %p112 = scmp.eq.s32.totalorder %s37, 1
      %p113 = por %p111, %p112
      %p114 = scmp.ne.s32.totalorder %s105, %s106
      %p115 = scmp.eq.s32.totalorder %s37, 0
      %p116 = por %p114, %p115
      %p117 = scmp.ne.s32.totalorder %s105, %s106
      %p118 = scmp.eq.s32.totalorder %s38, 1
      %p119 = por %p117, %p118
      %p121 = scmp.ne.s32.totalorder %s106, %s120
      %p122 = scmp.eq.s32.totalorder %s38, 0
      %p123 = por %p121, %p122
      %s124 = ssub.s32 %s32, %s39
      %p125 = scmp.eq.s32.totalorder %s124, 0
      %s127 = sadd.s32 %s126, 1
      %s128 = scalar_select %p125, %s126, %s127
      %p131 = pneg %p125
      %p132 = scmp.eq.s32.totalorder %s32, 1
      %p133 = por %p131, %p132
      %p134 = scmp.ne.s32.totalorder %s126, %s129
      %p135 = scmp.eq.s32.totalorder %s32, 0
      %p136 = por %p134, %p135
      %p137 = scmp.ne.s32.totalorder %s126, %s129
      %p138 = scmp.eq.s32.totalorder %s37, 1
      %p139 = por %p137, %p138
      %p140 = scmp.ne.s32.totalorder %s129, %s130
      %p141 = scmp.eq.s32.totalorder %s37, 0
      %p142 = por %p140, %p141
      %p143 = scmp.ne.s32.totalorder %s129, %s130
      %p144 = scmp.eq.s32.totalorder %s38, 1
      %p145 = por %p143, %p144
      %p147 = scmp.ne.s32.totalorder %s130, %s146
      %p148 = scmp.eq.s32.totalorder %s38, 0
      %p149 = por %p147, %p148
      %s150 = ssub.s32 %s32, %s39
      %p151 = scmp.eq.s32.totalorder %s150, 0
      %s153 = sadd.s32 %s152, 1
      %s154 = scalar_select %p151, %s152, %s153
      %p157 = pneg %p151
      %p158 = scmp.eq.s32.totalorder %s32, 1
      %p159 = por %p157, %p158
      %p160 = scmp.ne.s32.totalorder %s152, %s155
      %p161 = scmp.eq.s32.totalorder %s32, 0
      %p162 = por %p160, %p161
      %p163 = scmp.ne.s32.totalorder %s152, %s155
      %p164 = scmp.eq.s32.totalorder %s37, 1
      %p165 = por %p163, %p164
      %p166 = scmp.ne.s32.totalorder %s155, %s156
      %p167 = scmp.eq.s32.totalorder %s37, 0
      %p168 = por %p166, %p167
      %p169 = scmp.ne.s32.totalorder %s155, %s156
      %p170 = scmp.eq.s32.totalorder %s38, 1
      %p171 = por %p169, %p170
      %p173 = scmp.ne.s32.totalorder %s156, %s172
      %p174 = scmp.eq.s32.totalorder %s38, 0
      %p175 = por %p173, %p174
      %s176 = ssub.s32 %s32, %s39
      %p177 = scmp.eq.s32.totalorder %s176, 0
      %s179 = sadd.s32 %s178, 1
      %s180 = scalar_select %p177, %s178, %s179
      %p183 = pneg %p177
      %p184 = scmp.eq.s32.totalorder %s32, 1
      %p185 = por %p183, %p184
      %p186 = scmp.ne.s32.totalorder %s178, %s181
      %p187 = scmp.eq.s32.totalorder %s32, 0
      %p188 = por %p186, %p187
      %p189 = scmp.ne.s32.totalorder %s178, %s181
      %p190 = scmp.eq.s32.totalorder %s37, 1
      %p191 = por %p189, %p190
      %p192 = scmp.ne.s32.totalorder %s181, %s182
      %p193 = scmp.eq.s32.totalorder %s37, 0
      %p194 = por %p192, %p193
      %p195 = scmp.ne.s32.totalorder %s181, %s182
      %p196 = scmp.eq.s32.totalorder %s38, 1
      %p197 = por %p195, %p196
      %p199 = scmp.ne.s32.totalorder %s182, %s198
      %p200 = scmp.eq.s32.totalorder %s38, 0
      %p201 = por %p199, %p200
      %s202 = ssub.s32 %s32, %s39
      %p203 = scmp.eq.s32.totalorder %s202, 0
      %s205 = sadd.s32 %s204, 1
      %s206 = scalar_select %p203, %s204, %s205
      %p209 = pneg %p203
      %p210 = scmp.eq.s32.totalorder %s32, 1
      %p211 = por %p209, %p210
      %p212 = scmp.ne.s32.totalorder %s204, %s207
      %p213 = scmp.eq.s32.totalorder %s32, 0
      %p214 = por %p212, %p213
      %p215 = scmp.ne.s32.totalorder %s204, %s207
      %p216 = scmp.eq.s32.totalorder %s37, 1
      %p217 = por %p215, %p216
      %p218 = scmp.ne.s32.totalorder %s207, %s208
      %p219 = scmp.eq.s32.totalorder %s37, 0
      %p220 = por %p218, %p219
      %p221 = scmp.ne.s32.totalorder %s207, %s208
      %p222 = scmp.eq.s32.totalorder %s38, 1
      %p223 = por %p221, %p222
      %p225 = scmp.ne.s32.totalorder %s208, %s224
      %p226 = scmp.eq.s32.totalorder %s38, 0
      %p227 = por %p225, %p226
      %s228 = ssub.s32 %s32, %s39
      %p229 = scmp.eq.s32.totalorder %s228, 0
      %s231 = sadd.s32 %s230, 1
      %s232 = scalar_select %p229, %s230, %s231
      %p235 = pneg %p229
      %p236 = scmp.eq.s32.totalorder %s32, 1
      %p237 = por %p235, %p236
      %p238 = scmp.ne.s32.totalorder %s230, %s233
      %p239 = scmp.eq.s32.totalorder %s32, 0
      %p240 = por %p238, %p239
      %p241 = scmp.ne.s32.totalorder %s230, %s233
      %p242 = scmp.eq.s32.totalorder %s37, 1
      %p243 = por %p241, %p242
      %p244 = scmp.ne.s32.totalorder %s233, %s234
      %p245 = scmp.eq.s32.totalorder %s37, 0
      %p246 = por %p244, %p245
      %p247 = scmp.ne.s32.totalorder %s233, %s234
      %p248 = scmp.eq.s32.totalorder %s38, 1
      %p249 = por %p247, %p248
      %p251 = scmp.ne.s32.totalorder %s234, %s250
      %p252 = scmp.eq.s32.totalorder %s38, 0
      %p253 = por %p251, %p252
      %s254 = ssub.s32 %s32, %s39
      %p255 = scmp.eq.s32.totalorder %s254, 0
      %s257 = sadd.s32 %s256, 1
      %s258 = scalar_select %p255, %s256, %s257
      %p261 = pneg %p255
      %p262 = scmp.eq.s32.totalorder %s32, 1
      %p263 = por %p261, %p262
      %p264 = scmp.ne.s32.totalorder %s256, %s259
      %p265 = scmp.eq.s32.totalorder %s32, 0
      %p266 = por %p264, %p265
      %p267 = scmp.ne.s32.totalorder %s256, %s259
      %p268 = scmp.eq.s32.totalorder %s37, 1
      %p269 = por %p267, %p268
      %p270 = scmp.ne.s32.totalorder %s259, %s260
      %p271 = scmp.eq.s32.totalorder %s37, 0
      %p272 = por %p270, %p271
      %p273 = scmp.ne.s32.totalorder %s259, %s260
      %p274 = scmp.eq.s32.totalorder %s38, 1
      %p275 = por %p273, %p274
      %p277 = scmp.ne.s32.totalorder %s260, %s276
      %p278 = scmp.eq.s32.totalorder %s38, 0
      %p279 = por %p277, %p278
      %s280 = ssub.s32 %s32, %s39
      %p281 = scmp.eq.s32.totalorder %s280, 0
      %s283 = sadd.s32 %s282, 1
      %s284 = scalar_select %p281, %s282, %s283
      %p287 = pneg %p281
      %p288 = scmp.eq.s32.totalorder %s32, 1
      %p289 = por %p287, %p288
      %p290 = scmp.ne.s32.totalorder %s282, %s285
      %p291 = scmp.eq.s32.totalorder %s32, 0
      %p292 = por %p290, %p291
      %p293 = scmp.ne.s32.totalorder %s282, %s285
      %p294 = scmp.eq.s32.totalorder %s37, 1
      %p295 = por %p293, %p294
      %p296 = scmp.ne.s32.totalorder %s285, %s286
      %p297 = scmp.eq.s32.totalorder %s37, 0
      %p298 = por %p296, %p297
      %p299 = scmp.ne.s32.totalorder %s285, %s286
      %p300 = scmp.eq.s32.totalorder %s38, 1
      %p301 = por %p299, %p300
      %p303 = scmp.ne.s32.totalorder %s286, %s302
      %p304 = scmp.eq.s32.totalorder %s38, 0
      %p305 = por %p303, %p304
      %s306 = ssub.s32 %s32, %s39
      %p307 = scmp.eq.s32.totalorder %s306, 0
      %s309 = sadd.s32 %s308, 1
      %s310 = scalar_select %p307, %s308, %s309
      %p313 = pneg %p307
      %p314 = scmp.eq.s32.totalorder %s32, 1
      %p315 = por %p313, %p314
      %p316 = scmp.ne.s32.totalorder %s308, %s311
      %p317 = scmp.eq.s32.totalorder %s32, 0
      %p318 = por %p316, %p317
      %p319 = scmp.ne.s32.totalorder %s308, %s311
      %p320 = scmp.eq.s32.totalorder %s37, 1
      %p321 = por %p319, %p320
      %p322 = scmp.ne.s32.totalorder %s311, %s312
      %p323 = scmp.eq.s32.totalorder %s37, 0
      %p324 = por %p322, %p323
      %p325 = scmp.ne.s32.totalorder %s311, %s312
      %p326 = scmp.eq.s32.totalorder %s38, 1
      %p327 = por %p325, %p326
      %p329 = scmp.ne.s32.totalorder %s312, %s328
      %p330 = scmp.eq.s32.totalorder %s38, 0
      %p331 = por %p329, %p330
      %s332 = ssub.s32 %s32, %s39
      %p333 = scmp.eq.s32.totalorder %s332, 0
      %s335 = sadd.s32 %s334, 1
      %s336 = scalar_select %p333, %s334, %s335
      %p339 = pneg %p333
      %p340 = scmp.eq.s32.totalorder %s32, 1
      %p341 = por %p339, %p340
      %p342 = scmp.ne.s32.totalorder %s334, %s337
      %p343 = scmp.eq.s32.totalorder %s32, 0
      %p344 = por %p342, %p343
      %p345 = scmp.ne.s32.totalorder %s334, %s337
      %p346 = scmp.eq.s32.totalorder %s37, 1
      %p347 = por %p345, %p346
      %p348 = scmp.ne.s32.totalorder %s337, %s338
      %p349 = scmp.eq.s32.totalorder %s37, 0
      %p350 = por %p348, %p349
      %p351 = scmp.ne.s32.totalorder %s337, %s338
      %p352 = scmp.eq.s32.totalorder %s38, 1
      %p353 = por %p351, %p352
      %p355 = scmp.ne.s32.totalorder %s338, %s354
      %p356 = scmp.eq.s32.totalorder %s38, 0
      %p357 = por %p355, %p356
      %s358 = ssub.s32 %s32, %s39
      %p359 = scmp.eq.s32.totalorder %s358, 0
      %s361 = sadd.s32 %s360, 1
      %s362 = scalar_select %p359, %s360, %s361
      %p365 = pneg %p359
      %p366 = scmp.eq.s32.totalorder %s32, 1
      %p367 = por %p365, %p366
      %p368 = scmp.ne.s32.totalorder %s360, %s363
      %p369 = scmp.eq.s32.totalorder %s32, 0
      %p370 = por %p368, %p369
      %p371 = scmp.ne.s32.totalorder %s360, %s363
      %p372 = scmp.eq.s32.totalorder %s37, 1
      %p373 = por %p371, %p372
      %p374 = scmp.ne.s32.totalorder %s363, %s364
      %p375 = scmp.eq.s32.totalorder %s37, 0
      %p376 = por %p374, %p375
      %p377 = scmp.ne.s32.totalorder %s363, %s364
      %p378 = scmp.eq.s32.totalorder %s38, 1
      %p379 = por %p377, %p378
      %p381 = scmp.ne.s32.totalorder %s364, %s380
      %p382 = scmp.eq.s32.totalorder %s38, 0
      %p383 = por %p381, %p382
      %s384 = ssub.s32 %s32, %s39
      %p385 = scmp.eq.s32.totalorder %s384, 0
      %s387 = sadd.s32 %s386, 1
      %s388 = scalar_select %p385, %s386, %s387
      %p391 = pneg %p385
      %p392 = scmp.eq.s32.totalorder %s32, 1
      %p393 = por %p391, %p392
      %p394 = scmp.ne.s32.totalorder %s386, %s389
      %p395 = scmp.eq.s32.totalorder %s32, 0
      %p396 = por %p394, %p395
      %p397 = scmp.ne.s32.totalorder %s386, %s389
      %p398 = scmp.eq.s32.totalorder %s37, 1
      %p399 = por %p397, %p398
      %p400 = scmp.ne.s32.totalorder %s389, %s390
      %p401 = scmp.eq.s32.totalorder %s37, 0
      %p402 = por %p400, %p401
      %p403 = scmp.ne.s32.totalorder %s389, %s390
      %p404 = scmp.eq.s32.totalorder %s38, 1
      %p405 = por %p403, %p404
      %p407 = scmp.ne.s32.totalorder %s390, %s406
      %p408 = scmp.eq.s32.totalorder %s38, 0
      %p409 = por %p407, %p408
      %s410 = ssub.s32 %s32, %s39
      %p411 = scmp.eq.s32.totalorder %s410, 0
      %s413 = sadd.s32 %s412, 1
      %s414 = scalar_select %p411, %s412, %s413
      %p417 = pneg %p411
      %p418 = scmp.eq.s32.totalorder %s32, 1
      %p419 = por %p417, %p418
      %p420 = scmp.ne.s32.totalorder %s412, %s415
      %p421 = scmp.eq.s32.totalorder %s32, 0
      %p422 = por %p420, %p421
      %p423 = scmp.ne.s32.totalorder %s412, %s415
      %p424 = scmp.eq.s32.totalorder %s37, 1
      %p425 = por %p423, %p424
      %p426 = scmp.ne.s32.totalorder %s415, %s416
      %p427 = scmp.eq.s32.totalorder %s37, 0
      %p428 = por %p426, %p427
      %p429 = scmp.ne.s32.totalorder %s415, %s416
      %p430 = scmp.eq.s32.totalorder %s38, 1
      %p431 = por %p429, %p430
      %p433 = scmp.ne.s32.totalorder %s416, %s432
      %p434 = scmp.eq.s32.totalorder %s38, 0
      %p435 = por %p433, %p434
      %s437 = sadd.s32 %s436, 1
      %p440 = scmp.eq.s32.totalorder %s32, 1
      %p441 = scmp.ne.s32.totalorder %s436, %s438
      %p442 = scmp.eq.s32.totalorder %s32, 0
      %p443 = por %p441, %p442
      %p444 = scmp.ne.s32.totalorder %s436, %s438
      %p445 = scmp.eq.s32.totalorder %s37, 1
      %p446 = por %p444, %p445
      %p447 = scmp.ne.s32.totalorder %s438, %s439
      %p448 = scmp.eq.s32.totalorder %s37, 0
      %p449 = por %p447, %p448
      %p450 = scmp.ne.s32.totalorder %s438, %s439
      %p451 = scmp.eq.s32.totalorder %s38, 1
      %p452 = por %p450, %p451
      %p454 = scmp.ne.s32.totalorder %s439, %s453
      %p455 = scmp.eq.s32.totalorder %s38, 0
      %p456 = por %p454, %p455
      %s458 = sadd.s32 %s457, 1
      %p461 = scmp.eq.s32.totalorder %s32, 1
      %p462 = scmp.ne.s32.totalorder %s457, %s459
      %p463 = scmp.eq.s32.totalorder %s32, 0
      %p464 = por %p462, %p463
      %p465 = scmp.ne.s32.totalorder %s457, %s459
      %p466 = scmp.eq.s32.totalorder %s37, 1
      %p467 = por %p465, %p466
      %p468 = scmp.ne.s32.totalorder %s459, %s460
      %p469 = scmp.eq.s32.totalorder %s37, 0
      %p470 = por %p468, %p469
      %p471 = scmp.ne.s32.totalorder %s459, %s460
      %p472 = scmp.eq.s32.totalorder %s38, 1
      %p473 = por %p471, %p472
      %p475 = scmp.ne.s32.totalorder %s460, %s474
      %p476 = scmp.eq.s32.totalorder %s38, 0
      %p477 = por %p475, %p476
      %s479 = sadd.s32 %s478, 1
      %p482 = scmp.eq.s32.totalorder %s32, 1
      %p483 = scmp.ne.s32.totalorder %s478, %s480
      %p484 = scmp.eq.s32.totalorder %s32, 0
      %p485 = por %p483, %p484
      %p486 = scmp.ne.s32.totalorder %s478, %s480
      %p487 = scmp.eq.s32.totalorder %s37, 1
      %p488 = por %p486, %p487
      %p489 = scmp.ne.s32.totalorder %s480, %s481
      %p490 = scmp.eq.s32.totalorder %s37, 0
      %p491 = por %p489, %p490
      %p492 = scmp.ne.s32.totalorder %s480, %s481
      %p493 = scmp.eq.s32.totalorder %s38, 1
      %p494 = por %p492, %p493
      %p496 = scmp.ne.s32.totalorder %s481, %s495
      %p497 = scmp.eq.s32.totalorder %s38, 0
      %p498 = por %p496, %p497
      %s500 = sadd.s32 %s499, 1
      %p503 = scmp.eq.s32.totalorder %s32, 1
      %p504 = scmp.ne.s32.totalorder %s499, %s501
      %p505 = scmp.eq.s32.totalorder %s32, 0
      %p506 = por %p504, %p505
      %p507 = scmp.ne.s32.totalorder %s499, %s501
      %p508 = scmp.eq.s32.totalorder %s37, 1
      %p509 = por %p507, %p508
      %p510 = scmp.ne.s32.totalorder %s501, %s502
      %p511 = scmp.eq.s32.totalorder %s37, 0
      %p512 = por %p510, %p511
      %p513 = scmp.ne.s32.totalorder %s501, %s502
      %p514 = scmp.eq.s32.totalorder %s38, 1
      %p515 = por %p513, %p514
      %p517 = scmp.ne.s32.totalorder %s502, %s516
      %p518 = scmp.eq.s32.totalorder %s38, 0
      %p519 = por %p517, %p518
      %p520 = scmp.le.s32.totalorder 1, %s32
      %p521 = scmp.lt.s32.totalorder %s32, 3
      %p522 = pnand %p520, %p521
      %p523 = pneg %p522
      // Predicated region
      $region9: #{tpu_custom_call.1} parent=5 // pred_check
        _
      $region10: #{tpu_custom_call.1} parent=5 // pred_check_branch
        %525 = sbr.rel (%p522) target = $region12
      $region11: #{tpu_custom_call.1} parent=5 // pred_region
        %s526 = ssub.s32 %s32, 1
        // Predicated region
        $region13: #{tpu_custom_call.1} parent=11 // pred_check
          %p527 = pneg %p53
        $region14: #{tpu_custom_call.1} parent=11 // pred_check_branch
          %529 = sbr.rel (%p527) target = $region16
        $region15: #{tpu_custom_call.1} parent=11 // pred_region
          %s531 = ssub.s32 256, 256
          %532 = vsyncadd [#allocation6], %s531
          %s533 = sshll.u32 [#allocation5], 4
          %s534 = int_to_ptr.vmem [resolvable:$true] %s533
          %539 = dma.hbm_to_vmem [thread:$0]  %s0, 256, %s534, [#allocation6], 128, 128, 8
        $region16: #{tpu_custom_call.1} parent=11 // pred_fallthru
          _
        // Predicated region
        $region17: #{tpu_custom_call.1} parent=11 // pred_check
          %p540 = pneg %p74
        $region18: #{tpu_custom_call.1} parent=11 // pred_check_branch
          %542 = sbr.rel (%p540) target = $region20
        $region19: #{tpu_custom_call.1} parent=11 // pred_region
          %s544 = ssub.s32 16, 16
          %545 = vsyncadd [#allocation9], %s544
          %s547 = sshll.u32 [#allocation8], 4
          %s548 = int_to_ptr.vmem [resolvable:$true] %s547
          %550 = dma.hbm_to_vmem [thread:$0]  %s1, 16, %s548, [#allocation9]
        $region20: #{tpu_custom_call.1} parent=11 // pred_fallthru
          _
        // Predicated region
        $region21: #{tpu_custom_call.1} parent=11 // pred_check
          %p551 = pneg %p95
        $region22: #{tpu_custom_call.1} parent=11 // pred_check_branch
          %553 = sbr.rel (%p551) target = $region24
        $region23: #{tpu_custom_call.1} parent=11 // pred_region
          %s555 = ssub.s32 16, 16
          %556 = vsyncadd [#allocation9], %s555
          %s558 = sshll.u32 [#allocation10], 4
          %s559 = int_to_ptr.vmem [resolvable:$true] %s558
          %561 = dma.hbm_to_vmem [thread:$0]  %s2, 16, %s559, [#allocation9]
        $region24: #{tpu_custom_call.1} parent=11 // pred_fallthru
          _
        // Predicated region
        $region25: #{tpu_custom_call.1} parent=11 // pred_check
          %p562 = pneg %p116
        $region26: #{tpu_custom_call.1} parent=11 // pred_check_branch
          %564 = sbr.rel (%p562) target = $region28
        $region27: #{tpu_custom_call.1} parent=11 // pred_region
          _
        $region28: #{tpu_custom_call.1} parent=11 // pred_fallthru
          _
        // Predicated region
        $region29: #{tpu_custom_call.1} parent=11 // pred_check
          %p565 = pneg %p449
        $region30: #{tpu_custom_call.1} parent=11 // pred_check_branch
          %567 = sbr.rel (%p565) target = $region32
        $region31: #{tpu_custom_call.1} parent=11 // pred_region
          _
        $region32: #{tpu_custom_call.1} parent=11 // pred_fallthru
          _
        // Predicated region
        $region33: #{tpu_custom_call.1} parent=11 // pred_check
          %p568 = pneg %p470
        $region34: #{tpu_custom_call.1} parent=11 // pred_check_branch
          %570 = sbr.rel (%p568) target = $region36
        $region35: #{tpu_custom_call.1} parent=11 // pred_region
          _
        $region36: #{tpu_custom_call.1} parent=11 // pred_fallthru
          _
      $region12: #{tpu_custom_call.1} parent=5 // pred_fallthru
        _
      %p571 = scmp.lt.s32.totalorder %s32, 2
      // Predicated region
      $region37: #{tpu_custom_call.1} parent=5 // pred_check
        %p572 = pneg %p571
      $region38: #{tpu_custom_call.1} parent=5 // pred_check_branch
        %574 = sbr.rel (%p572) target = $region40
      $region39: #{tpu_custom_call.1} parent=5 // pred_region
        // Predicated region
        $region41: #{tpu_custom_call.1} parent=39 // pred_check
          %p575 = pneg %p136
        $region42: #{tpu_custom_call.1} parent=39 // pred_check_branch
          %577 = sbr.rel (%p575) target = $region44
        $region43: #{tpu_custom_call.1} parent=39 // pred_region
          %p578 = scmp.lt.s32.totalorder %s32, 1
          %s579 = scalar_select %p578, %s32, 1
          %s580 = smul.addr %s579, 4
          %s581 = smul.addr %s580, 8
          %s582 = scalar_lea.vmem %s4, %s581
        $region44: #{tpu_custom_call.1} parent=39 // pred_fallthru
          _
        // Predicated region
        $region45: #{tpu_custom_call.1} parent=39 // pred_check
          %p583 = pneg %p162
        $region46: #{tpu_custom_call.1} parent=39 // pred_check_branch
          %585 = sbr.rel (%p583) target = $region48
        $region47: #{tpu_custom_call.1} parent=39 // pred_region
          %p586 = scmp.lt.s32.totalorder %s32, 1
          %s587 = scalar_select %p586, %s32, 1
          %s588 = scalar_lea.vmem %s5, %s587
        $region48: #{tpu_custom_call.1} parent=39 // pred_fallthru
          _
        // Predicated region
        $region49: #{tpu_custom_call.1} parent=39 // pred_check
          %p589 = pneg %p188
        $region50: #{tpu_custom_call.1} parent=39 // pred_check_branch
          %591 = sbr.rel (%p589) target = $region52
        $region51: #{tpu_custom_call.1} parent=39 // pred_region
          %p592 = scmp.lt.s32.totalorder %s32, 1
          %s593 = scalar_select %p592, %s32, 1
          %s594 = smul.addr %s593, 4
          %s595 = smul.addr %s594, 8
          %s596 = scalar_lea.vmem %s6, %s595
        $region52: #{tpu_custom_call.1} parent=39 // pred_fallthru
          _
        // Predicated region
        $region53: #{tpu_custom_call.1} parent=39 // pred_check
          %p597 = pneg %p214
        $region54: #{tpu_custom_call.1} parent=39 // pred_check_branch
          %599 = sbr.rel (%p597) target = $region56
        $region55: #{tpu_custom_call.1} parent=39 // pred_region
          %p600 = scmp.lt.s32.totalorder %s32, 1
          %s601 = scalar_select %p600, %s32, 1
          %s602 = scalar_lea.vmem %s7, %s601
        $region56: #{tpu_custom_call.1} parent=39 // pred_fallthru
          _
        // Predicated region
        $region57: #{tpu_custom_call.1} parent=39 // pred_check
          %p603 = pneg %p240
        $region58: #{tpu_custom_call.1} parent=39 // pred_check_branch
          %605 = sbr.rel (%p603) target = $region60
        $region59: #{tpu_custom_call.1} parent=39 // pred_region
          %p606 = scmp.lt.s32.totalorder %s32, 1
          %s607 = scalar_select %p606, %s32, 1
          %s608 = smul.addr %s607, 4
          %s609 = smul.addr %s608, 8
          %s610 = scalar_lea.vmem %s8, %s609
        $region60: #{tpu_custom_call.1} parent=39 // pred_fallthru
          _
        // Predicated region
        $region61: #{tpu_custom_call.1} parent=39 // pred_check
          %p611 = pneg %p266
        $region62: #{tpu_custom_call.1} parent=39 // pred_check_branch
          %613 = sbr.rel (%p611) target = $region64
        $region63: #{tpu_custom_call.1} parent=39 // pred_region
          %p614 = scmp.lt.s32.totalorder %s32, 1
          %s615 = scalar_select %p614, %s32, 1
          %s616 = scalar_lea.vmem %s9, %s615
        $region64: #{tpu_custom_call.1} parent=39 // pred_fallthru
          _
        // Predicated region
        $region65: #{tpu_custom_call.1} parent=39 // pred_check
          %p617 = pneg %p292
        $region66: #{tpu_custom_call.1} parent=39 // pred_check_branch
          %619 = sbr.rel (%p617) target = $region68
        $region67: #{tpu_custom_call.1} parent=39 // pred_region
          %p620 = scmp.lt.s32.totalorder %s32, 1
          %s621 = scalar_select %p620, %s32, 1
          %s622 = smul.addr %s621, 8
          %s623 = smul.addr %s622, 8
          %s624 = scalar_lea.vmem %s10, %s623
        $region68: #{tpu_custom_call.1} parent=39 // pred_fallthru
          _
        // Predicated region
        $region69: #{tpu_custom_call.1} parent=39 // pred_check
          %p625 = pneg %p318
        $region70: #{tpu_custom_call.1} parent=39 // pred_check_branch
          %627 = sbr.rel (%p625) target = $region72
        $region71: #{tpu_custom_call.1} parent=39 // pred_region
          %p628 = scmp.lt.s32.totalorder %s32, 1
          %s629 = scalar_select %p628, %s32, 1
          %s630 = scalar_lea.vmem %s11, %s629
        $region72: #{tpu_custom_call.1} parent=39 // pred_fallthru
          _
        // Predicated region
        $region73: #{tpu_custom_call.1} parent=39 // pred_check
          %p631 = pneg %p344
        $region74: #{tpu_custom_call.1} parent=39 // pred_check_branch
          %633 = sbr.rel (%p631) target = $region76
        $region75: #{tpu_custom_call.1} parent=39 // pred_region
          %p634 = scmp.lt.s32.totalorder %s32, 1
          %s635 = scalar_select %p634, %s32, 1
          %s636 = scalar_lea.vmem %s12, %s635
        $region76: #{tpu_custom_call.1} parent=39 // pred_fallthru
          _
        // Predicated region
        $region77: #{tpu_custom_call.1} parent=39 // pred_check
          %p637 = pneg %p370
        $region78: #{tpu_custom_call.1} parent=39 // pred_check_branch
          %639 = sbr.rel (%p637) target = $region80
        $region79: #{tpu_custom_call.1} parent=39 // pred_region
          %p640 = scmp.lt.s32.totalorder %s32, 1
          %s641 = scalar_select %p640, %s32, 1
          %s642 = scalar_lea.vmem %s13, %s641
        $region80: #{tpu_custom_call.1} parent=39 // pred_fallthru
          _
        // Predicated region
        $region81: #{tpu_custom_call.1} parent=39 // pred_check
          %p643 = pneg %p396
        $region82: #{tpu_custom_call.1} parent=39 // pred_check_branch
          %645 = sbr.rel (%p643) target = $region84
        $region83: #{tpu_custom_call.1} parent=39 // pred_region
          %p646 = scmp.lt.s32.totalorder %s32, 1
          %s647 = scalar_select %p646, %s32, 1
          %s648 = scalar_lea.vmem %s14, %s647
        $region84: #{tpu_custom_call.1} parent=39 // pred_fallthru
          _
        // Predicated region
        $region85: #{tpu_custom_call.1} parent=39 // pred_check
          %p649 = pneg %p422
        $region86: #{tpu_custom_call.1} parent=39 // pred_check_branch
          %651 = sbr.rel (%p649) target = $region88
        $region87: #{tpu_custom_call.1} parent=39 // pred_region
          %p652 = scmp.lt.s32.totalorder %s32, 1
          %s653 = scalar_select %p652, %s32, 1
          %s654 = scalar_lea.vmem %s15, %s653
        $region88: #{tpu_custom_call.1} parent=39 // pred_fallthru
          _
      $region40: #{tpu_custom_call.1} parent=5 // pred_fallthru
        _
      %p655 = scmp.le.s32.totalorder 1, %s32
      %p656 = scmp.lt.s32.totalorder %s32, 3
      %p657 = pnand %p655, %p656
      %p658 = pneg %p657
      // Predicated region
      $region89: #{tpu_custom_call.1} parent=5 // pred_check
        _
      $region90: #{tpu_custom_call.1} parent=5 // pred_check_branch
        %660 = sbr.rel (%p657) target = $region92
      $region91: #{tpu_custom_call.1} parent=5 // pred_region
        %s661 = ssub.s32 %s32, 1
        // Predicated region
        $region93: #{tpu_custom_call.1} parent=91 // pred_check
          %p662 = pneg %p53
        $region94: #{tpu_custom_call.1} parent=91 // pred_check_branch
          %664 = sbr.rel (%p662) target = $region96
        $region95: #{tpu_custom_call.1} parent=91 // pred_region
          %665 = dma.done [#allocation6], 256
        $region96: #{tpu_custom_call.1} parent=91 // pred_fallthru
          _
        // Predicated region
        $region97: #{tpu_custom_call.1} parent=91 // pred_check
          %p666 = pneg %p74
        $region98: #{tpu_custom_call.1} parent=91 // pred_check_branch
          %668 = sbr.rel (%p666) target = $region100
        $region99: #{tpu_custom_call.1} parent=91 // pred_region
          %669 = dma.done [#allocation9], 16
        $region100: #{tpu_custom_call.1} parent=91 // pred_fallthru
          _
        // Predicated region
        $region101: #{tpu_custom_call.1} parent=91 // pred_check
          %p670 = pneg %p95
        $region102: #{tpu_custom_call.1} parent=91 // pred_check_branch
          %672 = sbr.rel (%p670) target = $region104
        $region103: #{tpu_custom_call.1} parent=91 // pred_region
          %673 = dma.done [#allocation9], 16
        $region104: #{tpu_custom_call.1} parent=91 // pred_fallthru
          _
        %p674 = pneg %p53
        %p675 = pneg %p50
        %p676 = pneg %p74
        %p677 = pneg %p71
        %p678 = pneg %p95
        %p679 = pneg %p92
        %p680 = pneg %p116
        %p681 = pneg %p113
        %p682 = scmp.lt.s32.totalorder %s37, 1
        %s683 = scalar_select %p682, %s37, 1
        %s684 = smul.addr %s683, 4
        %s685 = smul.addr %s684, 8
        %s686 = scalar_lea.vmem %s4, %s685
        %p687 = pneg %p142
        %p688 = pneg %p139
        %p689 = scmp.lt.s32.totalorder %s37, 1
        %s690 = scalar_select %p689, %s37, 1
        %s691 = scalar_lea.vmem %s5, %s690
        %p692 = pneg %p168
        %p693 = pneg %p165
        %p694 = scmp.lt.s32.totalorder %s37, 1
        %s695 = scalar_select %p694, %s37, 1
        %s696 = smul.addr %s695, 4
        %s697 = smul.addr %s696, 8
        %s698 = scalar_lea.vmem %s6, %s697
        %p699 = pneg %p194
        %p700 = pneg %p191
        %p701 = scmp.lt.s32.totalorder %s37, 1
        %s702 = scalar_select %p701, %s37, 1
        %s703 = scalar_lea.vmem %s7, %s702
        %p704 = pneg %p220
        %p705 = pneg %p217
        %p706 = scmp.lt.s32.totalorder %s37, 1
        %s707 = scalar_select %p706, %s37, 1
        %s708 = smul.addr %s707, 4
        %s709 = smul.addr %s708, 8
        %s710 = scalar_lea.vmem %s8, %s709
        %p711 = pneg %p246
        %p712 = pneg %p243
        %p713 = scmp.lt.s32.totalorder %s37, 1
        %s714 = scalar_select %p713, %s37, 1
        %s715 = scalar_lea.vmem %s9, %s714
        %p716 = pneg %p272
        %p717 = pneg %p269
        %p718 = scmp.lt.s32.totalorder %s37, 1
        %s719 = scalar_select %p718, %s37, 1
        %s720 = smul.addr %s719, 8
        %s721 = smul.addr %s720, 8
        %s722 = scalar_lea.vmem %s10, %s721
        %p723 = pneg %p298
        %p724 = pneg %p295
        %p725 = scmp.lt.s32.totalorder %s37, 1
        %s726 = scalar_select %p725, %s37, 1
        %s727 = scalar_lea.vmem %s11, %s726
        %p728 = pneg %p324
        %p729 = pneg %p321
        %p730 = scmp.lt.s32.totalorder %s37, 1
        %s731 = scalar_select %p730, %s37, 1
        %s732 = scalar_lea.vmem %s12, %s731
        %p733 = pneg %p350
        %p734 = pneg %p347
        %p735 = scmp.lt.s32.totalorder %s37, 1
        %s736 = scalar_select %p735, %s37, 1
        %s737 = scalar_lea.vmem %s13, %s736
        %p738 = pneg %p376
        %p739 = pneg %p373
        %p740 = scmp.lt.s32.totalorder %s37, 1
        %s741 = scalar_select %p740, %s37, 1
        %s742 = scalar_lea.vmem %s14, %s741
        %p743 = pneg %p402
        %p744 = pneg %p399
        %p745 = scmp.lt.s32.totalorder %s37, 1
        %s746 = scalar_select %p745, %s37, 1
        %s747 = scalar_lea.vmem %s15, %s746
        %p748 = pneg %p428
        %p749 = pneg %p425
        %p750 = pneg %p449
        %p751 = pneg %p446
        %p752 = pneg %p470
        %p753 = pneg %p467
        %p754 = pneg %p491
        %p755 = pneg %p488
        %p756 = pneg %p512
        %p757 = pneg %p509
        %p758 = scmp.lt.s32.totalorder %s37, 1
        %s759 = scalar_select %p758, %s37, 1
        %s760 = smul.addr %s759, 4
        %s761 = smul.addr %s760, 8
        %s762 = scalar_lea.vmem %s4, %s761
        %p763 = scmp.lt.s32.totalorder %s37, 1
        %s764 = scalar_select %p763, %s37, 1
        %s765 = scalar_lea.vmem %s5, %s764
        %p766 = scmp.lt.s32.totalorder %s37, 1
        %s767 = scalar_select %p766, %s37, 1
        %s768 = smul.addr %s767, 4
        %s769 = smul.addr %s768, 8
        %s770 = scalar_lea.vmem %s6, %s769
        %p771 = scmp.lt.s32.totalorder %s37, 1
        %s772 = scalar_select %p771, %s37, 1
        %s773 = scalar_lea.vmem %s7, %s772
        %p774 = scmp.lt.s32.totalorder %s37, 1
        %s775 = scalar_select %p774, %s37, 1
        %s776 = smul.addr %s775, 4
        %s777 = smul.addr %s776, 8
        %s778 = scalar_lea.vmem %s8, %s777
        %p779 = scmp.lt.s32.totalorder %s37, 1
        %s780 = scalar_select %p779, %s37, 1
        %s781 = scalar_lea.vmem %s9, %s780
        %p782 = scmp.lt.s32.totalorder %s37, 1
        %s783 = scalar_select %p782, %s37, 1
        %s784 = smul.addr %s783, 8
        %s785 = smul.addr %s784, 8
        %s786 = scalar_lea.vmem %s10, %s785
        %p787 = scmp.lt.s32.totalorder %s37, 1
        %s788 = scalar_select %p787, %s37, 1
        %s789 = scalar_lea.vmem %s11, %s788
        %p790 = scmp.lt.s32.totalorder %s37, 1
        %s791 = scalar_select %p790, %s37, 1
        %s792 = scalar_lea.vmem %s12, %s791
        %p793 = scmp.lt.s32.totalorder %s37, 1
        %s794 = scalar_select %p793, %s37, 1
        %s795 = scalar_lea.vmem %s13, %s794
        %p796 = scmp.lt.s32.totalorder %s37, 1
        %s797 = scalar_select %p796, %s37, 1
        %s798 = scalar_lea.vmem %s14, %s797
        %p799 = scmp.lt.s32.totalorder %s37, 1
        %s800 = scalar_select %p799, %s37, 1
        %s801 = scalar_lea.vmem %s15, %s800
        %p802 = scmp.eq.s32.totalorder %s37, 0
        // Predicated region
        $region105: #{tpu_custom_call.1} parent=91 // pred_check
          %p803 = pneg %p802
        $region106: #{tpu_custom_call.1} parent=91 // pred_check_branch
          %805 = sbr.rel (%p803) target = $region108
        $region107: #{tpu_custom_call.1} parent=91 // pred_region
          %v806 = vld [vmem:[#allocation5] sm:$0xff]
          %v807 = vld [vmem:[#allocation5 + $0x8] sm:$0xff]
          %v808 = vld [vmem:[#allocation8] sm:$0x1]
          %v809 = vld [vmem:[#allocation10] sm:$0x1]
          %vm810 = vcmask 261120
          %v811 = vsel %vm810, %v806, 0.0
          %812 = vadd.xlane.f32.xlu0 %v811
          %v813 = vpop.xlane.xlu0 %812
          %v814 = vsel %vm810, %v807, 0.0
          %815 = vadd.xlane.f32.xlu0 %v814
          %v816 = vpop.xlane.xlu0 %815
          %v817 = vrcp.pop 32.0
          %v818 = vmul.f32 %v813, %v817
          %v819 = vmul.f32 %v816, %v817
          %v820 = vsub.f32 %v806, %v818
          %v821 = vsub.f32 %v807, %v819
          %v822 = vmul.f32 %v820, %v820
          %v823 = vmul.f32 %v821, %v821
          %v824 = vsel %vm810, %v822, 0.0
          %825 = vadd.xlane.f32.xlu0 %v824
          %v826 = vpop.xlane.xlu0 %825
          %v827 = vsel %vm810, %v823, 0.0
          %828 = vadd.xlane.f32.xlu0 %v827
          %v829 = vpop.xlane.xlu0 %828
          %v830 = vmul.f32 %v826, %v817
          %v831 = vmul.f32 %v829, %v817
          %v832 = vadd.f32 %v830, 1e-05
          %v833 = vadd.f32 %v831, 1e-05
          %v834 = vrsqrt.pop %v832
          %v835 = vrsqrt.pop %v833
          %v836 = vmul.f32 %v820, %v834
          %v837 = vmul.f32 %v821, %v835
          %v839 = vlaneseq
          %v840 = vshrl.u32 %v839, 7
          %v841 = vsub.s32 0, %v840
          %v842 = vrot.slane %v808, %v841
          %v844 = vmul.f32 %v836, %v842
          %v845 = vmul.f32 %v837, %v842
          %v847 = vlaneseq
          %v848 = vshrl.u32 %v847, 7
          %v849 = vsub.s32 0, %v848
          %v850 = vrot.slane %v809, %v849
          %v852 = vadd.f32 %v844, %v850
          %v853 = vadd.f32 %v845, %v850
          %854 = vst.msk [vmem:[#allocation2] sm:$0xff] %vm810, %v852
          %855 = vst.msk [vmem:[#allocation2 + $0x8] sm:$0xff] %vm810, %v853
        $region108: #{tpu_custom_call.1} parent=91 // pred_fallthru
          _
        %v856 = vld [vmem:[#allocation2] sm:$0xff]
        %v857 = vld [vmem:[#allocation2 + $0x8] sm:$0xff]
        %v858 = vld [vmem:[%s762] sm:$0xff]
        %v859 = vld [vmem:[%s762 + $0x8] sm:$0xff]
        %v860 = vld [vmem:[%s762 + $0x10] sm:$0xff]
        %v861 = vld [vmem:[%s762 + $0x18] sm:$0xff]
        %v862 = vld [vmem:[%s765] sm:$0x1]
        %v864 = vlaneseq
        %v865 = vshrl.u32 %v864, 7
        %v866 = vsub.s32 0, %v865
        %v867 = vrot.slane %v862, %v866
        %vm869 = vcmask 261120
        %v871 = vsel %vm869, %v856, 0
        %v874 = vsel %vm869, %v857, 0
        %876 = vmatprep.subr.mxu0 0.0
        %877 = vmatpush1.msra.mxu0 %v858
        %878 = vmatprep.subr.mxu0 0.0
        %879 = vmatpush1.msra.mxu0 %v859
        %880 = vmatprep.subr.mxu0 0.0
        %881 = vmatpush1.msra.mxu0 %v860
        %882 = vmatprep.subr.mxu0 0.0
        %883 = vmatpush1.msra.mxu0 %v861
        %884 = vmatprep.subr.mxu0 0.0
        %885 = vmatpush1.msra.mxu0 0.0
        %886 = vmatprep.subr.mxu0 0.0
        %887 = vmatpush1.msra.mxu0 0.0
        %888 = vmatprep.subr.mxu0 0.0
        %889 = vmatpush1.msra.mxu0 0.0
        %890 = vmatprep.subr.mxu0 0.0
        %891 = vmatpush1.msra.mxu0 0.0
        %892 = vmatprep.subr.mxu0 0.0
        %893 = vmatpush1.msra.mxu0 0.0
        %894 = vmatprep.subr.mxu0 0.0
        %895 = vmatpush1.msra.mxu0 0.0
        %896 = vmatprep.subr.mxu0 0.0
        %897 = vmatpush1.msra.mxu0 0.0
        %898 = vmatprep.subr.mxu0 0.0
        %899 = vmatpush1.msra.mxu0 0.0
        %900 = vmatprep.subr.mxu0 0.0
        %901 = vmatpush1.msra.mxu0 0.0
        %902 = vmatprep.subr.mxu0 0.0
        %903 = vmatpush1.msra.mxu0 0.0
        %904 = vmatprep.subr.mxu0 0.0
        %905 = vmatpush1.msra.mxu0 0.0
        %906 = vmatprep.subr.mxu0 0.0
        %907 = vmatpush1.msra.mxu0 0.0
        %908 = vmatprep.subr.mxu0 0.0
        %909 = vmatpush1.msra.mxu0 0.0
        %910 = vmatprep.subr.mxu0 0.0
        %911 = vmatpush1.msra.mxu0 0.0
        %912 = vmatprep.subr.mxu0 0.0
        %913 = vmatpush1.msra.mxu0 0.0
        %914 = vmatprep.subr.mxu0 0.0
        %915 = vmatpush1.msra.mxu0 0.0
        %916 = vmatprep.subr.mxu0 0.0
        %917 = vmatpush1.msra.mxu0 0.0
        %918 = vmatprep.subr.mxu0 0.0
        %919 = vmatpush1.msra.mxu0 0.0
        %920 = vmatprep.subr.mxu0 0.0
        %921 = vmatpush1.msra.mxu0 0.0
        %922 = vmatprep.subr.mxu0 0.0
        %923 = vmatpush1.msra.mxu0 0.0
        %924 = vmatprep.subr.mxu0 0.0
        %925 = vmatpush1.msra.mxu0 0.0
        %926 = vmatprep.subr.mxu0 0.0
        %927 = vmatpush1.msra.mxu0 0.0
        %928 = vmatprep.subr.mxu0 0.0
        %929 = vmatpush1.msra.mxu0 0.0
        %930 = vmatprep.subr.mxu0 0.0
        %931 = vmatpush1.msra.mxu0 0.0
        %932 = vmatprep.subr.mxu0 0.0
        %933 = vmatpush1.msra.mxu0 0.0
        %934 = vmatprep.subr.mxu0 0.0
        %935 = vmatpush1.msra.mxu0 0.0
        %936 = vmatprep.subr.mxu0 0.0
        %937 = vmatpush1.msra.mxu0 0.0
        %938 = vmatprep.subr.mxu0 0.0
        %939 = vmatpush1.msra.mxu0 0.0
        %940 = vmatprep.mubr.f32.mxu0 0.0
        %941 = vmatmul.mubr.f32.gmra.mrb[0].mxu0 %v871
        %v942 = vpop.f32.mrb[0].mxu0
        %v943 = vadd.f32 %v867, %v942
        %v944 = vpop.f32.mrb[0].mxu0
        %945 = vmatprep.mubr.f32.mxu0 0.0
        %946 = vmatmul.mubr.f32.gmra.mrb[0].mxu0 %v874
        %v947 = vpop.f32.mrb[0].mxu0
        %v948 = vadd.f32 %v867, %v947
        %v949 = vpop.f32.mrb[0].mxu0
        %950 = vdwg.mxu0
        %v951 = vmul.f32 %v943, 0.35355338
        %v952 = vmul.f32 %v948, 0.35355338
        %v953 = vld [vmem:[%s3] sm:$0x1]
        %v954 = vld [vmem:[%s3 + $0x1] sm:$0x1]
        %v957 = vlaneseq
        %v958 = vshrl.u32 %v957, 7
        %v959 = vsub.s32 0, %v958
        %v960 = vrot.slane %v953, %v959
        %v961 = vlaneseq
        %v962 = vshrl.u32 %v961, 7
        %v963 = vsub.s32 0, %v962
        %v964 = vrot.slane %v954, %v963
        %968 = vrot.lane.b32.xlu0 %v943, 96
        %v969 = vpop.permute.xlu0 %968
        %vm970 = vcmask 64512
        %v972 = vsel %vm970, %v951, 0
        %v974 = vsel %vm970, %v969, 0
        %976 = vmatprep.subr.mxu0 0.0
        %977 = vmatpush1.xpose.msra.mxu0 %v974
        %978 = vmatprep.subr.mxu0 0.0
        %979 = vmatpush1.xpose.msra.mxu0 0.0
        %980 = vmatprep.subr.mxu0 0.0
        %981 = vmatpush1.xpose.msra.mxu0 0.0
        %982 = vmatprep.subr.mxu0 0.0
        %983 = vmatpush1.xpose.msra.mxu0 0.0
        %984 = vmatprep.subr.mxu0 0.0
        %985 = vmatpush1.xpose.msra.mxu0 0.0
        %986 = vmatprep.subr.mxu0 0.0
        %987 = vmatpush1.xpose.msra.mxu0 0.0
        %988 = vmatprep.subr.mxu0 0.0
        %989 = vmatpush1.xpose.msra.mxu0 0.0
        %990 = vmatprep.subr.mxu0 0.0
        %991 = vmatpush1.xpose.msra.mxu0 0.0
        %992 = vmatprep.subr.mxu0 0.0
        %993 = vmatpush1.xpose.msra.mxu0 0.0
        %994 = vmatprep.subr.mxu0 0.0
        %995 = vmatpush1.xpose.msra.mxu0 0.0
        %996 = vmatprep.subr.mxu0 0.0
        %997 = vmatpush1.xpose.msra.mxu0 0.0
        %998 = vmatprep.subr.mxu0 0.0
        %999 = vmatpush1.xpose.msra.mxu0 0.0
        %1000 = vmatprep.subr.mxu0 0.0
        %1001 = vmatpush1.xpose.msra.mxu0 0.0
        %1002 = vmatprep.subr.mxu0 0.0
        %1003 = vmatpush1.xpose.msra.mxu0 0.0
        %1004 = vmatprep.subr.mxu0 0.0
        %1005 = vmatpush1.xpose.msra.mxu0 0.0
        %1006 = vmatprep.subr.mxu0 0.0
        %1007 = vmatpush1.xpose.msra.mxu0 0.0
        %1008 = vmatprep.subr.mxu0 0.0
        %1009 = vmatpush1.xpose.msra.mxu0 0.0
        %1010 = vmatprep.subr.mxu0 0.0
        %1011 = vmatpush1.xpose.msra.mxu0 0.0
        %1012 = vmatprep.subr.mxu0 0.0
        %1013 = vmatpush1.xpose.msra.mxu0 0.0
        %1014 = vmatprep.subr.mxu0 0.0
        %1015 = vmatpush1.xpose.msra.mxu0 0.0
        %1016 = vmatprep.subr.mxu0 0.0
        %1017 = vmatpush1.xpose.msra.mxu0 0.0
        %1018 = vmatprep.subr.mxu0 0.0
        %1019 = vmatpush1.xpose.msra.mxu0 0.0
        %1020 = vmatprep.subr.mxu0 0.0
        %1021 = vmatpush1.xpose.msra.mxu0 0.0
        %1022 = vmatprep.subr.mxu0 0.0
        %1023 = vmatpush1.xpose.msra.mxu0 0.0
        %1024 = vmatprep.subr.mxu0 0.0
        %1025 = vmatpush1.xpose.msra.mxu0 0.0
        %1026 = vmatprep.subr.mxu0 0.0
        %1027 = vmatpush1.xpose.msra.mxu0 0.0
        %1028 = vmatprep.subr.mxu0 0.0
        %1029 = vmatpush1.xpose.msra.mxu0 0.0
        %1030 = vmatprep.subr.mxu0 0.0
        %1031 = vmatpush1.xpose.msra.mxu0 0.0
        %1032 = vmatprep.subr.mxu0 0.0
        %1033 = vmatpush1.xpose.msra.mxu0 0.0
        %1034 = vmatprep.subr.mxu0 0.0
        %1035 = vmatpush1.xpose.msra.mxu0 0.0
        %1036 = vmatprep.subr.mxu0 0.0
        %1037 = vmatpush1.xpose.msra.mxu0 0.0
        %1038 = vmatprep.subr.mxu0 0.0
        %1039 = vmatpush1.xpose.msra.mxu0 0.0
        %1040 = vmatprep.mubr.f32.mxu0 0.0
        %1041 = vmatmul.mubr.f32.gmra.mrb[0].mxu0 %v972
        %v1042 = vpop.f32.mrb[0].mxu0
        %v1043 = vadd.f32 %v960, %v1042
        %v1044 = vpop.f32.mrb[0].mxu0
        %1045 = vdwg.mxu0
        %1047 = vrot.lane.b32.xlu0 %v948, 96
        %v1048 = vpop.permute.xlu0 %1047
        %v1050 = vsel %vm970, %v952, 0
        %v1052 = vsel %vm970, %v1048, 0
        %1054 = vmatprep.subr.mxu0 0.0
        %1055 = vmatpush1.xpose.msra.mxu0 %v1052
        %1056 = vmatprep.subr.mxu0 0.0
        %1057 = vmatpush1.xpose.msra.mxu0 0.0
        %1058 = vmatprep.subr.mxu0 0.0
        %1059 = vmatpush1.xpose.msra.mxu0 0.0
        %1060 = vmatprep.subr.mxu0 0.0
        %1061 = vmatpush1.xpose.msra.mxu0 0.0
        %1062 = vmatprep.subr.mxu0 0.0
        %1063 = vmatpush1.xpose.msra.mxu0 0.0
        %1064 = vmatprep.subr.mxu0 0.0
        %1065 = vmatpush1.xpose.msra.mxu0 0.0
        %1066 = vmatprep.subr.mxu0 0.0
        %1067 = vmatpush1.xpose.msra.mxu0 0.0
        %1068 = vmatprep.subr.mxu0 0.0
        %1069 = vmatpush1.xpose.msra.mxu0 0.0
        %1070 = vmatprep.subr.mxu0 0.0
        %1071 = vmatpush1.xpose.msra.mxu0 0.0
        %1072 = vmatprep.subr.mxu0 0.0
        %1073 = vmatpush1.xpose.msra.mxu0 0.0
        %1074 = vmatprep.subr.mxu0 0.0
        %1075 = vmatpush1.xpose.msra.mxu0 0.0
        %1076 = vmatprep.subr.mxu0 0.0
        %1077 = vmatpush1.xpose.msra.mxu0 0.0
        %1078 = vmatprep.subr.mxu0 0.0
        %1079 = vmatpush1.xpose.msra.mxu0 0.0
        %1080 = vmatprep.subr.mxu0 0.0
        %1081 = vmatpush1.xpose.msra.mxu0 0.0
        %1082 = vmatprep.subr.mxu0 0.0
        %1083 = vmatpush1.xpose.msra.mxu0 0.0
        %1084 = vmatprep.subr.mxu0 0.0
        %1085 = vmatpush1.xpose.msra.mxu0 0.0
        %1086 = vmatprep.subr.mxu0 0.0
        %1087 = vmatpush1.xpose.msra.mxu0 0.0
        %1088 = vmatprep.subr.mxu0 0.0
        %1089 = vmatpush1.xpose.msra.mxu0 0.0
        %1090 = vmatprep.subr.mxu0 0.0
        %1091 = vmatpush1.xpose.msra.mxu0 0.0
        %1092 = vmatprep.subr.mxu0 0.0
        %1093 = vmatpush1.xpose.msra.mxu0 0.0
        %1094 = vmatprep.subr.mxu0 0.0
        %1095 = vmatpush1.xpose.msra.mxu0 0.0
        %1096 = vmatprep.subr.mxu0 0.0
        %1097 = vmatpush1.xpose.msra.mxu0 0.0
        %1098 = vmatprep.subr.mxu0 0.0
        %1099 = vmatpush1.xpose.msra.mxu0 0.0
        %1100 = vmatprep.subr.mxu0 0.0
        %1101 = vmatpush1.xpose.msra.mxu0 0.0
        %1102 = vmatprep.subr.mxu0 0.0
        %1103 = vmatpush1.xpose.msra.mxu0 0.0
        %1104 = vmatprep.subr.mxu0 0.0
        %1105 = vmatpush1.xpose.msra.mxu0 0.0
        %1106 = vmatprep.subr.mxu0 0.0
        %1107 = vmatpush1.xpose.msra.mxu0 0.0
        %1108 = vmatprep.subr.mxu0 0.0
        %1109 = vmatpush1.xpose.msra.mxu0 0.0
        %1110 = vmatprep.subr.mxu0 0.0
        %1111 = vmatpush1.xpose.msra.mxu0 0.0
        %1112 = vmatprep.subr.mxu0 0.0
        %1113 = vmatpush1.xpose.msra.mxu0 0.0
        %1114 = vmatprep.subr.mxu0 0.0
        %1115 = vmatpush1.xpose.msra.mxu0 0.0
        %1116 = vmatprep.subr.mxu0 0.0
        %1117 = vmatpush1.xpose.msra.mxu0 0.0
        %1118 = vmatprep.mubr.f32.mxu0 0.0
        %1119 = vmatmul.mubr.f32.gmra.mrb[0].mxu0 %v1050
        %v1120 = vpop.f32.mrb[0].mxu0
        %v1121 = vadd.f32 %v964, %v1120
        %v1122 = vpop.f32.mrb[0].mxu0
        %1123 = vdwg.mxu0
        %v1124 = vsel %vm970, %v1043, -inf
        %1125 = vmax.xlane.f32.xlu0 %v1124
        %v1126 = vpop.xlane.xlu0 %1125
        %v1127 = vsel %vm970, %v1121, -inf
        %1128 = vmax.xlane.f32.xlu0 %v1127
        %v1129 = vpop.xlane.xlu0 %1128
        %v1130 = vsub.f32 %v1043, %v1126
        %v1131 = vsub.f32 %v1121, %v1129
        %v1132 = vmul.f32 %v1130, 1.442695
        %v1133 = vpow.pop %v1132
        %v1134 = vmul.f32 %v1131, 1.442695
        %v1135 = vpow.pop %v1134
        %v1136 = vsel %vm970, %v1133, 0.0
        %1137 = vadd.xlane.f32.xlu0 %v1136
        %v1138 = vpop.xlane.xlu0 %1137
        %v1139 = vsel %vm970, %v1135, 0.0
        %1140 = vadd.xlane.f32.xlu0 %v1139
        %v1141 = vpop.xlane.xlu0 %1140
        %v1142 = vrcp.pop %v1138
        %v1143 = vrcp.pop %v1141
        %v1144 = vmul.f32 %v1133, %v1142
        %v1145 = vmul.f32 %v1135, %v1143
        %1146 = vrot.lane.b32.xlu0 %v943, 64
        %v1147 = vpop.permute.xlu0 %1146
        %v1150 = vsel %vm970, %v1144, 0
        %1152 = vmatprep.subr.mxu0 0.0
        %1153 = vmatpush1.msra.mxu0 %v1147
        %1154 = vmatprep.subr.mxu0 0.0
        %1155 = vmatpush1.msra.mxu0 0.0
        %1156 = vmatprep.subr.mxu0 0.0
        %1157 = vmatpush1.msra.mxu0 0.0
        %1158 = vmatprep.subr.mxu0 0.0
        %1159 = vmatpush1.msra.mxu0 0.0
        %1160 = vmatprep.subr.mxu0 0.0
        %1161 = vmatpush1.msra.mxu0 0.0
        %1162 = vmatprep.subr.mxu0 0.0
        %1163 = vmatpush1.msra.mxu0 0.0
        %1164 = vmatprep.subr.mxu0 0.0
        %1165 = vmatpush1.msra.mxu0 0.0
        %1166 = vmatprep.subr.mxu0 0.0
        %1167 = vmatpush1.msra.mxu0 0.0
        %1168 = vmatprep.subr.mxu0 0.0
        %1169 = vmatpush1.msra.mxu0 0.0
        %1170 = vmatprep.subr.mxu0 0.0
        %1171 = vmatpush1.msra.mxu0 0.0
        %1172 = vmatprep.subr.mxu0 0.0
        %1173 = vmatpush1.msra.mxu0 0.0
        %1174 = vmatprep.subr.mxu0 0.0
        %1175 = vmatpush1.msra.mxu0 0.0
        %1176 = vmatprep.subr.mxu0 0.0
        %1177 = vmatpush1.msra.mxu0 0.0
        %1178 = vmatprep.subr.mxu0 0.0
        %1179 = vmatpush1.msra.mxu0 0.0
        %1180 = vmatprep.subr.mxu0 0.0
        %1181 = vmatpush1.msra.mxu0 0.0
        %1182 = vmatprep.subr.mxu0 0.0
        %1183 = vmatpush1.msra.mxu0 0.0
        %1184 = vmatprep.subr.mxu0 0.0
        %1185 = vmatpush1.msra.mxu0 0.0
        %1186 = vmatprep.subr.mxu0 0.0
        %1187 = vmatpush1.msra.mxu0 0.0
        %1188 = vmatprep.subr.mxu0 0.0
        %1189 = vmatpush1.msra.mxu0 0.0
        %1190 = vmatprep.subr.mxu0 0.0
        %1191 = vmatpush1.msra.mxu0 0.0
        %1192 = vmatprep.subr.mxu0 0.0
        %1193 = vmatpush1.msra.mxu0 0.0
        %1194 = vmatprep.subr.mxu0 0.0
        %1195 = vmatpush1.msra.mxu0 0.0
        %1196 = vmatprep.subr.mxu0 0.0
        %1197 = vmatpush1.msra.mxu0 0.0
        %1198 = vmatprep.subr.mxu0 0.0
        %1199 = vmatpush1.msra.mxu0 0.0
        %1200 = vmatprep.subr.mxu0 0.0
        %1201 = vmatpush1.msra.mxu0 0.0
        %1202 = vmatprep.subr.mxu0 0.0
        %1203 = vmatpush1.msra.mxu0 0.0
        %1204 = vmatprep.subr.mxu0 0.0
        %1205 = vmatpush1.msra.mxu0 0.0
        %1206 = vmatprep.subr.mxu0 0.0
        %1207 = vmatpush1.msra.mxu0 0.0
        %1208 = vmatprep.subr.mxu0 0.0
        %1209 = vmatpush1.msra.mxu0 0.0
        %1210 = vmatprep.subr.mxu0 0.0
        %1211 = vmatpush1.msra.mxu0 0.0
        %1212 = vmatprep.subr.mxu0 0.0
        %1213 = vmatpush1.msra.mxu0 0.0
        %1214 = vmatprep.subr.mxu0 0.0
        %1215 = vmatpush1.msra.mxu0 0.0
        %1216 = vmatprep.mubr.f32.mxu0 0.0
        %1217 = vmatmul.mubr.f32.gmra.mrb[0].mxu0 %v1150
        %v1218 = vpop.f32.mrb[0].mxu0
        %v1219 = vadd.f32 0.0, %v1218
        %v1220 = vpop.f32.mrb[0].mxu0
        %1221 = vdwg.mxu0
        %1222 = vrot.lane.b32.xlu0 %v948, 64
        %v1223 = vpop.permute.xlu0 %1222
        %v1226 = vsel %vm970, %v1145, 0
        %1228 = vmatprep.subr.mxu0 0.0
        %1229 = vmatpush1.msra.mxu0 %v1223
        %1230 = vmatprep.subr.mxu0 0.0
        %1231 = vmatpush1.msra.mxu0 0.0
        %1232 = vmatprep.subr.mxu0 0.0
        %1233 = vmatpush1.msra.mxu0 0.0
        %1234 = vmatprep.subr.mxu0 0.0
        %1235 = vmatpush1.msra.mxu0 0.0
        %1236 = vmatprep.subr.mxu0 0.0
        %1237 = vmatpush1.msra.mxu0 0.0
        %1238 = vmatprep.subr.mxu0 0.0
        %1239 = vmatpush1.msra.mxu0 0.0
        %1240 = vmatprep.subr.mxu0 0.0
        %1241 = vmatpush1.msra.mxu0 0.0
        %1242 = vmatprep.subr.mxu0 0.0
        %1243 = vmatpush1.msra.mxu0 0.0
        %1244 = vmatprep.subr.mxu0 0.0
        %1245 = vmatpush1.msra.mxu0 0.0
        %1246 = vmatprep.subr.mxu0 0.0
        %1247 = vmatpush1.msra.mxu0 0.0
        %1248 = vmatprep.subr.mxu0 0.0
        %1249 = vmatpush1.msra.mxu0 0.0
        %1250 = vmatprep.subr.mxu0 0.0
        %1251 = vmatpush1.msra.mxu0 0.0
        %1252 = vmatprep.subr.mxu0 0.0
        %1253 = vmatpush1.msra.mxu0 0.0
        %1254 = vmatprep.subr.mxu0 0.0
        %1255 = vmatpush1.msra.mxu0 0.0
        %1256 = vmatprep.subr.mxu0 0.0
        %1257 = vmatpush1.msra.mxu0 0.0
        %1258 = vmatprep.subr.mxu0 0.0
        %1259 = vmatpush1.msra.mxu0 0.0
        %1260 = vmatprep.subr.mxu0 0.0
        %1261 = vmatpush1.msra.mxu0 0.0
        %1262 = vmatprep.subr.mxu0 0.0
        %1263 = vmatpush1.msra.mxu0 0.0
        %1264 = vmatprep.subr.mxu0 0.0
        %1265 = vmatpush1.msra.mxu0 0.0
        %1266 = vmatprep.subr.mxu0 0.0
        %1267 = vmatpush1.msra.mxu0 0.0
        %1268 = vmatprep.subr.mxu0 0.0
        %1269 = vmatpush1.msra.mxu0 0.0
        %1270 = vmatprep.subr.mxu0 0.0
        %1271 = vmatpush1.msra.mxu0 0.0
        %1272 = vmatprep.subr.mxu0 0.0
        %1273 = vmatpush1.msra.mxu0 0.0
        %1274 = vmatprep.subr.mxu0 0.0
        %1275 = vmatpush1.msra.mxu0 0.0
        %1276 = vmatprep.subr.mxu0 0.0
        %1277 = vmatpush1.msra.mxu0 0.0
        %1278 = vmatprep.subr.mxu0 0.0
        %1279 = vmatpush1.msra.mxu0 0.0
        %1280 = vmatprep.subr.mxu0 0.0
        %1281 = vmatpush1.msra.mxu0 0.0
        %1282 = vmatprep.subr.mxu0 0.0
        %1283 = vmatpush1.msra.mxu0 0.0
        %1284 = vmatprep.subr.mxu0 0.0
        %1285 = vmatpush1.msra.mxu0 0.0
        %1286 = vmatprep.subr.mxu0 0.0
        %1287 = vmatpush1.msra.mxu0 0.0
        %1288 = vmatprep.subr.mxu0 0.0
        %1289 = vmatpush1.msra.mxu0 0.0
        %1290 = vmatprep.subr.mxu0 0.0
        %1291 = vmatpush1.msra.mxu0 0.0
        %1292 = vmatprep.mubr.f32.mxu0 0.0
        %1293 = vmatmul.mubr.f32.gmra.mrb[0].mxu0 %v1226
        %v1294 = vpop.f32.mrb[0].mxu0
        %v1295 = vadd.f32 0.0, %v1294
        %v1296 = vpop.f32.mrb[0].mxu0
        %1297 = vdwg.mxu0
        %1298 = vst.msk [vmem:[#allocation3] sm:$0xff] %vm970, %v1219
        %1299 = vst.msk [vmem:[#allocation3 + $0x8] sm:$0xff] %vm970, %v1295
        %1300 = vrot.lane.b32.xlu0 %v951, 120
        %v1301 = vpop.permute.xlu0 %1300
        %1302 = vrot.lane.b32.xlu0 %v943, 88
        %v1303 = vpop.permute.xlu0 %1302
        %v1304 = vsel %vm970, %v1301, 0
        %v1306 = vsel %vm970, %v1303, 0
        %1308 = vmatprep.subr.mxu0 0.0
        %1309 = vmatpush1.xpose.msra.mxu0 %v1306
        %1310 = vmatprep.subr.mxu0 0.0
        %1311 = vmatpush1.xpose.msra.mxu0 0.0
        %1312 = vmatprep.subr.mxu0 0.0
        %1313 = vmatpush1.xpose.msra.mxu0 0.0
        %1314 = vmatprep.subr.mxu0 0.0
        %1315 = vmatpush1.xpose.msra.mxu0 0.0
        %1316 = vmatprep.subr.mxu0 0.0
        %1317 = vmatpush1.xpose.msra.mxu0 0.0
        %1318 = vmatprep.subr.mxu0 0.0
        %1319 = vmatpush1.xpose.msra.mxu0 0.0
        %1320 = vmatprep.subr.mxu0 0.0
        %1321 = vmatpush1.xpose.msra.mxu0 0.0
        %1322 = vmatprep.subr.mxu0 0.0
        %1323 = vmatpush1.xpose.msra.mxu0 0.0
        %1324 = vmatprep.subr.mxu0 0.0
        %1325 = vmatpush1.xpose.msra.mxu0 0.0
        %1326 = vmatprep.subr.mxu0 0.0
        %1327 = vmatpush1.xpose.msra.mxu0 0.0
        %1328 = vmatprep.subr.mxu0 0.0
        %1329 = vmatpush1.xpose.msra.mxu0 0.0
        %1330 = vmatprep.subr.mxu0 0.0
        %1331 = vmatpush1.xpose.msra.mxu0 0.0
        %1332 = vmatprep.subr.mxu0 0.0
        %1333 = vmatpush1.xpose.msra.mxu0 0.0
        %1334 = vmatprep.subr.mxu0 0.0
        %1335 = vmatpush1.xpose.msra.mxu0 0.0
        %1336 = vmatprep.subr.mxu0 0.0
        %1337 = vmatpush1.xpose.msra.mxu0 0.0
        %1338 = vmatprep.subr.mxu0 0.0
        %1339 = vmatpush1.xpose.msra.mxu0 0.0
        %1340 = vmatprep.subr.mxu0 0.0
        %1341 = vmatpush1.xpose.msra.mxu0 0.0
        %1342 = vmatprep.subr.mxu0 0.0
        %1343 = vmatpush1.xpose.msra.mxu0 0.0
        %1344 = vmatprep.subr.mxu0 0.0
        %1345 = vmatpush1.xpose.msra.mxu0 0.0
        %1346 = vmatprep.subr.mxu0 0.0
        %1347 = vmatpush1.xpose.msra.mxu0 0.0
        %1348 = vmatprep.subr.mxu0 0.0
        %1349 = vmatpush1.xpose.msra.mxu0 0.0
        %1350 = vmatprep.subr.mxu0 0.0
        %1351 = vmatpush1.xpose.msra.mxu0 0.0
        %1352 = vmatprep.subr.mxu0 0.0
        %1353 = vmatpush1.xpose.msra.mxu0 0.0
        %1354 = vmatprep.subr.mxu0 0.0
        %1355 = vmatpush1.xpose.msra.mxu0 0.0
        %1356 = vmatprep.subr.mxu0 0.0
        %1357 = vmatpush1.xpose.msra.mxu0 0.0
        %1358 = vmatprep.subr.mxu0 0.0
        %1359 = vmatpush1.xpose.msra.mxu0 0.0
        %1360 = vmatprep.subr.mxu0 0.0
        %1361 = vmatpush1.xpose.msra.mxu0 0.0
        %1362 = vmatprep.subr.mxu0 0.0
        %1363 = vmatpush1.xpose.msra.mxu0 0.0
        %1364 = vmatprep.subr.mxu0 0.0
        %1365 = vmatpush1.xpose.msra.mxu0 0.0
        %1366 = vmatprep.subr.mxu0 0.0
        %1367 = vmatpush1.xpose.msra.mxu0 0.0
        %1368 = vmatprep.subr.mxu0 0.0
        %1369 = vmatpush1.xpose.msra.mxu0 0.0
        %1370 = vmatprep.subr.mxu0 0.0
        %1371 = vmatpush1.xpose.msra.mxu0 0.0
        %1372 = vmatprep.mubr.f32.mxu0 0.0
        %1373 = vmatmul.mubr.f32.gmra.mrb[0].mxu0 %v1304
        %v1374 = vpop.f32.mrb[0].mxu0
        %v1375 = vadd.f32 %v960, %v1374
        %v1376 = vpop.f32.mrb[0].mxu0
        %1377 = vdwg.mxu0
        %1378 = vrot.lane.b32.xlu0 %v952, 120
        %v1379 = vpop.permute.xlu0 %1378
        %1380 = vrot.lane.b32.xlu0 %v948, 88
        %v1381 = vpop.permute.xlu0 %1380
        %v1382 = vsel %vm970, %v1379, 0
        %v1384 = vsel %vm970, %v1381, 0
        %1386 = vmatprep.subr.mxu0 0.0
        %1387 = vmatpush1.xpose.msra.mxu0 %v1384
        %1388 = vmatprep.subr.mxu0 0.0
        %1389 = vmatpush1.xpose.msra.mxu0 0.0
        %1390 = vmatprep.subr.mxu0 0.0
        %1391 = vmatpush1.xpose.msra.mxu0 0.0
        %1392 = vmatprep.subr.mxu0 0.0
        %1393 = vmatpush1.xpose.msra.mxu0 0.0
        %1394 = vmatprep.subr.mxu0 0.0
        %1395 = vmatpush1.xpose.msra.mxu0 0.0
        %1396 = vmatprep.subr.mxu0 0.0
        %1397 = vmatpush1.xpose.msra.mxu0 0.0
        %1398 = vmatprep.subr.mxu0 0.0
        %1399 = vmatpush1.xpose.msra.mxu0 0.0
        %1400 = vmatprep.subr.mxu0 0.0
        %1401 = vmatpush1.xpose.msra.mxu0 0.0
        %1402 = vmatprep.subr.mxu0 0.0
        %1403 = vmatpush1.xpose.msra.mxu0 0.0
        %1404 = vmatprep.subr.mxu0 0.0
        %1405 = vmatpush1.xpose.msra.mxu0 0.0
        %1406 = vmatprep.subr.mxu0 0.0
        %1407 = vmatpush1.xpose.msra.mxu0 0.0
        %1408 = vmatprep.subr.mxu0 0.0
        %1409 = vmatpush1.xpose.msra.mxu0 0.0
        %1410 = vmatprep.subr.mxu0 0.0
        %1411 = vmatpush1.xpose.msra.mxu0 0.0
        %1412 = vmatprep.subr.mxu0 0.0
        %1413 = vmatpush1.xpose.msra.mxu0 0.0
        %1414 = vmatprep.subr.mxu0 0.0
        %1415 = vmatpush1.xpose.msra.mxu0 0.0
        %1416 = vmatprep.subr.mxu0 0.0
        %1417 = vmatpush1.xpose.msra.mxu0 0.0
        %1418 = vmatprep.subr.mxu0 0.0
        %1419 = vmatpush1.xpose.msra.mxu0 0.0
        %1420 = vmatprep.subr.mxu0 0.0
        %1421 = vmatpush1.xpose.msra.mxu0 0.0
        %1422 = vmatprep.subr.mxu0 0.0
        %1423 = vmatpush1.xpose.msra.mxu0 0.0
        %1424 = vmatprep.subr.mxu0 0.0
        %1425 = vmatpush1.xpose.msra.mxu0 0.0
        %1426 = vmatprep.subr.mxu0 0.0
        %1427 = vmatpush1.xpose.msra.mxu0 0.0
        %1428 = vmatprep.subr.mxu0 0.0
        %1429 = vmatpush1.xpose.msra.mxu0 0.0
        %1430 = vmatprep.subr.mxu0 0.0
        %1431 = vmatpush1.xpose.msra.mxu0 0.0
        %1432 = vmatprep.subr.mxu0 0.0
        %1433 = vmatpush1.xpose.msra.mxu0 0.0
        %1434 = vmatprep.subr.mxu0 0.0
        %1435 = vmatpush1.xpose.msra.mxu0 0.0
        %1436 = vmatprep.subr.mxu0 0.0
        %1437 = vmatpush1.xpose.msra.mxu0 0.0
        %1438 = vmatprep.subr.mxu0 0.0
        %1439 = vmatpush1.xpose.msra.mxu0 0.0
        %1440 = vmatprep.subr.mxu0 0.0
        %1441 = vmatpush1.xpose.msra.mxu0 0.0
        %1442 = vmatprep.subr.mxu0 0.0
        %1443 = vmatpush1.xpose.msra.mxu0 0.0
        %1444 = vmatprep.subr.mxu0 0.0
        %1445 = vmatpush1.xpose.msra.mxu0 0.0
        %1446 = vmatprep.subr.mxu0 0.0
        %1447 = vmatpush1.xpose.msra.mxu0 0.0
        %1448 = vmatprep.subr.mxu0 0.0
        %1449 = vmatpush1.xpose.msra.mxu0 0.0
        %1450 = vmatprep.mubr.f32.mxu0 0.0
        %1451 = vmatmul.mubr.f32.gmra.mrb[0].mxu0 %v1382
        %v1452 = vpop.f32.mrb[0].mxu0
        %v1453 = vadd.f32 %v964, %v1452
        %v1454 = vpop.f32.mrb[0].mxu0
        %1455 = vdwg.mxu0
        %v1456 = vsel %vm970, %v1375, -inf
        %1457 = vmax.xlane.f32.xlu0 %v1456
        %v1458 = vpop.xlane.xlu0 %1457
        %v1459 = vsel %vm970, %v1453, -inf
        %1460 = vmax.xlane.f32.xlu0 %v1459
        %v1461 = vpop.xlane.xlu0 %1460
        %v1462 = vsub.f32 %v1375, %v1458
        %v1463 = vsub.f32 %v1453, %v1461
        %v1464 = vmul.f32 %v1462, 1.442695
        %v1465 = vpow.pop %v1464
        %v1466 = vmul.f32 %v1463, 1.442695
        %v1467 = vpow.pop %v1466
        %v1468 = vsel %vm970, %v1465, 0.0
        %1469 = vadd.xlane.f32.xlu0 %v1468
        %v1470 = vpop.xlane.xlu0 %1469
        %v1471 = vsel %vm970, %v1467, 0.0
        %1472 = vadd.xlane.f32.xlu0 %v1471
        %v1473 = vpop.xlane.xlu0 %1472
        %v1474 = vrcp.pop %v1470
        %v1475 = vrcp.pop %v1473
        %v1476 = vmul.f32 %v1465, %v1474
        %v1477 = vmul.f32 %v1467, %v1475
        %1478 = vrot.lane.b32.xlu0 %v943, 56
        %v1479 = vpop.permute.xlu0 %1478
        %v1482 = vsel %vm970, %v1476, 0
        %1484 = vmatprep.subr.mxu0 0.0
        %1485 = vmatpush1.msra.mxu0 %v1479
        %1486 = vmatprep.subr.mxu0 0.0
        %1487 = vmatpush1.msra.mxu0 0.0
        %1488 = vmatprep.subr.mxu0 0.0
        %1489 = vmatpush1.msra.mxu0 0.0
        %1490 = vmatprep.subr.mxu0 0.0
        %1491 = vmatpush1.msra.mxu0 0.0
        %1492 = vmatprep.subr.mxu0 0.0
        %1493 = vmatpush1.msra.mxu0 0.0
        %1494 = vmatprep.subr.mxu0 0.0
        %1495 = vmatpush1.msra.mxu0 0.0
        %1496 = vmatprep.subr.mxu0 0.0
        %1497 = vmatpush1.msra.mxu0 0.0
        %1498 = vmatprep.subr.mxu0 0.0
        %1499 = vmatpush1.msra.mxu0 0.0
        %1500 = vmatprep.subr.mxu0 0.0
        %1501 = vmatpush1.msra.mxu0 0.0
        %1502 = vmatprep.subr.mxu0 0.0
        %1503 = vmatpush1.msra.mxu0 0.0
        %1504 = vmatprep.subr.mxu0 0.0
        %1505 = vmatpush1.msra.mxu0 0.0
        %1506 = vmatprep.subr.mxu0 0.0
        %1507 = vmatpush1.msra.mxu0 0.0
        %1508 = vmatprep.subr.mxu0 0.0
        %1509 = vmatpush1.msra.mxu0 0.0
        %1510 = vmatprep.subr.mxu0 0.0
        %1511 = vmatpush1.msra.mxu0 0.0
        %1512 = vmatprep.subr.mxu0 0.0
        %1513 = vmatpush1.msra.mxu0 0.0
        %1514 = vmatprep.subr.mxu0 0.0
        %1515 = vmatpush1.msra.mxu0 0.0
        %1516 = vmatprep.subr.mxu0 0.0
        %1517 = vmatpush1.msra.mxu0 0.0
        %1518 = vmatprep.subr.mxu0 0.0
        %1519 = vmatpush1.msra.mxu0 0.0
        %1520 = vmatprep.subr.mxu0 0.0
        %1521 = vmatpush1.msra.mxu0 0.0
        %1522 = vmatprep.subr.mxu0 0.0
        %1523 = vmatpush1.msra.mxu0 0.0
        %1524 = vmatprep.subr.mxu0 0.0
        %1525 = vmatpush1.msra.mxu0 0.0
        %1526 = vmatprep.subr.mxu0 0.0
        %1527 = vmatpush1.msra.mxu0 0.0
        %1528 = vmatprep.subr.mxu0 0.0
        %1529 = vmatpush1.msra.mxu0 0.0
        %1530 = vmatprep.subr.mxu0 0.0
        %1531 = vmatpush1.msra.mxu0 0.0
        %1532 = vmatprep.subr.mxu0 0.0
        %1533 = vmatpush1.msra.mxu0 0.0
        %1534 = vmatprep.subr.mxu0 0.0
        %1535 = vmatpush1.msra.mxu0 0.0
        %1536 = vmatprep.subr.mxu0 0.0
        %1537 = vmatpush1.msra.mxu0 0.0
        %1538 = vmatprep.subr.mxu0 0.0
        %1539 = vmatpush1.msra.mxu0 0.0
        %1540 = vmatprep.subr.mxu0 0.0
        %1541 = vmatpush1.msra.mxu0 0.0
        %1542 = vmatprep.subr.mxu0 0.0
        %1543 = vmatpush1.msra.mxu0 0.0
        %1544 = vmatprep.subr.mxu0 0.0
        %1545 = vmatpush1.msra.mxu0 0.0
        %1546 = vmatprep.subr.mxu0 0.0
        %1547 = vmatpush1.msra.mxu0 0.0
        %1548 = vmatprep.mubr.f32.mxu0 0.0
        %1549 = vmatmul.mubr.f32.gmra.mrb[0].mxu0 %v1482
        %v1550 = vpop.f32.mrb[0].mxu0
        %v1551 = vadd.f32 0.0, %v1550
        %v1552 = vpop.f32.mrb[0].mxu0
        %1553 = vdwg.mxu0
        %1554 = vrot.lane.b32.xlu0 %v948, 56
        %v1555 = vpop.permute.xlu0 %1554
        %v1558 = vsel %vm970, %v1477, 0
        %1560 = vmatprep.subr.mxu0 0.0
        %1561 = vmatpush1.msra.mxu0 %v1555
        %1562 = vmatprep.subr.mxu0 0.0
        %1563 = vmatpush1.msra.mxu0 0.0
        %1564 = vmatprep.subr.mxu0 0.0
        %1565 = vmatpush1.msra.mxu0 0.0
        %1566 = vmatprep.subr.mxu0 0.0
        %1567 = vmatpush1.msra.mxu0 0.0
        %1568 = vmatprep.subr.mxu0 0.0
        %1569 = vmatpush1.msra.mxu0 0.0
        %1570 = vmatprep.subr.mxu0 0.0
        %1571 = vmatpush1.msra.mxu0 0.0
        %1572 = vmatprep.subr.mxu0 0.0
        %1573 = vmatpush1.msra.mxu0 0.0
        %1574 = vmatprep.subr.mxu0 0.0
        %1575 = vmatpush1.msra.mxu0 0.0
        %1576 = vmatprep.subr.mxu0 0.0
        %1577 = vmatpush1.msra.mxu0 0.0
        %1578 = vmatprep.subr.mxu0 0.0
        %1579 = vmatpush1.msra.mxu0 0.0
        %1580 = vmatprep.subr.mxu0 0.0
        %1581 = vmatpush1.msra.mxu0 0.0
        %1582 = vmatprep.subr.mxu0 0.0
        %1583 = vmatpush1.msra.mxu0 0.0
        %1584 = vmatprep.subr.mxu0 0.0
        %1585 = vmatpush1.msra.mxu0 0.0
        %1586 = vmatprep.subr.mxu0 0.0
        %1587 = vmatpush1.msra.mxu0 0.0
        %1588 = vmatprep.subr.mxu0 0.0
        %1589 = vmatpush1.msra.mxu0 0.0
        %1590 = vmatprep.subr.mxu0 0.0
        %1591 = vmatpush1.msra.mxu0 0.0
        %1592 = vmatprep.subr.mxu0 0.0
        %1593 = vmatpush1.msra.mxu0 0.0
        %1594 = vmatprep.subr.mxu0 0.0
        %1595 = vmatpush1.msra.mxu0 0.0
        %1596 = vmatprep.subr.mxu0 0.0
        %1597 = vmatpush1.msra.mxu0 0.0
        %1598 = vmatprep.subr.mxu0 0.0
        %1599 = vmatpush1.msra.mxu0 0.0
        %1600 = vmatprep.subr.mxu0 0.0
        %1601 = vmatpush1.msra.mxu0 0.0
        %1602 = vmatprep.subr.mxu0 0.0
        %1603 = vmatpush1.msra.mxu0 0.0
        %1604 = vmatprep.subr.mxu0 0.0
        %1605 = vmatpush1.msra.mxu0 0.0
        %1606 = vmatprep.subr.mxu0 0.0
        %1607 = vmatpush1.msra.mxu0 0.0
        %1608 = vmatprep.subr.mxu0 0.0
        %1609 = vmatpush1.msra.mxu0 0.0
        %1610 = vmatprep.subr.mxu0 0.0
        %1611 = vmatpush1.msra.mxu0 0.0
        %1612 = vmatprep.subr.mxu0 0.0
        %1613 = vmatpush1.msra.mxu0 0.0
        %1614 = vmatprep.subr.mxu0 0.0
        %1615 = vmatpush1.msra.mxu0 0.0
        %1616 = vmatprep.subr.mxu0 0.0
        %1617 = vmatpush1.msra.mxu0 0.0
        %1618 = vmatprep.subr.mxu0 0.0
        %1619 = vmatpush1.msra.mxu0 0.0
        %1620 = vmatprep.subr.mxu0 0.0
        %1621 = vmatpush1.msra.mxu0 0.0
        %1622 = vmatprep.subr.mxu0 0.0
        %1623 = vmatpush1.msra.mxu0 0.0
        %1624 = vmatprep.mubr.f32.mxu0 0.0
        %1625 = vmatmul.mubr.f32.gmra.mrb[0].mxu0 %v1558
        %v1626 = vpop.f32.mrb[0].mxu0
        %v1627 = vadd.f32 0.0, %v1626
        %v1628 = vpop.f32.mrb[0].mxu0
        %1629 = vdwg.mxu0
        %1632 = vrot.lane.b32.xlu0 %v1551, 8
        %v1633 = vpop.permute.xlu0 %1632
        %1634 = vrot.lane.b32.xlu0 %v1627, 8
        %v1635 = vpop.permute.xlu0 %1634
        %vm1638 = vcmask 130112
        %1639 = vst.msk [vmem:[#allocation3] sm:$0xff] %vm1638, %v1633
        %1640 = vst.msk [vmem:[#allocation3 + $0x8] sm:$0xff] %vm1638, %v1635
        %1641 = vrot.lane.b32.xlu0 %v951, 112
        %v1642 = vpop.permute.xlu0 %1641
        %1643 = vrot.lane.b32.xlu0 %v943, 80
        %v1644 = vpop.permute.xlu0 %1643
        %v1645 = vsel %vm970, %v1642, 0
        %v1647 = vsel %vm970, %v1644, 0
        %1649 = vmatprep.subr.mxu0 0.0
        %1650 = vmatpush1.xpose.msra.mxu0 %v1647
        %1651 = vmatprep.subr.mxu0 0.0
        %1652 = vmatpush1.xpose.msra.mxu0 0.0
        %1653 = vmatprep.subr.mxu0 0.0
        %1654 = vmatpush1.xpose.msra.mxu0 0.0
        %1655 = vmatprep.subr.mxu0 0.0
        %1656 = vmatpush1.xpose.msra.mxu0 0.0
        %1657 = vmatprep.subr.mxu0 0.0
        %1658 = vmatpush1.xpose.msra.mxu0 0.0
        %1659 = vmatprep.subr.mxu0 0.0
        %1660 = vmatpush1.xpose.msra.mxu0 0.0
        %1661 = vmatprep.subr.mxu0 0.0
        %1662 = vmatpush1.xpose.msra.mxu0 0.0
        %1663 = vmatprep.subr.mxu0 0.0
        %1664 = vmatpush1.xpose.msra.mxu0 0.0
        %1665 = vmatprep.subr.mxu0 0.0
        %1666 = vmatpush1.xpose.msra.mxu0 0.0
        %1667 = vmatprep.subr.mxu0 0.0
        %1668 = vmatpush1.xpose.msra.mxu0 0.0
        %1669 = vmatprep.subr.mxu0 0.0
        %1670 = vmatpush1.xpose.msra.mxu0 0.0
        %1671 = vmatprep.subr.mxu0 0.0
        %1672 = vmatpush1.xpose.msra.mxu0 0.0
        %1673 = vmatprep.subr.mxu0 0.0
        %1674 = vmatpush1.xpose.msra.mxu0 0.0
        %1675 = vmatprep.subr.mxu0 0.0
        %1676 = vmatpush1.xpose.msra.mxu0 0.0
        %1677 = vmatprep.subr.mxu0 0.0
        %1678 = vmatpush1.xpose.msra.mxu0 0.0
        %1679 = vmatprep.subr.mxu0 0.0
        %1680 = vmatpush1.xpose.msra.mxu0 0.0
        %1681 = vmatprep.subr.mxu0 0.0
        %1682 = vmatpush1.xpose.msra.mxu0 0.0
        %1683 = vmatprep.subr.mxu0 0.0
        %1684 = vmatpush1.xpose.msra.mxu0 0.0
        %1685 = vmatprep.subr.mxu0 0.0
        %1686 = vmatpush1.xpose.msra.mxu0 0.0
        %1687 = vmatprep.subr.mxu0 0.0
        %1688 = vmatpush1.xpose.msra.mxu0 0.0
        %1689 = vmatprep.subr.mxu0 0.0
        %1690 = vmatpush1.xpose.msra.mxu0 0.0
        %1691 = vmatprep.subr.mxu0 0.0
        %1692 = vmatpush1.xpose.msra.mxu0 0.0
        %1693 = vmatprep.subr.mxu0 0.0
        %1694 = vmatpush1.xpose.msra.mxu0 0.0
        %1695 = vmatprep.subr.mxu0 0.0
        %1696 = vmatpush1.xpose.msra.mxu0 0.0
        %1697 = vmatprep.subr.mxu0 0.0
        %1698 = vmatpush1.xpose.msra.mxu0 0.0
        %1699 = vmatprep.subr.mxu0 0.0
        %1700 = vmatpush1.xpose.msra.mxu0 0.0
        %1701 = vmatprep.subr.mxu0 0.0
        %1702 = vmatpush1.xpose.msra.mxu0 0.0
        %1703 = vmatprep.subr.mxu0 0.0
        %1704 = vmatpush1.xpose.msra.mxu0 0.0
        %1705 = vmatprep.subr.mxu0 0.0
        %1706 = vmatpush1.xpose.msra.mxu0 0.0
        %1707 = vmatprep.subr.mxu0 0.0
        %1708 = vmatpush1.xpose.msra.mxu0 0.0
        %1709 = vmatprep.subr.mxu0 0.0
        %1710 = vmatpush1.xpose.msra.mxu0 0.0
        %1711 = vmatprep.subr.mxu0 0.0
        %1712 = vmatpush1.xpose.msra.mxu0 0.0
        %1713 = vmatprep.mubr.f32.mxu0 0.0
        %1714 = vmatmul.mubr.f32.gmra.mrb[0].mxu0 %v1645
        %v1715 = vpop.f32.mrb[0].mxu0
        %v1716 = vadd.f32 %v960, %v1715
        %v1717 = vpop.f32.mrb[0].mxu0
        %1718 = vdwg.mxu0
        %1719 = vrot.lane.b32.xlu0 %v952, 112
        %v1720 = vpop.permute.xlu0 %1719
        %1721 = vrot.lane.b32.xlu0 %v948, 80
        %v1722 = vpop.permute.xlu0 %1721
        %v1723 = vsel %vm970, %v1720, 0
        %v1725 = vsel %vm970, %v1722, 0
        %1727 = vmatprep.subr.mxu0 0.0
        %1728 = vmatpush1.xpose.msra.mxu0 %v1725
        %1729 = vmatprep.subr.mxu0 0.0
        %1730 = vmatpush1.xpose.msra.mxu0 0.0
        %1731 = vmatprep.subr.mxu0 0.0
        %1732 = vmatpush1.xpose.msra.mxu0 0.0
        %1733 = vmatprep.subr.mxu0 0.0
        %1734 = vmatpush1.xpose.msra.mxu0 0.0
        %1735 = vmatprep.subr.mxu0 0.0
        %1736 = vmatpush1.xpose.msra.mxu0 0.0
        %1737 = vmatprep.subr.mxu0 0.0
        %1738 = vmatpush1.xpose.msra.mxu0 0.0
        %1739 = vmatprep.subr.mxu0 0.0
        %1740 = vmatpush1.xpose.msra.mxu0 0.0
        %1741 = vmatprep.subr.mxu0 0.0
        %1742 = vmatpush1.xpose.msra.mxu0 0.0
        %1743 = vmatprep.subr.mxu0 0.0
        %1744 = vmatpush1.xpose.msra.mxu0 0.0
        %1745 = vmatprep.subr.mxu0 0.0
        %1746 = vmatpush1.xpose.msra.mxu0 0.0
        %1747 = vmatprep.subr.mxu0 0.0
        %1748 = vmatpush1.xpose.msra.mxu0 0.0
        %1749 = vmatprep.subr.mxu0 0.0
        %1750 = vmatpush1.xpose.msra.mxu0 0.0
        %1751 = vmatprep.subr.mxu0 0.0
        %1752 = vmatpush1.xpose.msra.mxu0 0.0
        %1753 = vmatprep.subr.mxu0 0.0
        %1754 = vmatpush1.xpose.msra.mxu0 0.0
        %1755 = vmatprep.subr.mxu0 0.0
        %1756 = vmatpush1.xpose.msra.mxu0 0.0
        %1757 = vmatprep.subr.mxu0 0.0
        %1758 = vmatpush1.xpose.msra.mxu0 0.0
        %1759 = vmatprep.subr.mxu0 0.0
        %1760 = vmatpush1.xpose.msra.mxu0 0.0
        %1761 = vmatprep.subr.mxu0 0.0
        %1762 = vmatpush1.xpose.msra.mxu0 0.0
        %1763 = vmatprep.subr.mxu0 0.0
        %1764 = vmatpush1.xpose.msra.mxu0 0.0
        %1765 = vmatprep.subr.mxu0 0.0
        %1766 = vmatpush1.xpose.msra.mxu0 0.0
        %1767 = vmatprep.subr.mxu0 0.0
        %1768 = vmatpush1.xpose.msra.mxu0 0.0
        %1769 = vmatprep.subr.mxu0 0.0
        %1770 = vmatpush1.xpose.msra.mxu0 0.0
        %1771 = vmatprep.subr.mxu0 0.0
        %1772 = vmatpush1.xpose.msra.mxu0 0.0
        %1773 = vmatprep.subr.mxu0 0.0
        %1774 = vmatpush1.xpose.msra.mxu0 0.0
        %1775 = vmatprep.subr.mxu0 0.0
        %1776 = vmatpush1.xpose.msra.mxu0 0.0
        %1777 = vmatprep.subr.mxu0 0.0
        %1778 = vmatpush1.xpose.msra.mxu0 0.0
        %1779 = vmatprep.subr.mxu0 0.0
        %1780 = vmatpush1.xpose.msra.mxu0 0.0
        %1781 = vmatprep.subr.mxu0 0.0
        %1782 = vmatpush1.xpose.msra.mxu0 0.0
        %1783 = vmatprep.subr.mxu0 0.0
        %1784 = vmatpush1.xpose.msra.mxu0 0.0
        %1785 = vmatprep.subr.mxu0 0.0
        %1786 = vmatpush1.xpose.msra.mxu0 0.0
        %1787 = vmatprep.subr.mxu0 0.0
        %1788 = vmatpush1.xpose.msra.mxu0 0.0
        %1789 = vmatprep.subr.mxu0 0.0
        %1790 = vmatpush1.xpose.msra.mxu0 0.0
        %1791 = vmatprep.mubr.f32.mxu0 0.0
        %1792 = vmatmul.mubr.f32.gmra.mrb[0].mxu0 %v1723
        %v1793 = vpop.f32.mrb[0].mxu0
        %v1794 = vadd.f32 %v964, %v1793
        %v1795 = vpop.f32.mrb[0].mxu0
        %1796 = vdwg.mxu0
        %v1797 = vsel %vm970, %v1716, -inf
        %1798 = vmax.xlane.f32.xlu0 %v1797
        %v1799 = vpop.xlane.xlu0 %1798
        %v1800 = vsel %vm970, %v1794, -inf
        %1801 = vmax.xlane.f32.xlu0 %v1800
        %v1802 = vpop.xlane.xlu0 %1801
        %v1803 = vsub.f32 %v1716, %v1799
        %v1804 = vsub.f32 %v1794, %v1802
        %v1805 = vmul.f32 %v1803, 1.442695
        %v1806 = vpow.pop %v1805
        %v1807 = vmul.f32 %v1804, 1.442695
        %v1808 = vpow.pop %v1807
        %v1809 = vsel %vm970, %v1806, 0.0
        %1810 = vadd.xlane.f32.xlu0 %v1809
        %v1811 = vpop.xlane.xlu0 %1810
        %v1812 = vsel %vm970, %v1808, 0.0
        %1813 = vadd.xlane.f32.xlu0 %v1812
        %v1814 = vpop.xlane.xlu0 %1813
        %v1815 = vrcp.pop %v1811
        %v1816 = vrcp.pop %v1814
        %v1817 = vmul.f32 %v1806, %v1815
        %v1818 = vmul.f32 %v1808, %v1816
        %1819 = vrot.lane.b32.xlu0 %v943, 48
        %v1820 = vpop.permute.xlu0 %1819
        %v1823 = vsel %vm970, %v1817, 0
        %1825 = vmatprep.subr.mxu0 0.0
        %1826 = vmatpush1.msra.mxu0 %v1820
        %1827 = vmatprep.subr.mxu0 0.0
        %1828 = vmatpush1.msra.mxu0 0.0
        %1829 = vmatprep.subr.mxu0 0.0
        %1830 = vmatpush1.msra.mxu0 0.0
        %1831 = vmatprep.subr.mxu0 0.0
        %1832 = vmatpush1.msra.mxu0 0.0
        %1833 = vmatprep.subr.mxu0 0.0
        %1834 = vmatpush1.msra.mxu0 0.0
        %1835 = vmatprep.subr.mxu0 0.0
        %1836 = vmatpush1.msra.mxu0 0.0
        %1837 = vmatprep.subr.mxu0 0.0
        %1838 = vmatpush1.msra.mxu0 0.0
        %1839 = vmatprep.subr.mxu0 0.0
        %1840 = vmatpush1.msra.mxu0 0.0
        %1841 = vmatprep.subr.mxu0 0.0
        %1842 = vmatpush1.msra.mxu0 0.0
        %1843 = vmatprep.subr.mxu0 0.0
        %1844 = vmatpush1.msra.mxu0 0.0
        %1845 = vmatprep.subr.mxu0 0.0
        %1846 = vmatpush1.msra.mxu0 0.0
        %1847 = vmatprep.subr.mxu0 0.0
        %1848 = vmatpush1.msra.mxu0 0.0
        %1849 = vmatprep.subr.mxu0 0.0
        %1850 = vmatpush1.msra.mxu0 0.0
        %1851 = vmatprep.subr.mxu0 0.0
        %1852 = vmatpush1.msra.mxu0 0.0
        %1853 = vmatprep.subr.mxu0 0.0
        %1854 = vmatpush1.msra.mxu0 0.0
        %1855 = vmatprep.subr.mxu0 0.0
        %1856 = vmatpush1.msra.mxu0 0.0
        %1857 = vmatprep.subr.mxu0 0.0
        %1858 = vmatpush1.msra.mxu0 0.0
        %1859 = vmatprep.subr.mxu0 0.0
        %1860 = vmatpush1.msra.mxu0 0.0
        %1861 = vmatprep.subr.mxu0 0.0
        %1862 = vmatpush1.msra.mxu0 0.0
        %1863 = vmatprep.subr.mxu0 0.0
        %1864 = vmatpush1.msra.mxu0 0.0
        %1865 = vmatprep.subr.mxu0 0.0
        %1866 = vmatpush1.msra.mxu0 0.0
        %1867 = vmatprep.subr.mxu0 0.0
        %1868 = vmatpush1.msra.mxu0 0.0
        %1869 = vmatprep.subr.mxu0 0.0
        %1870 = vmatpush1.msra.mxu0 0.0
        %1871 = vmatprep.subr.mxu0 0.0
        %1872 = vmatpush1.msra.mxu0 0.0
        %1873 = vmatprep.subr.mxu0 0.0
        %1874 = vmatpush1.msra.mxu0 0.0
        %1875 = vmatprep.subr.mxu0 0.0
        %1876 = vmatpush1.msra.mxu0 0.0
        %1877 = vmatprep.subr.mxu0 0.0
        %1878 = vmatpush1.msra.mxu0 0.0
        %1879 = vmatprep.subr.mxu0 0.0
        %1880 = vmatpush1.msra.mxu0 0.0
        %1881 = vmatprep.subr.mxu0 0.0
        %1882 = vmatpush1.msra.mxu0 0.0
        %1883 = vmatprep.subr.mxu0 0.0
        %1884 = vmatpush1.msra.mxu0 0.0
        %1885 = vmatprep.subr.mxu0 0.0
        %1886 = vmatpush1.msra.mxu0 0.0
        %1887 = vmatprep.subr.mxu0 0.0
        %1888 = vmatpush1.msra.mxu0 0.0
        %1889 = vmatprep.mubr.f32.mxu0 0.0
        %1890 = vmatmul.mubr.f32.gmra.mrb[0].mxu0 %v1823
        %v1891 = vpop.f32.mrb[0].mxu0
        %v1892 = vadd.f32 0.0, %v1891
        %v1893 = vpop.f32.mrb[0].mxu0
        %1894 = vdwg.mxu0
        %1895 = vrot.lane.b32.xlu0 %v948, 48
        %v1896 = vpop.permute.xlu0 %1895
        %v1899 = vsel %vm970, %v1818, 0
        %1901 = vmatprep.subr.mxu0 0.0
        %1902 = vmatpush1.msra.mxu0 %v1896
        %1903 = vmatprep.subr.mxu0 0.0
        %1904 = vmatpush1.msra.mxu0 0.0
        %1905 = vmatprep.subr.mxu0 0.0
        %1906 = vmatpush1.msra.mxu0 0.0
        %1907 = vmatprep.subr.mxu0 0.0
        %1908 = vmatpush1.msra.mxu0 0.0
        %1909 = vmatprep.subr.mxu0 0.0
        %1910 = vmatpush1.msra.mxu0 0.0
        %1911 = vmatprep.subr.mxu0 0.0
        %1912 = vmatpush1.msra.mxu0 0.0
        %1913 = vmatprep.subr.mxu0 0.0
        %1914 = vmatpush1.msra.mxu0 0.0
        %1915 = vmatprep.subr.mxu0 0.0
        %1916 = vmatpush1.msra.mxu0 0.0
        %1917 = vmatprep.subr.mxu0 0.0
        %1918 = vmatpush1.msra.mxu0 0.0
        %1919 = vmatprep.subr.mxu0 0.0
        %1920 = vmatpush1.msra.mxu0 0.0
        %1921 = vmatprep.subr.mxu0 0.0
        %1922 = vmatpush1.msra.mxu0 0.0
        %1923 = vmatprep.subr.mxu0 0.0
        %1924 = vmatpush1.msra.mxu0 0.0
        %1925 = vmatprep.subr.mxu0 0.0
        %1926 = vmatpush1.msra.mxu0 0.0
        %1927 = vmatprep.subr.mxu0 0.0
        %1928 = vmatpush1.msra.mxu0 0.0
        %1929 = vmatprep.subr.mxu0 0.0
        %1930 = vmatpush1.msra.mxu0 0.0
        %1931 = vmatprep.subr.mxu0 0.0
        %1932 = vmatpush1.msra.mxu0 0.0
        %1933 = vmatprep.subr.mxu0 0.0
        %1934 = vmatpush1.msra.mxu0 0.0
        %1935 = vmatprep.subr.mxu0 0.0
        %1936 = vmatpush1.msra.mxu0 0.0
        %1937 = vmatprep.subr.mxu0 0.0
        %1938 = vmatpush1.msra.mxu0 0.0
        %1939 = vmatprep.subr.mxu0 0.0
        %1940 = vmatpush1.msra.mxu0 0.0
        %1941 = vmatprep.subr.mxu0 0.0
        %1942 = vmatpush1.msra.mxu0 0.0
        %1943 = vmatprep.subr.mxu0 0.0
        %1944 = vmatpush1.msra.mxu0 0.0
        %1945 = vmatprep.subr.mxu0 0.0
        %1946 = vmatpush1.msra.mxu0 0.0
        %1947 = vmatprep.subr.mxu0 0.0
        %1948 = vmatpush1.msra.mxu0 0.0
        %1949 = vmatprep.subr.mxu0 0.0
        %1950 = vmatpush1.msra.mxu0 0.0
        %1951 = vmatprep.subr.mxu0 0.0
        %1952 = vmatpush1.msra.mxu0 0.0
        %1953 = vmatprep.subr.mxu0 0.0
        %1954 = vmatpush1.msra.mxu0 0.0
        %1955 = vmatprep.subr.mxu0 0.0
        %1956 = vmatpush1.msra.mxu0 0.0
        %1957 = vmatprep.subr.mxu0 0.0
        %1958 = vmatpush1.msra.mxu0 0.0
        %1959 = vmatprep.subr.mxu0 0.0
        %1960 = vmatpush1.msra.mxu0 0.0
        %1961 = vmatprep.subr.mxu0 0.0
        %1962 = vmatpush1.msra.mxu0 0.0
        %1963 = vmatprep.subr.mxu0 0.0
        %1964 = vmatpush1.msra.mxu0 0.0
        %1965 = vmatprep.mubr.f32.mxu0 0.0
        %1966 = vmatmul.mubr.f32.gmra.mrb[0].mxu0 %v1899
        %v1967 = vpop.f32.mrb[0].mxu0
        %v1968 = vadd.f32 0.0, %v1967
        %v1969 = vpop.f32.mrb[0].mxu0
        %1970 = vdwg.mxu0
        %1973 = vrot.lane.b32.xlu0 %v1892, 16
        %v1974 = vpop.permute.xlu0 %1973
        %1975 = vrot.lane.b32.xlu0 %v1968, 16
        %v1976 = vpop.permute.xlu0 %1975
        %vm1979 = vcmask 195712
        %1980 = vst.msk [vmem:[#allocation3] sm:$0xff] %vm1979, %v1974
        %1981 = vst.msk [vmem:[#allocation3 + $0x8] sm:$0xff] %vm1979, %v1976
        %1982 = vrot.lane.b32.xlu0 %v951, 104
        %v1983 = vpop.permute.xlu0 %1982
        %1984 = vrot.lane.b32.xlu0 %v943, 72
        %v1985 = vpop.permute.xlu0 %1984
        %v1986 = vsel %vm970, %v1983, 0
        %v1988 = vsel %vm970, %v1985, 0
        %1990 = vmatprep.subr.mxu0 0.0
        %1991 = vmatpush1.xpose.msra.mxu0 %v1988
        %1992 = vmatprep.subr.mxu0 0.0
        %1993 = vmatpush1.xpose.msra.mxu0 0.0
        %1994 = vmatprep.subr.mxu0 0.0
        %1995 = vmatpush1.xpose.msra.mxu0 0.0
        %1996 = vmatprep.subr.mxu0 0.0
        %1997 = vmatpush1.xpose.msra.mxu0 0.0
        %1998 = vmatprep.subr.mxu0 0.0
        %1999 = vmatpush1.xpose.msra.mxu0 0.0
        %2000 = vmatprep.subr.mxu0 0.0
        %2001 = vmatpush1.xpose.msra.mxu0 0.0
        %2002 = vmatprep.subr.mxu0 0.0
        %2003 = vmatpush1.xpose.msra.mxu0 0.0
        %2004 = vmatprep.subr.mxu0 0.0
        %2005 = vmatpush1.xpose.msra.mxu0 0.0
        %2006 = vmatprep.subr.mxu0 0.0
        %2007 = vmatpush1.xpose.msra.mxu0 0.0
        %2008 = vmatprep.subr.mxu0 0.0
        %2009 = vmatpush1.xpose.msra.mxu0 0.0
        %2010 = vmatprep.subr.mxu0 0.0
        %2011 = vmatpush1.xpose.msra.mxu0 0.0
        %2012 = vmatprep.subr.mxu0 0.0
        %2013 = vmatpush1.xpose.msra.mxu0 0.0
        %2014 = vmatprep.subr.mxu0 0.0
        %2015 = vmatpush1.xpose.msra.mxu0 0.0
        %2016 = vmatprep.subr.mxu0 0.0
        %2017 = vmatpush1.xpose.msra.mxu0 0.0
        %2018 = vmatprep.subr.mxu0 0.0
        %2019 = vmatpush1.xpose.msra.mxu0 0.0
        %2020 = vmatprep.subr.mxu0 0.0
        %2021 = vmatpush1.xpose.msra.mxu0 0.0
        %2022 = vmatprep.subr.mxu0 0.0
        %2023 = vmatpush1.xpose.msra.mxu0 0.0
        %2024 = vmatprep.subr.mxu0 0.0
        %2025 = vmatpush1.xpose.msra.mxu0 0.0
        %2026 = vmatprep.subr.mxu0 0.0
        %2027 = vmatpush1.xpose.msra.mxu0 0.0
        %2028 = vmatprep.subr.mxu0 0.0
        %2029 = vmatpush1.xpose.msra.mxu0 0.0
        %2030 = vmatprep.subr.mxu0 0.0
        %2031 = vmatpush1.xpose.msra.mxu0 0.0
        %2032 = vmatprep.subr.mxu0 0.0
        %2033 = vmatpush1.xpose.msra.mxu0 0.0
        %2034 = vmatprep.subr.mxu0 0.0
        %2035 = vmatpush1.xpose.msra.mxu0 0.0
        %2036 = vmatprep.subr.mxu0 0.0
        %2037 = vmatpush1.xpose.msra.mxu0 0.0
        %2038 = vmatprep.subr.mxu0 0.0
        %2039 = vmatpush1.xpose.msra.mxu0 0.0
        %2040 = vmatprep.subr.mxu0 0.0
        %2041 = vmatpush1.xpose.msra.mxu0 0.0
        %2042 = vmatprep.subr.mxu0 0.0
        %2043 = vmatpush1.xpose.msra.mxu0 0.0
        %2044 = vmatprep.subr.mxu0 0.0
        %2045 = vmatpush1.xpose.msra.mxu0 0.0
        %2046 = vmatprep.subr.mxu0 0.0
        %2047 = vmatpush1.xpose.msra.mxu0 0.0
        %2048 = vmatprep.subr.mxu0 0.0
        %2049 = vmatpush1.xpose.msra.mxu0 0.0
        %2050 = vmatprep.subr.mxu0 0.0
        %2051 = vmatpush1.xpose.msra.mxu0 0.0
        %2052 = vmatprep.subr.mxu0 0.0
        %2053 = vmatpush1.xpose.msra.mxu0 0.0
        %2054 = vmatprep.mubr.f32.mxu0 0.0
        %2055 = vmatmul.mubr.f32.gmra.mrb[0].mxu0 %v1986
        %v2056 = vpop.f32.mrb[0].mxu0
        %v2057 = vadd.f32 %v960, %v2056
        %v2058 = vpop.f32.mrb[0].mxu0
        %2059 = vdwg.mxu0
        %2060 = vrot.lane.b32.xlu0 %v952, 104
        %v2061 = vpop.permute.xlu0 %2060
        %2062 = vrot.lane.b32.xlu0 %v948, 72
        %v2063 = vpop.permute.xlu0 %2062
        %v2064 = vsel %vm970, %v2061, 0
        %v2066 = vsel %vm970, %v2063, 0
        %2068 = vmatprep.subr.mxu0 0.0
        %2069 = vmatpush1.xpose.msra.mxu0 %v2066
        %2070 = vmatprep.subr.mxu0 0.0
        %2071 = vmatpush1.xpose.msra.mxu0 0.0
        %2072 = vmatprep.subr.mxu0 0.0
        %2073 = vmatpush1.xpose.msra.mxu0 0.0
        %2074 = vmatprep.subr.mxu0 0.0
        %2075 = vmatpush1.xpose.msra.mxu0 0.0
        %2076 = vmatprep.subr.mxu0 0.0
        %2077 = vmatpush1.xpose.msra.mxu0 0.0
        %2078 = vmatprep.subr.mxu0 0.0
        %2079 = vmatpush1.xpose.msra.mxu0 0.0
        %2080 = vmatprep.subr.mxu0 0.0
        %2081 = vmatpush1.xpose.msra.mxu0 0.0
        %2082 = vmatprep.subr.mxu0 0.0
        %2083 = vmatpush1.xpose.msra.mxu0 0.0
        %2084 = vmatprep.subr.mxu0 0.0
        %2085 = vmatpush1.xpose.msra.mxu0 0.0
        %2086 = vmatprep.subr.mxu0 0.0
        %2087 = vmatpush1.xpose.msra.mxu0 0.0
        %2088 = vmatprep.subr.mxu0 0.0
        %2089 = vmatpush1.xpose.msra.mxu0 0.0
        %2090 = vmatprep.subr.mxu0 0.0
        %2091 = vmatpush1.xpose.msra.mxu0 0.0
        %2092 = vmatprep.subr.mxu0 0.0
        %2093 = vmatpush1.xpose.msra.mxu0 0.0
        %2094 = vmatprep.subr.mxu0 0.0
        %2095 = vmatpush1.xpose.msra.mxu0 0.0
        %2096 = vmatprep.subr.mxu0 0.0
        %2097 = vmatpush1.xpose.msra.mxu0 0.0
        %2098 = vmatprep.subr.mxu0 0.0
        %2099 = vmatpush1.xpose.msra.mxu0 0.0
        %2100 = vmatprep.subr.mxu0 0.0
        %2101 = vmatpush1.xpose.msra.mxu0 0.0
        %2102 = vmatprep.subr.mxu0 0.0
        %2103 = vmatpush1.xpose.msra.mxu0 0.0
        %2104 = vmatprep.subr.mxu0 0.0
        %2105 = vmatpush1.xpose.msra.mxu0 0.0
        %2106 = vmatprep.subr.mxu0 0.0
        %2107 = vmatpush1.xpose.msra.mxu0 0.0
        %2108 = vmatprep.subr.mxu0 0.0
        %2109 = vmatpush1.xpose.msra.mxu0 0.0
        %2110 = vmatprep.subr.mxu0 0.0
        %2111 = vmatpush1.xpose.msra.mxu0 0.0
        %2112 = vmatprep.subr.mxu0 0.0
        %2113 = vmatpush1.xpose.msra.mxu0 0.0
        %2114 = vmatprep.subr.mxu0 0.0
        %2115 = vmatpush1.xpose.msra.mxu0 0.0
        %2116 = vmatprep.subr.mxu0 0.0
        %2117 = vmatpush1.xpose.msra.mxu0 0.0
        %2118 = vmatprep.subr.mxu0 0.0
        %2119 = vmatpush1.xpose.msra.mxu0 0.0
        %2120 = vmatprep.subr.mxu0 0.0
        %2121 = vmatpush1.xpose.msra.mxu0 0.0
        %2122 = vmatprep.subr.mxu0 0.0
        %2123 = vmatpush1.xpose.msra.mxu0 0.0
        %2124 = vmatprep.subr.mxu0 0.0
        %2125 = vmatpush1.xpose.msra.mxu0 0.0
        %2126 = vmatprep.subr.mxu0 0.0
        %2127 = vmatpush1.xpose.msra.mxu0 0.0
        %2128 = vmatprep.subr.mxu0 0.0
        %2129 = vmatpush1.xpose.msra.mxu0 0.0
        %2130 = vmatprep.subr.mxu0 0.0
        %2131 = vmatpush1.xpose.msra.mxu0 0.0
        %2132 = vmatprep.mubr.f32.mxu0 0.0
        %2133 = vmatmul.mubr.f32.gmra.mrb[0].mxu0 %v2064
        %v2134 = vpop.f32.mrb[0].mxu0
        %v2135 = vadd.f32 %v964, %v2134
        %v2136 = vpop.f32.mrb[0].mxu0
        %2137 = vdwg.mxu0
        %v2138 = vsel %vm970, %v2057, -inf
        %2139 = vmax.xlane.f32.xlu0 %v2138
        %v2140 = vpop.xlane.xlu0 %2139
        %v2141 = vsel %vm970, %v2135, -inf
        %2142 = vmax.xlane.f32.xlu0 %v2141
        %v2143 = vpop.xlane.xlu0 %2142
        %v2144 = vsub.f32 %v2057, %v2140
        %v2145 = vsub.f32 %v2135, %v2143
        %v2146 = vmul.f32 %v2144, 1.442695
        %v2147 = vpow.pop %v2146
        %v2148 = vmul.f32 %v2145, 1.442695
        %v2149 = vpow.pop %v2148
        %v2150 = vsel %vm970, %v2147, 0.0
        %2151 = vadd.xlane.f32.xlu0 %v2150
        %v2152 = vpop.xlane.xlu0 %2151
        %v2153 = vsel %vm970, %v2149, 0.0
        %2154 = vadd.xlane.f32.xlu0 %v2153
        %v2155 = vpop.xlane.xlu0 %2154
        %v2156 = vrcp.pop %v2152
        %v2157 = vrcp.pop %v2155
        %v2158 = vmul.f32 %v2147, %v2156
        %v2159 = vmul.f32 %v2149, %v2157
        %2160 = vrot.lane.b32.xlu0 %v943, 40
        %v2161 = vpop.permute.xlu0 %2160
        %v2164 = vsel %vm970, %v2158, 0
        %2166 = vmatprep.subr.mxu0 0.0
        %2167 = vmatpush1.msra.mxu0 %v2161
        %2168 = vmatprep.subr.mxu0 0.0
        %2169 = vmatpush1.msra.mxu0 0.0
        %2170 = vmatprep.subr.mxu0 0.0
        %2171 = vmatpush1.msra.mxu0 0.0
        %2172 = vmatprep.subr.mxu0 0.0
        %2173 = vmatpush1.msra.mxu0 0.0
        %2174 = vmatprep.subr.mxu0 0.0
        %2175 = vmatpush1.msra.mxu0 0.0
        %2176 = vmatprep.subr.mxu0 0.0
        %2177 = vmatpush1.msra.mxu0 0.0
        %2178 = vmatprep.subr.mxu0 0.0
        %2179 = vmatpush1.msra.mxu0 0.0
        %2180 = vmatprep.subr.mxu0 0.0
        %2181 = vmatpush1.msra.mxu0 0.0
        %2182 = vmatprep.subr.mxu0 0.0
        %2183 = vmatpush1.msra.mxu0 0.0
        %2184 = vmatprep.subr.mxu0 0.0
        %2185 = vmatpush1.msra.mxu0 0.0
        %2186 = vmatprep.subr.mxu0 0.0
        %2187 = vmatpush1.msra.mxu0 0.0
        %2188 = vmatprep.subr.mxu0 0.0
        %2189 = vmatpush1.msra.mxu0 0.0
        %2190 = vmatprep.subr.mxu0 0.0
        %2191 = vmatpush1.msra.mxu0 0.0
        %2192 = vmatprep.subr.mxu0 0.0
        %2193 = vmatpush1.msra.mxu0 0.0
        %2194 = vmatprep.subr.mxu0 0.0
        %2195 = vmatpush1.msra.mxu0 0.0
        %2196 = vmatprep.subr.mxu0 0.0
        %2197 = vmatpush1.msra.mxu0 0.0
        %2198 = vmatprep.subr.mxu0 0.0
        %2199 = vmatpush1.msra.mxu0 0.0
        %2200 = vmatprep.subr.mxu0 0.0
        %2201 = vmatpush1.msra.mxu0 0.0
        %2202 = vmatprep.subr.mxu0 0.0
        %2203 = vmatpush1.msra.mxu0 0.0
        %2204 = vmatprep.subr.mxu0 0.0
        %2205 = vmatpush1.msra.mxu0 0.0
        %2206 = vmatprep.subr.mxu0 0.0
        %2207 = vmatpush1.msra.mxu0 0.0
        %2208 = vmatprep.subr.mxu0 0.0
        %2209 = vmatpush1.msra.mxu0 0.0
        %2210 = vmatprep.subr.mxu0 0.0
        %2211 = vmatpush1.msra.mxu0 0.0
        %2212 = vmatprep.subr.mxu0 0.0
        %2213 = vmatpush1.msra.mxu0 0.0
        %2214 = vmatprep.subr.mxu0 0.0
        %2215 = vmatpush1.msra.mxu0 0.0
        %2216 = vmatprep.subr.mxu0 0.0
        %2217 = vmatpush1.msra.mxu0 0.0
        %2218 = vmatprep.subr.mxu0 0.0
        %2219 = vmatpush1.msra.mxu0 0.0
        %2220 = vmatprep.subr.mxu0 0.0
        %2221 = vmatpush1.msra.mxu0 0.0
        %2222 = vmatprep.subr.mxu0 0.0
        %2223 = vmatpush1.msra.mxu0 0.0
        %2224 = vmatprep.subr.mxu0 0.0
        %2225 = vmatpush1.msra.mxu0 0.0
        %2226 = vmatprep.subr.mxu0 0.0
        %2227 = vmatpush1.msra.mxu0 0.0
        %2228 = vmatprep.subr.mxu0 0.0
        %2229 = vmatpush1.msra.mxu0 0.0
        %2230 = vmatprep.mubr.f32.mxu0 0.0
        %2231 = vmatmul.mubr.f32.gmra.mrb[0].mxu0 %v2164
        %v2232 = vpop.f32.mrb[0].mxu0
        %v2233 = vadd.f32 0.0, %v2232
        %v2234 = vpop.f32.mrb[0].mxu0
        %2235 = vdwg.mxu0
        %2236 = vrot.lane.b32.xlu0 %v948, 40
        %v2237 = vpop.permute.xlu0 %2236
        %v2240 = vsel %vm970, %v2159, 0
        %2242 = vmatprep.subr.mxu0 0.0
        %2243 = vmatpush1.msra.mxu0 %v2237
        %2244 = vmatprep.subr.mxu0 0.0
        %2245 = vmatpush1.msra.mxu0 0.0
        %2246 = vmatprep.subr.mxu0 0.0
        %2247 = vmatpush1.msra.mxu0 0.0
        %2248 = vmatprep.subr.mxu0 0.0
        %2249 = vmatpush1.msra.mxu0 0.0
        %2250 = vmatprep.subr.mxu0 0.0
        %2251 = vmatpush1.msra.mxu0 0.0
        %2252 = vmatprep.subr.mxu0 0.0
        %2253 = vmatpush1.msra.mxu0 0.0
        %2254 = vmatprep.subr.mxu0 0.0
        %2255 = vmatpush1.msra.mxu0 0.0
        %2256 = vmatprep.subr.mxu0 0.0
        %2257 = vmatpush1.msra.mxu0 0.0
        %2258 = vmatprep.subr.mxu0 0.0
        %2259 = vmatpush1.msra.mxu0 0.0
        %2260 = vmatprep.subr.mxu0 0.0
        %2261 = vmatpush1.msra.mxu0 0.0
        %2262 = vmatprep.subr.mxu0 0.0
        %2263 = vmatpush1.msra.mxu0 0.0
        %2264 = vmatprep.subr.mxu0 0.0
        %2265 = vmatpush1.msra.mxu0 0.0
        %2266 = vmatprep.subr.mxu0 0.0
        %2267 = vmatpush1.msra.mxu0 0.0
        %2268 = vmatprep.subr.mxu0 0.0
        %2269 = vmatpush1.msra.mxu0 0.0
        %2270 = vmatprep.subr.mxu0 0.0
        %2271 = vmatpush1.msra.mxu0 0.0
        %2272 = vmatprep.subr.mxu0 0.0
        %2273 = vmatpush1.msra.mxu0 0.0
        %2274 = vmatprep.subr.mxu0 0.0
        %2275 = vmatpush1.msra.mxu0 0.0
        %2276 = vmatprep.subr.mxu0 0.0
        %2277 = vmatpush1.msra.mxu0 0.0
        %2278 = vmatprep.subr.mxu0 0.0
        %2279 = vmatpush1.msra.mxu0 0.0
        %2280 = vmatprep.subr.mxu0 0.0
        %2281 = vmatpush1.msra.mxu0 0.0
        %2282 = vmatprep.subr.mxu0 0.0
        %2283 = vmatpush1.msra.mxu0 0.0
        %2284 = vmatprep.subr.mxu0 0.0
        %2285 = vmatpush1.msra.mxu0 0.0
        %2286 = vmatprep.subr.mxu0 0.0
        %2287 = vmatpush1.msra.mxu0 0.0
        %2288 = vmatprep.subr.mxu0 0.0
        %2289 = vmatpush1.msra.mxu0 0.0
        %2290 = vmatprep.subr.mxu0 0.0
        %2291 = vmatpush1.msra.mxu0 0.0
        %2292 = vmatprep.subr.mxu0 0.0
        %2293 = vmatpush1.msra.mxu0 0.0
        %2294 = vmatprep.subr.mxu0 0.0
        %2295 = vmatpush1.msra.mxu0 0.0
        %2296 = vmatprep.subr.mxu0 0.0
        %2297 = vmatpush1.msra.mxu0 0.0
        %2298 = vmatprep.subr.mxu0 0.0
        %2299 = vmatpush1.msra.mxu0 0.0
        %2300 = vmatprep.subr.mxu0 0.0
        %2301 = vmatpush1.msra.mxu0 0.0
        %2302 = vmatprep.subr.mxu0 0.0
        %2303 = vmatpush1.msra.mxu0 0.0
        %2304 = vmatprep.subr.mxu0 0.0
        %2305 = vmatpush1.msra.mxu0 0.0
        %2306 = vmatprep.mubr.f32.mxu0 0.0
        %2307 = vmatmul.mubr.f32.gmra.mrb[0].mxu0 %v2240
        %v2308 = vpop.f32.mrb[0].mxu0
        %v2309 = vadd.f32 0.0, %v2308
        %v2310 = vpop.f32.mrb[0].mxu0
        %2311 = vdwg.mxu0
        %2314 = vrot.lane.b32.xlu0 %v2233, 24
        %v2315 = vpop.permute.xlu0 %2314
        %2316 = vrot.lane.b32.xlu0 %v2309, 24
        %v2317 = vpop.permute.xlu0 %2316
        %vm2320 = vcmask 261312
        %2321 = vst.msk [vmem:[#allocation3] sm:$0xff] %vm2320, %v2315
        %2322 = vst.msk [vmem:[#allocation3 + $0x8] sm:$0xff] %vm2320, %v2317
        %v2323 = vld [vmem:[#allocation3] sm:$0xff]
        %v2324 = vld [vmem:[#allocation3 + $0x8] sm:$0xff]
        %v2325 = vld [vmem:[%s770] sm:$0xff]
        %v2326 = vld [vmem:[%s770 + $0x8] sm:$0xff]
        %v2327 = vld [vmem:[%s770 + $0x10] sm:$0xff]
        %v2328 = vld [vmem:[%s770 + $0x18] sm:$0xff]
        %v2329 = vld [vmem:[%s773] sm:$0x1]
        %v2331 = vlaneseq
        %v2332 = vshrl.u32 %v2331, 7
        %v2333 = vsub.s32 0, %v2332
        %v2334 = vrot.slane %v2329, %v2333
        %v2337 = vsel %vm869, %v2323, 0
        %v2340 = vsel %vm869, %v2324, 0
        %2342 = vmatprep.subr.mxu0 0.0
        %2343 = vmatpush1.msra.mxu0 %v2325
        %2344 = vmatprep.subr.mxu0 0.0
        %2345 = vmatpush1.msra.mxu0 %v2326
        %2346 = vmatprep.subr.mxu0 0.0
        %2347 = vmatpush1.msra.mxu0 %v2327
        %2348 = vmatprep.subr.mxu0 0.0
        %2349 = vmatpush1.msra.mxu0 %v2328
        %2350 = vmatprep.subr.mxu0 0.0
        %2351 = vmatpush1.msra.mxu0 0.0
        %2352 = vmatprep.subr.mxu0 0.0
        %2353 = vmatpush1.msra.mxu0 0.0
        %2354 = vmatprep.subr.mxu0 0.0
        %2355 = vmatpush1.msra.mxu0 0.0
        %2356 = vmatprep.subr.mxu0 0.0
        %2357 = vmatpush1.msra.mxu0 0.0
        %2358 = vmatprep.subr.mxu0 0.0
        %2359 = vmatpush1.msra.mxu0 0.0
        %2360 = vmatprep.subr.mxu0 0.0
        %2361 = vmatpush1.msra.mxu0 0.0
        %2362 = vmatprep.subr.mxu0 0.0
        %2363 = vmatpush1.msra.mxu0 0.0
        %2364 = vmatprep.subr.mxu0 0.0
        %2365 = vmatpush1.msra.mxu0 0.0
        %2366 = vmatprep.subr.mxu0 0.0
        %2367 = vmatpush1.msra.mxu0 0.0
        %2368 = vmatprep.subr.mxu0 0.0
        %2369 = vmatpush1.msra.mxu0 0.0
        %2370 = vmatprep.subr.mxu0 0.0
        %2371 = vmatpush1.msra.mxu0 0.0
        %2372 = vmatprep.subr.mxu0 0.0
        %2373 = vmatpush1.msra.mxu0 0.0
        %2374 = vmatprep.subr.mxu0 0.0
        %2375 = vmatpush1.msra.mxu0 0.0
        %2376 = vmatprep.subr.mxu0 0.0
        %2377 = vmatpush1.msra.mxu0 0.0
        %2378 = vmatprep.subr.mxu0 0.0
        %2379 = vmatpush1.msra.mxu0 0.0
        %2380 = vmatprep.subr.mxu0 0.0
        %2381 = vmatpush1.msra.mxu0 0.0
        %2382 = vmatprep.subr.mxu0 0.0
        %2383 = vmatpush1.msra.mxu0 0.0
        %2384 = vmatprep.subr.mxu0 0.0
        %2385 = vmatpush1.msra.mxu0 0.0
        %2386 = vmatprep.subr.mxu0 0.0
        %2387 = vmatpush1.msra.mxu0 0.0
        %2388 = vmatprep.subr.mxu0 0.0
        %2389 = vmatpush1.msra.mxu0 0.0
        %2390 = vmatprep.subr.mxu0 0.0
        %2391 = vmatpush1.msra.mxu0 0.0
        %2392 = vmatprep.subr.mxu0 0.0
        %2393 = vmatpush1.msra.mxu0 0.0
        %2394 = vmatprep.subr.mxu0 0.0
        %2395 = vmatpush1.msra.mxu0 0.0
        %2396 = vmatprep.subr.mxu0 0.0
        %2397 = vmatpush1.msra.mxu0 0.0
        %2398 = vmatprep.subr.mxu0 0.0
        %2399 = vmatpush1.msra.mxu0 0.0
        %2400 = vmatprep.subr.mxu0 0.0
        %2401 = vmatpush1.msra.mxu0 0.0
        %2402 = vmatprep.subr.mxu0 0.0
        %2403 = vmatpush1.msra.mxu0 0.0
        %2404 = vmatprep.subr.mxu0 0.0
        %2405 = vmatpush1.msra.mxu0 0.0
        %2406 = vmatprep.mubr.f32.mxu0 0.0
        %2407 = vmatmul.mubr.f32.gmra.mrb[0].mxu0 %v2337
        %v2408 = vpop.f32.mrb[0].mxu0
        %v2409 = vadd.f32 %v2334, %v2408
        %v2410 = vpop.f32.mrb[0].mxu0
        %2411 = vmatprep.mubr.f32.mxu0 0.0
        %2412 = vmatmul.mubr.f32.gmra.mrb[0].mxu0 %v2340
        %v2413 = vpop.f32.mrb[0].mxu0
        %v2414 = vadd.f32 %v2334, %v2413
        %v2415 = vpop.f32.mrb[0].mxu0
        %2416 = vdwg.mxu0
        %v2417 = vadd.f32 %v856, %v2409
        %v2418 = vadd.f32 %v857, %v2414
        %v2419 = vld [vmem:[%s792] sm:$0x1]
        %v2420 = vld [vmem:[%s795] sm:$0x1]
        %v2421 = vsel %vm869, %v2417, 0.0
        %2422 = vadd.xlane.f32.xlu0 %v2421
        %v2423 = vpop.xlane.xlu0 %2422
        %v2424 = vsel %vm869, %v2418, 0.0
        %2425 = vadd.xlane.f32.xlu0 %v2424
        %v2426 = vpop.xlane.xlu0 %2425
        %v2427 = vrcp.pop 32.0
        %v2428 = vmul.f32 %v2423, %v2427
        %v2429 = vmul.f32 %v2426, %v2427
        %v2430 = vsub.f32 %v2417, %v2428
        %v2431 = vsub.f32 %v2418, %v2429
        %v2432 = vmul.f32 %v2430, %v2430
        %v2433 = vmul.f32 %v2431, %v2431
        %v2434 = vsel %vm869, %v2432, 0.0
        %2435 = vadd.xlane.f32.xlu0 %v2434
        %v2436 = vpop.xlane.xlu0 %2435
        %v2437 = vsel %vm869, %v2433, 0.0
        %2438 = vadd.xlane.f32.xlu0 %v2437
        %v2439 = vpop.xlane.xlu0 %2438
        %v2440 = vmul.f32 %v2436, %v2427
        %v2441 = vmul.f32 %v2439, %v2427
        %v2442 = vadd.f32 %v2440, 1e-05
        %v2443 = vadd.f32 %v2441, 1e-05
        %v2444 = vrsqrt.pop %v2442
        %v2445 = vrsqrt.pop %v2443
        %v2446 = vmul.f32 %v2430, %v2444
        %v2447 = vmul.f32 %v2431, %v2445
        %v2449 = vlaneseq
        %v2450 = vshrl.u32 %v2449, 7
        %v2451 = vsub.s32 0, %v2450
        %v2452 = vrot.slane %v2419, %v2451
        %v2454 = vmul.f32 %v2446, %v2452
        %v2455 = vmul.f32 %v2447, %v2452
        %v2457 = vlaneseq
        %v2458 = vshrl.u32 %v2457, 7
        %v2459 = vsub.s32 0, %v2458
        %v2460 = vrot.slane %v2420, %v2459
        %v2462 = vadd.f32 %v2454, %v2460
        %v2463 = vadd.f32 %v2455, %v2460
        %v2464 = vld [vmem:[%s778] sm:$0xff]
        %v2465 = vld [vmem:[%s778 + $0x8] sm:$0xff]
        %v2466 = vld [vmem:[%s778 + $0x10] sm:$0xff]
        %v2467 = vld [vmem:[%s778 + $0x18] sm:$0xff]
        %v2468 = vld [vmem:[%s781] sm:$0x1]
        %v2470 = vlaneseq
        %v2471 = vshrl.u32 %v2470, 7
        %v2472 = vsub.s32 0, %v2471
        %v2473 = vrot.slane %v2468, %v2472
        %v2476 = vsel %vm869, %v2462, 0
        %v2479 = vsel %vm869, %v2463, 0
        %2481 = vmatprep.subr.mxu0 0.0
        %2482 = vmatpush1.msra.mxu0 %v2464
        %2483 = vmatprep.subr.mxu0 0.0
        %2484 = vmatpush1.msra.mxu0 %v2465
        %2485 = vmatprep.subr.mxu0 0.0
        %2486 = vmatpush1.msra.mxu0 %v2466
        %2487 = vmatprep.subr.mxu0 0.0
        %2488 = vmatpush1.msra.mxu0 %v2467
        %2489 = vmatprep.subr.mxu0 0.0
        %2490 = vmatpush1.msra.mxu0 0.0
        %2491 = vmatprep.subr.mxu0 0.0
        %2492 = vmatpush1.msra.mxu0 0.0
        %2493 = vmatprep.subr.mxu0 0.0
        %2494 = vmatpush1.msra.mxu0 0.0
        %2495 = vmatprep.subr.mxu0 0.0
        %2496 = vmatpush1.msra.mxu0 0.0
        %2497 = vmatprep.subr.mxu0 0.0
        %2498 = vmatpush1.msra.mxu0 0.0
        %2499 = vmatprep.subr.mxu0 0.0
        %2500 = vmatpush1.msra.mxu0 0.0
        %2501 = vmatprep.subr.mxu0 0.0
        %2502 = vmatpush1.msra.mxu0 0.0
        %2503 = vmatprep.subr.mxu0 0.0
        %2504 = vmatpush1.msra.mxu0 0.0
        %2505 = vmatprep.subr.mxu0 0.0
        %2506 = vmatpush1.msra.mxu0 0.0
        %2507 = vmatprep.subr.mxu0 0.0
        %2508 = vmatpush1.msra.mxu0 0.0
        %2509 = vmatprep.subr.mxu0 0.0
        %2510 = vmatpush1.msra.mxu0 0.0
        %2511 = vmatprep.subr.mxu0 0.0
        %2512 = vmatpush1.msra.mxu0 0.0
        %2513 = vmatprep.subr.mxu0 0.0
        %2514 = vmatpush1.msra.mxu0 0.0
        %2515 = vmatprep.subr.mxu0 0.0
        %2516 = vmatpush1.msra.mxu0 0.0
        %2517 = vmatprep.subr.mxu0 0.0
        %2518 = vmatpush1.msra.mxu0 0.0
        %2519 = vmatprep.subr.mxu0 0.0
        %2520 = vmatpush1.msra.mxu0 0.0
        %2521 = vmatprep.subr.mxu0 0.0
        %2522 = vmatpush1.msra.mxu0 0.0
        %2523 = vmatprep.subr.mxu0 0.0
        %2524 = vmatpush1.msra.mxu0 0.0
        %2525 = vmatprep.subr.mxu0 0.0
        %2526 = vmatpush1.msra.mxu0 0.0
        %2527 = vmatprep.subr.mxu0 0.0
        %2528 = vmatpush1.msra.mxu0 0.0
        %2529 = vmatprep.subr.mxu0 0.0
        %2530 = vmatpush1.msra.mxu0 0.0
        %2531 = vmatprep.subr.mxu0 0.0
        %2532 = vmatpush1.msra.mxu0 0.0
        %2533 = vmatprep.subr.mxu0 0.0
        %2534 = vmatpush1.msra.mxu0 0.0
        %2535 = vmatprep.subr.mxu0 0.0
        %2536 = vmatpush1.msra.mxu0 0.0
        %2537 = vmatprep.subr.mxu0 0.0
        %2538 = vmatpush1.msra.mxu0 0.0
        %2539 = vmatprep.subr.mxu0 0.0
        %2540 = vmatpush1.msra.mxu0 0.0
        %2541 = vmatprep.subr.mxu0 0.0
        %2542 = vmatpush1.msra.mxu0 0.0
        %2543 = vmatprep.subr.mxu0 0.0
        %2544 = vmatpush1.msra.mxu0 0.0
        %2545 = vmatprep.mubr.f32.mxu0 0.0
        %2546 = vmatmul.mubr.f32.gmra.mrb[0].mxu0 %v2476
        %v2547 = vpop.f32.mrb[0].mxu0
        %v2548 = vadd.f32 %v2473, %v2547
        %v2549 = vpop.f32.mrb[0].mxu0
        %2550 = vmatprep.mubr.f32.mxu0 0.0
        %2551 = vmatmul.mubr.f32.gmra.mrb[0].mxu0 %v2479
        %v2552 = vpop.f32.mrb[0].mxu0
        %v2553 = vadd.f32 %v2473, %v2552
        %v2554 = vpop.f32.mrb[0].mxu0
        %2555 = vdwg.mxu0
        %v2556 = vmul.f32 %v2548, %v2548
        %v2557 = vmul.f32 %v2553, %v2553
        %v2558 = vmul.f32 %v2548, %v2556
        %v2559 = vmul.f32 %v2553, %v2557
        %v2560 = vmul.f32 %v2558, 0.044715
        %v2561 = vmul.f32 %v2559, 0.044715
        %v2562 = vadd.f32 %v2548, %v2560
        %v2563 = vadd.f32 %v2553, %v2561
        %v2564 = vmul.f32 %v2562, 0.7978846
        %v2565 = vmul.f32 %v2563, 0.7978846
        %v2566 = vtanh.pop %v2564
        %v2567 = vtanh.pop %v2565
        %v2568 = vadd.f32 %v2566, 1.0
        %v2569 = vadd.f32 %v2567, 1.0
        %v2570 = vmul.f32 %v2568, 0.5
        %v2571 = vmul.f32 %v2569, 0.5
        %v2572 = vmul.f32 %v2548, %v2570
        %v2573 = vmul.f32 %v2553, %v2571
        %v2574 = vld [vmem:[%s786] sm:$0xff]
        %v2575 = vld [vmem:[%s786 + $0x8] sm:$0xff]
        %v2576 = vld [vmem:[%s786 + $0x10] sm:$0xff]
        %v2577 = vld [vmem:[%s786 + $0x18] sm:$0xff]
        %v2578 = vld [vmem:[%s786 + $0x20] sm:$0xff]
        %v2579 = vld [vmem:[%s786 + $0x28] sm:$0xff]
        %v2580 = vld [vmem:[%s786 + $0x30] sm:$0xff]
        %v2581 = vld [vmem:[%s786 + $0x38] sm:$0xff]
        %v2582 = vld [vmem:[%s789] sm:$0x1]
        %v2584 = vlaneseq
        %v2585 = vshrl.u32 %v2584, 7
        %v2586 = vsub.s32 0, %v2585
        %v2587 = vrot.slane %v2582, %v2586
        %vm2589 = vcmask 523264
        %v2591 = vsel %vm2589, %v2572, 0
        %v2594 = vsel %vm2589, %v2573, 0
        %2596 = vmatprep.subr.mxu0 0.0
        %2597 = vmatpush1.msra.mxu0 %v2574
        %2598 = vmatprep.subr.mxu0 0.0
        %2599 = vmatpush1.msra.mxu0 %v2575
        %2600 = vmatprep.subr.mxu0 0.0
        %2601 = vmatpush1.msra.mxu0 %v2576
        %2602 = vmatprep.subr.mxu0 0.0
        %2603 = vmatpush1.msra.mxu0 %v2577
        %2604 = vmatprep.subr.mxu0 0.0
        %2605 = vmatpush1.msra.mxu0 %v2578
        %2606 = vmatprep.subr.mxu0 0.0
        %2607 = vmatpush1.msra.mxu0 %v2579
        %2608 = vmatprep.subr.mxu0 0.0
        %2609 = vmatpush1.msra.mxu0 %v2580
        %2610 = vmatprep.subr.mxu0 0.0
        %2611 = vmatpush1.msra.mxu0 %v2581
        %2612 = vmatprep.subr.mxu0 0.0
        %2613 = vmatpush1.msra.mxu0 0.0
        %2614 = vmatprep.subr.mxu0 0.0
        %2615 = vmatpush1.msra.mxu0 0.0
        %2616 = vmatprep.subr.mxu0 0.0
        %2617 = vmatpush1.msra.mxu0 0.0
        %2618 = vmatprep.subr.mxu0 0.0
        %2619 = vmatpush1.msra.mxu0 0.0
        %2620 = vmatprep.subr.mxu0 0.0
        %2621 = vmatpush1.msra.mxu0 0.0
        %2622 = vmatprep.subr.mxu0 0.0
        %2623 = vmatpush1.msra.mxu0 0.0
        %2624 = vmatprep.subr.mxu0 0.0
        %2625 = vmatpush1.msra.mxu0 0.0
        %2626 = vmatprep.subr.mxu0 0.0
        %2627 = vmatpush1.msra.mxu0 0.0
        %2628 = vmatprep.subr.mxu0 0.0
        %2629 = vmatpush1.msra.mxu0 0.0
        %2630 = vmatprep.subr.mxu0 0.0
        %2631 = vmatpush1.msra.mxu0 0.0
        %2632 = vmatprep.subr.mxu0 0.0
        %2633 = vmatpush1.msra.mxu0 0.0
        %2634 = vmatprep.subr.mxu0 0.0
        %2635 = vmatpush1.msra.mxu0 0.0
        %2636 = vmatprep.subr.mxu0 0.0
        %2637 = vmatpush1.msra.mxu0 0.0
        %2638 = vmatprep.subr.mxu0 0.0
        %2639 = vmatpush1.msra.mxu0 0.0
        %2640 = vmatprep.subr.mxu0 0.0
        %2641 = vmatpush1.msra.mxu0 0.0
        %2642 = vmatprep.subr.mxu0 0.0
        %2643 = vmatpush1.msra.mxu0 0.0
        %2644 = vmatprep.subr.mxu0 0.0
        %2645 = vmatpush1.msra.mxu0 0.0
        %2646 = vmatprep.subr.mxu0 0.0
        %2647 = vmatpush1.msra.mxu0 0.0
        %2648 = vmatprep.subr.mxu0 0.0
        %2649 = vmatpush1.msra.mxu0 0.0
        %2650 = vmatprep.subr.mxu0 0.0
        %2651 = vmatpush1.msra.mxu0 0.0
        %2652 = vmatprep.subr.mxu0 0.0
        %2653 = vmatpush1.msra.mxu0 0.0
        %2654 = vmatprep.subr.mxu0 0.0
        %2655 = vmatpush1.msra.mxu0 0.0
        %2656 = vmatprep.subr.mxu0 0.0
        %2657 = vmatpush1.msra.mxu0 0.0
        %2658 = vmatprep.subr.mxu0 0.0
        %2659 = vmatpush1.msra.mxu0 0.0
        %2660 = vmatprep.mubr.f32.mxu0 0.0
        %2661 = vmatmul.mubr.f32.gmra.mrb[0].mxu0 %v2591
        %v2662 = vpop.f32.mrb[0].mxu0
        %v2663 = vadd.f32 %v2587, %v2662
        %v2664 = vpop.f32.mrb[0].mxu0
        %2665 = vmatprep.mubr.f32.mxu0 0.0
        %2666 = vmatmul.mubr.f32.gmra.mrb[0].mxu0 %v2594
        %v2667 = vpop.f32.mrb[0].mxu0
        %v2668 = vadd.f32 %v2587, %v2667
        %v2669 = vpop.f32.mrb[0].mxu0
        %2670 = vdwg.mxu0
        %v2671 = vadd.f32 %v2462, %v2663
        %v2672 = vadd.f32 %v2463, %v2668
        %v2673 = vld [vmem:[%s798] sm:$0x1]
        %v2674 = vld [vmem:[%s801] sm:$0x1]
        %v2675 = vsel %vm869, %v2671, 0.0
        %2676 = vadd.xlane.f32.xlu0 %v2675
        %v2677 = vpop.xlane.xlu0 %2676
        %v2678 = vsel %vm869, %v2672, 0.0
        %2679 = vadd.xlane.f32.xlu0 %v2678
        %v2680 = vpop.xlane.xlu0 %2679
        %v2681 = vmul.f32 %v2677, %v2427
        %v2682 = vmul.f32 %v2680, %v2427
        %v2683 = vsub.f32 %v2671, %v2681
        %v2684 = vsub.f32 %v2672, %v2682
        %v2685 = vmul.f32 %v2683, %v2683
        %v2686 = vmul.f32 %v2684, %v2684
        %v2687 = vsel %vm869, %v2685, 0.0
        %2688 = vadd.xlane.f32.xlu0 %v2687
        %v2689 = vpop.xlane.xlu0 %2688
        %v2690 = vsel %vm869, %v2686, 0.0
        %2691 = vadd.xlane.f32.xlu0 %v2690
        %v2692 = vpop.xlane.xlu0 %2691
        %v2693 = vmul.f32 %v2689, %v2427
        %v2694 = vmul.f32 %v2692, %v2427
        %v2695 = vadd.f32 %v2693, 1e-05
        %v2696 = vadd.f32 %v2694, 1e-05
        %v2697 = vrsqrt.pop %v2695
        %v2698 = vrsqrt.pop %v2696
        %v2699 = vmul.f32 %v2683, %v2697
        %v2700 = vmul.f32 %v2684, %v2698
        %v2702 = vlaneseq
        %v2703 = vshrl.u32 %v2702, 7
        %v2704 = vsub.s32 0, %v2703
        %v2705 = vrot.slane %v2673, %v2704
        %v2707 = vmul.f32 %v2699, %v2705
        %v2708 = vmul.f32 %v2700, %v2705
        %v2710 = vlaneseq
        %v2711 = vshrl.u32 %v2710, 7
        %v2712 = vsub.s32 0, %v2711
        %v2713 = vrot.slane %v2674, %v2712
        %v2715 = vadd.f32 %v2707, %v2713
        %v2716 = vadd.f32 %v2708, %v2713
        %2717 = vst.msk [vmem:[#allocation2] sm:$0xff] %vm869, %v2715
        %2718 = vst.msk [vmem:[#allocation2 + $0x8] sm:$0xff] %vm869, %v2716
        %p2719 = scmp.eq.s32.totalorder %s37, 1
        // Predicated region
        $region109: #{tpu_custom_call.1} parent=91 // pred_check
          %p2720 = pneg %p2719
        $region110: #{tpu_custom_call.1} parent=91 // pred_check_branch
          %2722 = sbr.rel (%p2720) target = $region112
        $region111: #{tpu_custom_call.1} parent=91 // pred_region
          %v2723 = vmul.f32 %v2715, %v2715
          %v2724 = vmul.f32 %v2716, %v2716
          %v2727 = vrot.slane %v2724, 7
          %vm2728 = vcmask 1041409
          %v2729 = vsel %vm2728, %v2727, %v2723
          %vm2731 = vcmask 254976
          %v2732 = vsel %vm2731, %v2729, 0.0
          %2733 = vadd.xlane.f32.xlu0 %v2732
          %v2734 = vpop.xlane.xlu0 %2733
          %v2735 = vrsqrt.pop %v2734
          %v2736 = vmul.f32 %v2734, %v2735
          %vm2737 = vcmp.eq.f32.partialorder %v2734, inf
          %v2738 = vsel %vm2737, %v2734, %v2736
          %vm2739 = vcmp.eq.f32.partialorder %v2734, 0.0
          %v2740 = vand.u32 %v2734, 2147483648
          %v2741 = vsel %vm2739, %v2740, %v2738
          %v2742 = vmax.f32 %v2741, 1e-12
          %v2744 = vrot.slane %v2742, 1
          %v2747 = vrcp.pop %v2742
          %v2748 = vmul.f32 %v2715, %v2747
          %v2749 = vrcp.pop %v2744
          %v2750 = vmul.f32 %v2716, %v2749
          %v2753 = vrot.slane %v2750, 7
          %v2754 = vsel %vm2728, %v2753, %v2748
          %2756 = vst.msk [vmem:[#allocation11] sm:$0x3] %vm2731, %v2754
          %v2757 = vld [vmem:[%s16] sm:$0x1]
          %v2759 = vlaneseq
          %v2760 = vshrl.u32 %v2759, 7
          %v2761 = vsub.s32 0, %v2760
          %v2762 = vrot.slane %v2757, %v2761
          %v2764 = vmul.f32 %v2715, %v2762
          %v2765 = vmul.f32 %v2716, %v2762
          %v2766 = vsel %vm869, %v2764, 0.0
          %2767 = vadd.xlane.f32.xlu0 %v2766
          %v2768 = vpop.xlane.xlu0 %2767
          %v2769 = vsel %vm869, %v2765, 0.0
          %2770 = vadd.xlane.f32.xlu0 %v2769
          %v2771 = vpop.xlane.xlu0 %2770
          %v2772 = vld [vmem:[#allocation4] sm:$0x1]
          %v2774 = vlaneseq
          %v2775 = vshrl.u32 %v2774, 7
          %v2776 = vsub.s32 0, %v2775
          %v2777 = vrot.slane %v2772, %v2776
          %2778 = vset.pattern.permute.xlu0 0
          %2779 = vperm.xlu0 %2778, %v2777
          %v2780 = vpop.permute.xlu0 %2779
          %v2782 = vadd.f32 %v2768, %v2780
          %v2783 = vadd.f32 %v2771, %v2780
          %v2784 = vmax.f32 %v2782, 0.0
          %v2785 = vmax.f32 %v2783, 0.0
          %v2788 = vlaneseq
          %v2789 = vand.u32 %v2788, 127
          %v2790 = vlaneseq
          %v2791 = vshrl.u32 %v2790, 7
          %v2792 = vsub.s32 %v2789, %v2791
          %v2793 = vrot.slane %v2784, %v2792
          %v2794 = vlaneseq
          %v2795 = vshrl.u32 %v2794, 7
          %v2796 = vsub.s32 %v2789, %v2795
          %v2797 = vrot.slane %v2785, %v2796
          %v2798 = vsel %vm2728, %v2797, %v2793
          %vm2800 = vcmask 58368
          %2801 = vst.msk [vmem:[#allocation12] sm:$0x3] %vm2800, %v2798
        $region112: #{tpu_custom_call.1} parent=91 // pred_fallthru
          _
        // Predicated region
        $region113: #{tpu_custom_call.1} parent=91 // pred_check
          %p2802 = pneg %p488
        $region114: #{tpu_custom_call.1} parent=91 // pred_check_branch
          %2804 = sbr.rel (%p2802) target = $region116
        $region115: #{tpu_custom_call.1} parent=91 // pred_region
          %s2806 = ssub.s32 32, 32
          %2807 = vsyncadd [#allocation7], %s2806
          %s2809 = sshll.u32 [#allocation11], 4
          %s2810 = int_to_ptr.vmem [resolvable:$true] %s2809
          %2812 = dma.vmem_to_hbm [thread:$0]  %s2810, 32, %s18, [#allocation7]
        $region116: #{tpu_custom_call.1} parent=91 // pred_fallthru
          _
        // Predicated region
        $region117: #{tpu_custom_call.1} parent=91 // pred_check
          %p2813 = pneg %p509
        $region118: #{tpu_custom_call.1} parent=91 // pred_check_branch
          %2815 = sbr.rel (%p2813) target = $region120
        $region119: #{tpu_custom_call.1} parent=91 // pred_region
          %s2817 = ssub.s32 32, 32
          %2818 = vsyncadd [#allocation13], %s2817
          %s2820 = sshll.u32 [#allocation12], 4
          %s2821 = int_to_ptr.vmem [resolvable:$true] %s2820
          %2823 = dma.vmem_to_hbm [thread:$0]  %s2821, 32, %s19, [#allocation13]
        $region120: #{tpu_custom_call.1} parent=91 // pred_fallthru
          _
        // Predicated region
        $region121: #{tpu_custom_call.1} parent=91 // pred_check
          %p2824 = pneg %p488
        $region122: #{tpu_custom_call.1} parent=91 // pred_check_branch
          %2826 = sbr.rel (%p2824) target = $region124
        $region123: #{tpu_custom_call.1} parent=91 // pred_region
          %2827 = dma.done [#allocation7], 32
        $region124: #{tpu_custom_call.1} parent=91 // pred_fallthru
          _
        // Predicated region
        $region125: #{tpu_custom_call.1} parent=91 // pred_check
          %p2828 = pneg %p509
        $region126: #{tpu_custom_call.1} parent=91 // pred_check_branch
          %2830 = sbr.rel (%p2828) target = $region128
        $region127: #{tpu_custom_call.1} parent=91 // pred_region
          %2831 = dma.done [#allocation13], 32
        $region128: #{tpu_custom_call.1} parent=91 // pred_fallthru
          _
      $region92: #{tpu_custom_call.1} parent=5 // pred_fallthru
        _
      %p2832 = scmp.le.s32.totalorder 2, %s32
      // Predicated region
      $region129: #{tpu_custom_call.1} parent=5 // pred_check
        %p2833 = pneg %p2832
      $region130: #{tpu_custom_call.1} parent=5 // pred_check_branch
        %2835 = sbr.rel (%p2833) target = $region132
      $region131: #{tpu_custom_call.1} parent=5 // pred_region
        %s2836 = ssub.s32 %s32, 2
      $region132: #{tpu_custom_call.1} parent=5 // pred_fallthru
        _
    $region6: #{tpu_custom_call.1} parent=1 // loop_footer
      %s36 = sadd.s32 1, %s32
    $region7: #{tpu_custom_call.1} parent=1 // loop_footer_branch
      %31 = sbr.rel target = $region3
    $region8: #{tpu_custom_call.1} parent=1 // loop_exit
      _
    %2837 = vsyncpa [#allocation6], 1
    %s2838 = scalar_lea.sflag [#allocation6], 1
    %2839 = vsyncpa %s2838, 1
    %2840 = vsyncpa [#allocation9], 1
    %2841 = vsyncpa [#allocation7], 1
    %s2842 = scalar_lea.sflag [#allocation7], 1
    %2843 = vsyncpa %s2842, 1
    %2844 = vsyncpa [#allocation13], 1

</llo_original>
